<compile_context>
chip_gen: v5e
topology: v5e:2x2
jax: 0.10.0
libtpu: 0.0.40
codegen_flags: <defaults>
</compile_context>

<pallas_src>
import functools

import jax
import jax.numpy as jnp
from jax.experimental import pallas as pl
from jax.experimental.pallas import tpu as pltpu

_BN_EPS = 1e-5


# -----------------------------------------------------------------------------
# Pallas kernels
# -----------------------------------------------------------------------------
def _conv_act_pool_kernel(x_ref, w_ref, scale_ref, shift_ref, o_ref, *,
                          ksize, pool, act):
    """Fused temporal conv + per-channel affine (+ ELU + MaxPool).

    x_ref:     (1, Cin, W)     one batch row (time on lanes)
    w_ref:     (K, Cout, Cin)  conv weight, K on the leading axis
    scale_ref: (Cout, 1)       BN scale (or ones)
    shift_ref: (Cout, 1)       BN shift (conv bias folded in)
    o_ref:     (1, Cout, Wp)
    """
    x = x_ref[0].astype(jnp.float32)                 # (Cin, W)
    w_in = x.shape[-1]
    w_out = w_in - ksize + 1
    cin = x.shape[0]

    acc = None
    for k in range(ksize):                           # static unroll, K small
        wk = w_ref[k].astype(jnp.float32)            # (Cout, Cin)
        xk = x[:, k:k + w_out]                       # (Cin, Wout), static slice
        if cin == 1:
            term = wk * xk                           # outer product on the VPU
        else:
            term = jnp.dot(wk, xk, preferred_element_type=jnp.float32)
        acc = term if acc is None else acc + term

    y = acc * scale_ref[...] + shift_ref[...]        # (Cout, Wout)

    if act:                                          # ELU (alpha = 1)
        y = jnp.where(y > 0.0, y, jnp.exp(jnp.minimum(y, 0.0)) - 1.0)

    if pool > 1:                                     # MaxPool(window=stride=pool)
        wp = (w_out - pool) // pool + 1
        m_len = (wp - 1) * pool + 1
        m = y[:, 0:m_len]
        for p in range(1, pool):
            m = jnp.maximum(m, y[:, p:p + m_len])
        # Exact downsample of every `pool`-th column via a one-hot matmul:
        # keeps time lane-dense and avoids strided lane slices / reshapes.
        rows = jax.lax.broadcasted_iota(jnp.int32, (m_len, wp), 0)
        cols = jax.lax.broadcasted_iota(jnp.int32, (m_len, wp), 1)
        sel = (rows == cols * pool).astype(jnp.float32)
        y = jnp.dot(m, sel, preferred_element_type=jnp.float32)   # (Cout, wp)

    o_ref[0] = y.astype(o_ref.dtype)


def _linear_kernel(x_ref, w_ref, b_ref, o_ref):
    o_ref[...] = (jnp.dot(x_ref[...], w_ref[...],
                          preferred_element_type=jnp.float32)
                  + b_ref[...]).astype(o_ref.dtype)


# -----------------------------------------------------------------------------
# Pallas wrappers
# -----------------------------------------------------------------------------
def conv_act_pool(x, w, scale, shift, *, pool, act):
    """x: (B, Cin, W); w: (Cout, Cin, K); scale/shift: (Cout,) -> (B, Cout, Wp)."""
    b_dim, cin, w_in = x.shape
    cout, _, ksize = w.shape
    w_out = w_in - ksize + 1
    w_p = (w_out - pool) // pool + 1 if pool > 1 else w_out

    w_k = jnp.transpose(w, (2, 0, 1))                     # (K, Cout, Cin), tiny
    scale2 = scale.reshape(cout, 1).astype(jnp.float32)
    shift2 = shift.reshape(cout, 1).astype(jnp.float32)

    kernel = functools.partial(_conv_act_pool_kernel,
                               ksize=ksize, pool=pool, act=act)
    return pl.pallas_call(
        kernel,
        out_shape=jax.ShapeDtypeStruct((b_dim, cout, w_p), x.dtype),
        grid=(b_dim,),
        in_specs=[
            pl.BlockSpec((1, cin, w_in), lambda b: (b, 0, 0)),
            pl.BlockSpec((ksize, cout, cin), lambda b: (0, 0, 0)),
            pl.BlockSpec((cout, 1), lambda b: (0, 0)),
            pl.BlockSpec((cout, 1), lambda b: (0, 0)),
        ],
        out_specs=pl.BlockSpec((1, cout, w_p), lambda b: (b, 0, 0)),
        compiler_params=pltpu.CompilerParams(
            dimension_semantics=("parallel",)),
    )(x, w_k, scale2, shift2)


def linear(x, w, b):
    """x: (N, D); w: (C, D); b: (C,) -> (N, C)."""
    n, d = x.shape
    c = w.shape[0]
    return pl.pallas_call(
        _linear_kernel,
        out_shape=jax.ShapeDtypeStruct((n, c), x.dtype),
        in_specs=[pl.BlockSpec((n, d), lambda: (0, 0)),
                  pl.BlockSpec((d, c), lambda: (0, 0)),
                  pl.BlockSpec((1, c), lambda: (0, 0))],
        out_specs=pl.BlockSpec((n, c), lambda: (0, 0)),
    )(x, jnp.transpose(w), b.reshape(1, c))


# -----------------------------------------------------------------------------
# Model wrapper (parameter-side glue in plain JAX)
# -----------------------------------------------------------------------------
def _renorm(w, max_norm):
    """torch.renorm(w, p=2, dim=0, maxnorm=max_norm)."""
    flat = w.reshape(w.shape[0], -1)
    norms = jnp.sqrt(jnp.sum(flat * flat, axis=1, keepdims=True))
    factor = jnp.where(norms > max_norm, max_norm / (norms + 1e-7), 1.0)
    return (flat * factor).reshape(w.shape)


def _bn_affine(bn, conv_bias):
    gamma, beta, mean, var = bn
    scale = gamma * jax.lax.rsqrt(var + _BN_EPS)
    shift = beta + scale * (conv_bias - mean)
    return scale, shift


@functools.partial(jax.jit, static_argnames=("k1", "p1"))
def deepconvnet_forward(x, params, *, k1, p1):
    """Pallas forward of DeepConvNet (eval mode)."""
    n, cin, h, w_in = x.shape
    f1 = params["w1a"].shape[0]

    # ---- net1: temporal conv (1,K1), then spatial conv (H,1)+BN+ELU+pool ----
    x1 = jnp.transpose(x, (0, 2, 1, 3)).reshape(n * h, cin, w_in)  # free (cin==1)
    w1a = _renorm(params["w1a"], 2.0).reshape(f1, cin, k1)
    y = conv_act_pool(x1, w1a, jnp.ones((f1,), jnp.float32), params["b1a"],
                      pool=1, act=False)                           # (N*H, F1, W1)
    w1 = w_in - k1 + 1
    y = y.reshape(n, h * f1, w1)                                   # free reshape

    w1b = _renorm(params["w1b"], 2.0)[..., 0]                      # (F1, F1, H)
    w1b = jnp.transpose(w1b, (0, 2, 1)).reshape(f1, h * f1, 1)     # match (h,ci) order
    scale, shift = _bn_affine(params["bn1"], params["b1b"])
    y = conv_act_pool(y, w1b, scale, shift, pool=p1, act=True)     # (N, F1, t1)

    # ---- net2..net4: conv (1,K1) + BN + ELU + pool ---------------------------
    for i in (2, 3, 4):
        wi = _renorm(params[f"w{i}"], 2.0)
        wi = wi.reshape(wi.shape[0], wi.shape[1], k1)
        scale, shift = _bn_affine(params[f"bn{i}"], params[f"b{i}"])
        y = conv_act_pool(y, wi, scale, shift, pool=p1, act=True)

    # ---- classifier ----------------------------------------------------------
    # TODO(synk): Dropout is identity (eval mode) and BatchNorm uses running
    # stats; training-mode RNG dropout / batch statistics are not implemented.
    y = y.reshape(n, -1)
    wc = _renorm(params["wc"], 0.5)
    return linear(y, wc, params["bc"])


# -----------------------------------------------------------------------------
# Pure-JAX reference (independent XLA path) for a silent correctness check
# -----------------------------------------------------------------------------
def _ref_forward(x, params, *, k1, p1):
    hp = jax.lax.Precision.HIGHEST

    def conv(z, w, b):
        y = jax.lax.conv_general_dilated(
            z, w, window_strides=(1, 1), padding="VALID",
            dimension_numbers=("NCHW", "OIHW", "NCHW"), precision=hp)
        return y + b.reshape(1, -1, 1, 1)

    def bn(z, p):
        gamma, beta, mean, var = (v.reshape(1, -1, 1, 1) for v in p)
        return (z - mean) * gamma * jax.lax.rsqrt(var + _BN_EPS) + beta

    def pool(z):
        return jax.lax.reduce_window(z, -jnp.inf, jax.lax.max,
                                     (1, 1, 1, p1), (1, 1, 1, p1), "VALID")

    y = conv(x, _renorm(params["w1a"], 2.0), params["b1a"])
    y = conv(y, _renorm(params["w1b"], 2.0), params["b1b"])
    y = pool(jax.nn.elu(bn(y, params["bn1"])))
    for i in (2, 3, 4):
        y = conv(y, _renorm(params[f"w{i}"], 2.0), params[f"b{i}"])
        y = pool(jax.nn.elu(bn(y, params[f"bn{i}"])))
    y = y.reshape(y.shape[0], -1)
    wc = _renorm(params["wc"], 0.5)
    return jnp.dot(y, wc.T, precision=hp) + params["bc"]


# -----------------------------------------------------------------------------
# Parameter construction
# -----------------------------------------------------------------------------
def _init_params(key, *, num_classes, cin, h, t, f1, f2, f3, f4, k1, p1):
    def out_len(length, k, p):
        length = length - k + 1
        return (length - p) // p + 1

    t1 = out_len(t, k1, p1)
    t2 = out_len(t1, k1, p1)
    t3 = out_len(t2, k1, p1)
    t4 = out_len(t3, k1, p1)
    d_flat = f4 * t4

    keys = iter(jax.random.split(key, 32))

    def conv_w(shape):
        fan_in = shape[1] * shape[2] * shape[3]
        return jax.random.normal(next(keys), shape, jnp.float32) / jnp.sqrt(
            jnp.float32(fan_in))

    def vec(num, s=0.1):
        return s * jax.random.normal(next(keys), (num,), jnp.float32)

    def bn_params(num):
        return (1.0 + vec(num), vec(num), vec(num),
                0.9 + 0.2 * jnp.abs(jax.random.normal(next(keys), (num,),
                                                      jnp.float32)))

    params = {
        "w1a": conv_w((f1, cin, 1, k1)), "b1a": vec(f1),
        "w1b": conv_w((f1, f1, h, 1)),  "b1b": vec(f1),
        "bn1": bn_params(f1),
        "w2": conv_w((f2, f1, 1, k1)), "b2": vec(f2), "bn2": bn_params(f2),
        "w3": conv_w((f3, f2, 1, k1)), "b3": vec(f3), "bn3": bn_params(f3),
        "w4": conv_w((f4, f3, 1, k1)), "b4": vec(f4), "bn4": bn_params(f4),
        "wc": jax.random.normal(next(keys), (num_classes, d_flat),
                                jnp.float32) / jnp.sqrt(jnp.float32(d_flat)),
        "bc": vec(num_classes),
    }
    return params, d_flat


if __name__ == "__main__":
    # Small config consistent with DeepConvNet's constructor:
    # num_classes=4, input_size=(1, 4, 128), F1..F4=8/16/32/64, K1=4, P1=3->2.
    NUM_CLASSES = 4
    CIN, H, T = 1, 4, 128
    F1, F2, F3, F4 = 8, 16, 32, 64
    K1, P1 = 4, 2
    N = 2

    key = jax.random.PRNGKey(0)
    k_x, k_p = jax.random.split(key)
    x = jax.random.normal(k_x, (N, CIN, H, T), jnp.float32)
    params, d_flat = _init_params(k_p, num_classes=NUM_CLASSES, cin=CIN, h=H,
                                  t=T, f1=F1, f2=F2, f3=F3, f4=F4,
                                  k1=K1, p1=P1)

    out = deepconvnet_forward(x, params, k1=K1, p1=P1)
    out = jax.block_until_ready(out)

    # Silent reference check against a pure-JAX/XLA implementation.
    ref = _ref_forward(x, params, k1=K1, p1=P1)
    assert out.shape == (N, NUM_CLASSES), out.shape
    assert bool(jnp.allclose(out, ref, atol=5e-3, rtol=5e-3)), \
        "mismatch vs reference"

    print("KERNEL_OK")
</pallas_src>

<mosaic_0001>
module attributes {stable_mosaic.version = 11 : i64} {
  func.func @_conv_act_pool_kernel(%arg0: i32, %arg1: memref<1x1x128xf32, #tpu.memory_space<vmem>>, %arg2: memref<4x8x1xf32, #tpu.memory_space<vmem>>, %arg3: memref<8x1xf32, #tpu.memory_space<vmem>>, %arg4: memref<8x1xf32, #tpu.memory_space<vmem>>, %arg5: memref<1x8x125xf32, #tpu.memory_space<vmem>>) attributes {dimension_semantics = [#tpu.dimension_semantics<parallel>], iteration_bounds = array<i64: 8>, scalar_prefetch = 0 : i64, scratch_operands = 0 : i64, tpu.core_type = #tpu.core_type<tc>, window_params = [{transform_indices = @transform_0, window_bounds = array<i64: 1, 1, 128>}, {pipeline_mode = #tpu.pipeline_mode<synchronous>, transform_indices = @transform_1, window_bounds = array<i64: 4, 8, 1>}, {pipeline_mode = #tpu.pipeline_mode<synchronous>, transform_indices = @transform_2, window_bounds = array<i64: 8, 1>}, {pipeline_mode = #tpu.pipeline_mode<synchronous>, transform_indices = @transform_3, window_bounds = array<i64: 8, 1>}, {transform_indices = @transform_4, window_bounds = array<i64: 1, 8, 125>}]} {
    %c0 = arith.constant 0 : index
    %c0_0 = arith.constant 0 : index
    %c0_1 = arith.constant 0 : index
    %0 = vector.load %arg1[%c0, %c0_0, %c0_1] : memref<1x1x128xf32, #tpu.memory_space<vmem>>, vector<1x1x128xf32>
    %1 = vector.shape_cast %0 : vector<1x1x128xf32> to vector<1x128xf32>
    %c0_2 = arith.constant 0 : index
    %c0_3 = arith.constant 0 : index
    %c0_4 = arith.constant 0 : index
    %2 = vector.load %arg2[%c0_2, %c0_3, %c0_4] : memref<4x8x1xf32, #tpu.memory_space<vmem>>, vector<1x8x1xf32>
    %3 = vector.shape_cast %2 : vector<1x8x1xf32> to vector<8x1xf32>
    %4 = vector.extract_strided_slice %1 {offsets = [0, 0], sizes = [1, 125], strides = [1, 1]} : vector<1x128xf32> to vector<1x125xf32>
    %5 = vector.broadcast %3 : vector<8x1xf32> to vector<8x125xf32>
    %6 = vector.broadcast %4 : vector<1x125xf32> to vector<8x125xf32>
    %7 = arith.mulf %5, %6 : vector<8x125xf32>
    %c1 = arith.constant 1 : index
    %c0_5 = arith.constant 0 : index
    %c0_6 = arith.constant 0 : index
    %8 = vector.load %arg2[%c1, %c0_5, %c0_6] : memref<4x8x1xf32, #tpu.memory_space<vmem>>, vector<1x8x1xf32>
    %9 = vector.shape_cast %8 : vector<1x8x1xf32> to vector<8x1xf32>
    %10 = vector.extract_strided_slice %1 {offsets = [0, 1], sizes = [1, 125], strides = [1, 1]} : vector<1x128xf32> to vector<1x125xf32>
    %11 = vector.broadcast %9 : vector<8x1xf32> to vector<8x125xf32>
    %12 = vector.broadcast %10 : vector<1x125xf32> to vector<8x125xf32>
    %13 = arith.mulf %11, %12 : vector<8x125xf32>
    %14 = arith.addf %7, %13 : vector<8x125xf32>
    %c2 = arith.constant 2 : index
    %c0_7 = arith.constant 0 : index
    %c0_8 = arith.constant 0 : index
    %15 = vector.load %arg2[%c2, %c0_7, %c0_8] : memref<4x8x1xf32, #tpu.memory_space<vmem>>, vector<1x8x1xf32>
    %16 = vector.shape_cast %15 : vector<1x8x1xf32> to vector<8x1xf32>
    %17 = vector.extract_strided_slice %1 {offsets = [0, 2], sizes = [1, 125], strides = [1, 1]} : vector<1x128xf32> to vector<1x125xf32>
    %18 = vector.broadcast %16 : vector<8x1xf32> to vector<8x125xf32>
    %19 = vector.broadcast %17 : vector<1x125xf32> to vector<8x125xf32>
    %20 = arith.mulf %18, %19 : vector<8x125xf32>
    %21 = arith.addf %14, %20 : vector<8x125xf32>
    %c3 = arith.constant 3 : index
    %c0_9 = arith.constant 0 : index
    %c0_10 = arith.constant 0 : index
    %22 = vector.load %arg2[%c3, %c0_9, %c0_10] : memref<4x8x1xf32, #tpu.memory_space<vmem>>, vector<1x8x1xf32>
    %23 = vector.shape_cast %22 : vector<1x8x1xf32> to vector<8x1xf32>
    %24 = vector.extract_strided_slice %1 {offsets = [0, 3], sizes = [1, 125], strides = [1, 1]} : vector<1x128xf32> to vector<1x125xf32>
    %25 = vector.broadcast %23 : vector<8x1xf32> to vector<8x125xf32>
    %26 = vector.broadcast %24 : vector<1x125xf32> to vector<8x125xf32>
    %27 = arith.mulf %25, %26 : vector<8x125xf32>
    %28 = arith.addf %21, %27 : vector<8x125xf32>
    %c0_11 = arith.constant 0 : index
    %c0_12 = arith.constant 0 : index
    %29 = vector.load %arg3[%c0_11, %c0_12] : memref<8x1xf32, #tpu.memory_space<vmem>>, vector<8x1xf32>
    %30 = vector.broadcast %29 : vector<8x1xf32> to vector<8x125xf32>
    %31 = arith.mulf %28, %30 : vector<8x125xf32>
    %c0_13 = arith.constant 0 : index
    %c0_14 = arith.constant 0 : index
    %32 = vector.load %arg4[%c0_13, %c0_14] : memref<8x1xf32, #tpu.memory_space<vmem>>, vector<8x1xf32>
    %33 = vector.broadcast %32 : vector<8x1xf32> to vector<8x125xf32>
    %34 = arith.addf %31, %33 : vector<8x125xf32>
    %c0_15 = arith.constant 0 : index
    %c0_16 = arith.constant 0 : index
    %c0_17 = arith.constant 0 : index
    %35 = vector.load %arg5[%c0_15, %c0_16, %c0_17] : memref<1x8x125xf32, #tpu.memory_space<vmem>>, vector<1x8x125xf32>
    %36 = vector.shape_cast %35 : vector<1x8x125xf32> to vector<8x125xf32>
    %37 = vector.shape_cast %34 : vector<8x125xf32> to vector<1x8x125xf32>
    tpu.vector_store %arg5[%c0_15, %c0_16, %c0_17], %37 {strides = array<i32>} : memref<1x8x125xf32, #tpu.memory_space<vmem>>, vector<1x8x125xf32>,
    return
  }
  func.func @transform_0(%arg0: i32) -> (i32, i32, i32) {
    %c0_i32 = arith.constant 0 : i32
    %c0_i32_0 = arith.constant 0 : i32
    %c0_i32_1 = arith.constant 0 : i32
    return %arg0, %c0_i32, %c0_i32_0 : i32, i32, i32
  }
  func.func @transform_1(%arg0: i32) -> (i32, i32, i32) {
    %c0_i32 = arith.constant 0 : i32
    %c0_i32_0 = arith.constant 0 : i32
    %c0_i32_1 = arith.constant 0 : i32
    %c0_i32_2 = arith.constant 0 : i32
    return %c0_i32, %c0_i32_0, %c0_i32_1 : i32, i32, i32
  }
  func.func @transform_2(%arg0: i32) -> (i32, i32) {
    %c0_i32 = arith.constant 0 : i32
    %c0_i32_0 = arith.constant 0 : i32
    %c0_i32_1 = arith.constant 0 : i32
    return %c0_i32, %c0_i32_0 : i32, i32
  }
  func.func @transform_3(%arg0: i32) -> (i32, i32) {
    %c0_i32 = arith.constant 0 : i32
    %c0_i32_0 = arith.constant 0 : i32
    %c0_i32_1 = arith.constant 0 : i32
    return %c0_i32, %c0_i32_0 : i32, i32
  }
  func.func @transform_4(%arg0: i32) -> (i32, i32, i32) {
    %c0_i32 = arith.constant 0 : i32
    %c0_i32_0 = arith.constant 0 : i32
    %c0_i32_1 = arith.constant 0 : i32
    return %arg0, %c0_i32, %c0_i32_0 : i32, i32, i32
  }
}

module attributes {stable_mosaic.version = 11 : i64} {
  func.func @_conv_act_pool_kernel(%arg0: i32, %arg1: memref<1x32x125xf32, #tpu.memory_space<vmem>>, %arg2: memref<1x8x32xf32, #tpu.memory_space<vmem>>, %arg3: memref<8x1xf32, #tpu.memory_space<vmem>>, %arg4: memref<8x1xf32, #tpu.memory_space<vmem>>, %arg5: memref<1x8x62xf32, #tpu.memory_space<vmem>>) attributes {dimension_semantics = [#tpu.dimension_semantics<parallel>], iteration_bounds = array<i64: 2>, scalar_prefetch = 0 : i64, scratch_operands = 0 : i64, tpu.core_type = #tpu.core_type<tc>, window_params = [{transform_indices = @transform_0, window_bounds = array<i64: 1, 32, 125>}, {pipeline_mode = #tpu.pipeline_mode<synchronous>, transform_indices = @transform_1, window_bounds = array<i64: 1, 8, 32>}, {pipeline_mode = #tpu.pipeline_mode<synchronous>, transform_indices = @transform_2, window_bounds = array<i64: 8, 1>}, {pipeline_mode = #tpu.pipeline_mode<synchronous>, transform_indices = @transform_3, window_bounds = array<i64: 8, 1>}, {transform_indices = @transform_4, window_bounds = array<i64: 1, 8, 62>}]} {
    %c0 = arith.constant 0 : index
    %c0_0 = arith.constant 0 : index
    %c0_1 = arith.constant 0 : index
    %0 = vector.load %arg1[%c0, %c0_0, %c0_1] : memref<1x32x125xf32, #tpu.memory_space<vmem>>, vector<1x32x125xf32>
    %1 = vector.shape_cast %0 : vector<1x32x125xf32> to vector<32x125xf32>
    %c0_2 = arith.constant 0 : index
    %c0_3 = arith.constant 0 : index
    %c0_4 = arith.constant 0 : index
    %2 = vector.load %arg2[%c0_2, %c0_3, %c0_4] : memref<1x8x32xf32, #tpu.memory_space<vmem>>, vector<1x8x32xf32>
    %3 = vector.shape_cast %2 : vector<1x8x32xf32> to vector<8x32xf32>
    %cst = arith.constant dense<0.000000e+00> : vector<8x125xf32>
    %4 = tpu.matmul %3, %1, %cst {dimension_numbers = #tpu.dot_dimension_numbers<[1], [0], [0], [1], [0, 0, 1, 1], [], []>} : vector<8x32xf32>, vector<32x125xf32>, vector<8x125xf32> -> vector<8x125xf32>
    %c0_5 = arith.constant 0 : index
    %c0_6 = arith.constant 0 : index
    %5 = vector.load %arg3[%c0_5, %c0_6] : memref<8x1xf32, #tpu.memory_space<vmem>>, vector<8x1xf32>
    %6 = vector.broadcast %5 : vector<8x1xf32> to vector<8x125xf32>
    %7 = arith.mulf %4, %6 : vector<8x125xf32>
    %c0_7 = arith.constant 0 : index
    %c0_8 = arith.constant 0 : index
    %8 = vector.load %arg4[%c0_7, %c0_8] : memref<8x1xf32, #tpu.memory_space<vmem>>, vector<8x1xf32>
    %9 = vector.broadcast %8 : vector<8x1xf32> to vector<8x125xf32>
    %10 = arith.addf %7, %9 : vector<8x125xf32>
    %cst_9 = arith.constant 0.000000e+00 : f32
    %11 = vector.broadcast %cst_9 : f32 to vector<8x125xf32>
    %12 = arith.cmpf ogt, %10, %11 : vector<8x125xf32>
    %cst_10 = arith.constant 0.000000e+00 : f32
    %13 = vector.broadcast %cst_10 : f32 to vector<8x125xf32>
    %14 = arith.minimumf %10, %13 : vector<8x125xf32>
    %15 = math.exp %14 : vector<8x125xf32>
    %cst_11 = arith.constant 1.000000e+00 : f32
    %16 = vector.broadcast %cst_11 : f32 to vector<8x125xf32>
    %17 = arith.subf %15, %16 : vector<8x125xf32>
    %18 = arith.select %12, %10, %17 : vector<8x125xi1>, vector<8x125xf32>
    %19 = vector.extract_strided_slice %18 {offsets = [0, 0], sizes = [8, 123], strides = [1, 1]} : vector<8x125xf32> to vector<8x123xf32>
    %20 = vector.extract_strided_slice %18 {offsets = [0, 1], sizes = [8, 123], strides = [1, 1]} : vector<8x125xf32> to vector<8x123xf32>
    %21 = arith.maximumf %19, %20 : vector<8x123xf32>
    %22 = tpu.iota {dimensions = array<i32: 0>} : vector<123x62xi32>
    %23 = tpu.iota {dimensions = array<i32: 1>} : vector<123x62xi32>
    %c2_i32 = arith.constant 2 : i32
    %24 = vector.broadcast %c2_i32 : i32 to vector<123x62xi32>
    %25 = arith.muli %23, %24 : vector<123x62xi32>
    %26 = arith.cmpi eq, %22, %25 : vector<123x62xi32>
    %27 = arith.extui %26 : vector<123x62xi1> to vector<123x62xi32>
    %28 = arith.sitofp %27 : vector<123x62xi32> to vector<123x62xf32>
    %cst_12 = arith.constant dense<0.000000e+00> : vector<8x62xf32>
    %29 = tpu.matmul %21, %28, %cst_12 {dimension_numbers = #tpu.dot_dimension_numbers<[1], [0], [0], [1], [0, 0, 1, 1], [], []>} : vector<8x123xf32>, vector<123x62xf32>, vector<8x62xf32> -> vector<8x62xf32>
    %c0_13 = arith.constant 0 : index
    %c0_14 = arith.constant 0 : index
    %c0_15 = arith.constant 0 : index
    %30 = vector.load %arg5[%c0_13, %c0_14, %c0_15] : memref<1x8x62xf32, #tpu.memory_space<vmem>>, vector<1x8x62xf32>
    %31 = vector.shape_cast %30 : vector<1x8x62xf32> to vector<8x62xf32>
    %32 = vector.shape_cast %29 : vector<8x62xf32> to vector<1x8x62xf32>
    tpu.vector_store %arg5[%c0_13, %c0_14, %c0_15], %32 {strides = array<i32>} : memref<1x8x62xf32, #tpu.memory_space<vmem>>, vector<1x8x62xf32>,
    return
  }
  func.func @transform_0(%arg0: i32) -> (i32, i32, i32) {
    %c0_i32 = arith.constant 0 : i32
    %c0_i32_0 = arith.constant 0 : i32
    %c0_i32_1 = arith.constant 0 : i32
    return %arg0, %c0_i32, %c0_i32_0 : i32, i32, i32
  }
  func.func @transform_1(%arg0: i32) -> (i32, i32, i32) {
    %c0_i32 = arith.constant 0 : i32
    %c0_i32_0 = arith.constant 0 : i32
    %c0_i32_1 = arith.constant 0 : i32
    %c0_i32_2 = arith.constant 0 : i32
    return %c0_i32, %c0_i32_0, %c0_i32_1 : i32, i32, i32
  }
  func.func @transform_2(%arg0: i32) -> (i32, i32) {
    %c0_i32 = arith.constant 0 : i32
    %c0_i32_0 = arith.constant 0 : i32
    %c0_i32_1 = arith.constant 0 : i32
    return %c0_i32, %c0_i32_0 : i32, i32
  }
  func.func @transform_3(%arg0: i32) -> (i32, i32) {
    %c0_i32 = arith.constant 0 : i32
    %c0_i32_0 = arith.constant 0 : i32
    %c0_i32_1 = arith.constant 0 : i32
    return %c0_i32, %c0_i32_0 : i32, i32
  }
  func.func @transform_4(%arg0: i32) -> (i32, i32, i32) {
    %c0_i32 = arith.constant 0 : i32
    %c0_i32_0 = arith.constant 0 : i32
    %c0_i32_1 = arith.constant 0 : i32
    return %arg0, %c0_i32, %c0_i32_0 : i32, i32, i32
  }
}

module attributes {stable_mosaic.version = 11 : i64} {
  func.func @_conv_act_pool_kernel(%arg0: i32, %arg1: memref<1x8x62xf32, #tpu.memory_space<vmem>>, %arg2: memref<4x16x8xf32, #tpu.memory_space<vmem>>, %arg3: memref<16x1xf32, #tpu.memory_space<vmem>>, %arg4: memref<16x1xf32, #tpu.memory_space<vmem>>, %arg5: memref<1x16x29xf32, #tpu.memory_space<vmem>>) attributes {dimension_semantics = [#tpu.dimension_semantics<parallel>], iteration_bounds = array<i64: 2>, scalar_prefetch = 0 : i64, scratch_operands = 0 : i64, tpu.core_type = #tpu.core_type<tc>, window_params = [{transform_indices = @transform_0, window_bounds = array<i64: 1, 8, 62>}, {pipeline_mode = #tpu.pipeline_mode<synchronous>, transform_indices = @transform_1, window_bounds = array<i64: 4, 16, 8>}, {pipeline_mode = #tpu.pipeline_mode<synchronous>, transform_indices = @transform_2, window_bounds = array<i64: 16, 1>}, {pipeline_mode = #tpu.pipeline_mode<synchronous>, transform_indices = @transform_3, window_bounds = array<i64: 16, 1>}, {transform_indices = @transform_4, window_bounds = array<i64: 1, 16, 29>}]} {
    %c0 = arith.constant 0 : index
    %c0_0 = arith.constant 0 : index
    %c0_1 = arith.constant 0 : index
    %0 = vector.load %arg1[%c0, %c0_0, %c0_1] : memref<1x8x62xf32, #tpu.memory_space<vmem>>, vector<1x8x62xf32>
    %1 = vector.shape_cast %0 : vector<1x8x62xf32> to vector<8x62xf32>
    %c0_2 = arith.constant 0 : index
    %c0_3 = arith.constant 0 : index
    %c0_4 = arith.constant 0 : index
    %2 = vector.load %arg2[%c0_2, %c0_3, %c0_4] : memref<4x16x8xf32, #tpu.memory_space<vmem>>, vector<1x16x8xf32>
    %3 = vector.shape_cast %2 : vector<1x16x8xf32> to vector<16x8xf32>
    %4 = vector.extract_strided_slice %1 {offsets = [0, 0], sizes = [8, 59], strides = [1, 1]} : vector<8x62xf32> to vector<8x59xf32>
    %cst = arith.constant dense<0.000000e+00> : vector<16x59xf32>
    %5 = tpu.matmul %3, %4, %cst {dimension_numbers = #tpu.dot_dimension_numbers<[1], [0], [0], [1], [0, 0, 1, 1], [], []>} : vector<16x8xf32>, vector<8x59xf32>, vector<16x59xf32> -> vector<16x59xf32>
    %c1 = arith.constant 1 : index
    %c0_5 = arith.constant 0 : index
    %c0_6 = arith.constant 0 : index
    %6 = vector.load %arg2[%c1, %c0_5, %c0_6] : memref<4x16x8xf32, #tpu.memory_space<vmem>>, vector<1x16x8xf32>
    %7 = vector.shape_cast %6 : vector<1x16x8xf32> to vector<16x8xf32>
    %8 = vector.extract_strided_slice %1 {offsets = [0, 1], sizes = [8, 59], strides = [1, 1]} : vector<8x62xf32> to vector<8x59xf32>
    %cst_7 = arith.constant dense<0.000000e+00> : vector<16x59xf32>
    %9 = tpu.matmul %7, %8, %cst_7 {dimension_numbers = #tpu.dot_dimension_numbers<[1], [0], [0], [1], [0, 0, 1, 1], [], []>} : vector<16x8xf32>, vector<8x59xf32>, vector<16x59xf32> -> vector<16x59xf32>
    %10 = arith.addf %5, %9 : vector<16x59xf32>
    %c2 = arith.constant 2 : index
    %c0_8 = arith.constant 0 : index
    %c0_9 = arith.constant 0 : index
    %11 = vector.load %arg2[%c2, %c0_8, %c0_9] : memref<4x16x8xf32, #tpu.memory_space<vmem>>, vector<1x16x8xf32>
    %12 = vector.shape_cast %11 : vector<1x16x8xf32> to vector<16x8xf32>
    %13 = vector.extract_strided_slice %1 {offsets = [0, 2], sizes = [8, 59], strides = [1, 1]} : vector<8x62xf32> to vector<8x59xf32>
    %cst_10 = arith.constant dense<0.000000e+00> : vector<16x59xf32>
    %14 = tpu.matmul %12, %13, %cst_10 {dimension_numbers = #tpu.dot_dimension_numbers<[1], [0], [0], [1], [0, 0, 1, 1], [], []>} : vector<16x8xf32>, vector<8x59xf32>, vector<16x59xf32> -> vector<16x59xf32>
    %15 = arith.addf %10, %14 : vector<16x59xf32>
    %c3 = arith.constant 3 : index
    %c0_11 = arith.constant 0 : index
    %c0_12 = arith.constant 0 : index
    %16 = vector.load %arg2[%c3, %c0_11, %c0_12] : memref<4x16x8xf32, #tpu.memory_space<vmem>>, vector<1x16x8xf32>
    %17 = vector.shape_cast %16 : vector<1x16x8xf32> to vector<16x8xf32>
    %18 = vector.extract_strided_slice %1 {offsets = [0, 3], sizes = [8, 59], strides = [1, 1]} : vector<8x62xf32> to vector<8x59xf32>
    %cst_13 = arith.constant dense<0.000000e+00> : vector<16x59xf32>
    %19 = tpu.matmul %17, %18, %cst_13 {dimension_numbers = #tpu.dot_dimension_numbers<[1], [0], [0], [1], [0, 0, 1, 1], [], []>} : vector<16x8xf32>, vector<8x59xf32>, vector<16x59xf32> -> vector<16x59xf32>
    %20 = arith.addf %15, %19 : vector<16x59xf32>
    %c0_14 = arith.constant 0 : index
    %c0_15 = arith.constant 0 : index
    %21 = vector.load %arg3[%c0_14, %c0_15] : memref<16x1xf32, #tpu.memory_space<vmem>>, vector<16x1xf32>
    %22 = vector.broadcast %21 : vector<16x1xf32> to vector<16x59xf32>
    %23 = arith.mulf %20, %22 : vector<16x59xf32>
    %c0_16 = arith.constant 0 : index
    %c0_17 = arith.constant 0 : index
    %24 = vector.load %arg4[%c0_16, %c0_17] : memref<16x1xf32, #tpu.memory_space<vmem>>, vector<16x1xf32>
    %25 = vector.broadcast %24 : vector<16x1xf32> to vector<16x59xf32>
    %26 = arith.addf %23, %25 : vector<16x59xf32>
    %cst_18 = arith.constant 0.000000e+00 : f32
    %27 = vector.broadcast %cst_18 : f32 to vector<16x59xf32>
    %28 = arith.cmpf ogt, %26, %27 : vector<16x59xf32>
    %cst_19 = arith.constant 0.000000e+00 : f32
    %29 = vector.broadcast %cst_19 : f32 to vector<16x59xf32>
    %30 = arith.minimumf %26, %29 : vector<16x59xf32>
    %31 = math.exp %30 : vector<16x59xf32>
    %cst_20 = arith.constant 1.000000e+00 : f32
    %32 = vector.broadcast %cst_20 : f32 to vector<16x59xf32>
    %33 = arith.subf %31, %32 : vector<16x59xf32>
    %34 = arith.select %28, %26, %33 : vector<16x59xi1>, vector<16x59xf32>
    %35 = vector.extract_strided_slice %34 {offsets = [0, 0], sizes = [16, 57], strides = [1, 1]} : vector<16x59xf32> to vector<16x57xf32>
    %36 = vector.extract_strided_slice %34 {offsets = [0, 1], sizes = [16, 57], strides = [1, 1]} : vector<16x59xf32> to vector<16x57xf32>
    %37 = arith.maximumf %35, %36 : vector<16x57xf32>
    %38 = tpu.iota {dimensions = array<i32: 0>} : vector<57x29xi32>
    %39 = tpu.iota {dimensions = array<i32: 1>} : vector<57x29xi32>
    %c2_i32 = arith.constant 2 : i32
    %40 = vector.broadcast %c2_i32 : i32 to vector<57x29xi32>
    %41 = arith.muli %39, %40 : vector<57x29xi32>
    %42 = arith.cmpi eq, %38, %41 : vector<57x29xi32>
    %43 = arith.extui %42 : vector<57x29xi1> to vector<57x29xi32>
    %44 = arith.sitofp %43 : vector<57x29xi32> to vector<57x29xf32>
    %cst_21 = arith.constant dense<0.000000e+00> : vector<16x29xf32>
    %45 = tpu.matmul %37, %44, %cst_21 {dimension_numbers = #tpu.dot_dimension_numbers<[1], [0], [0], [1], [0, 0, 1, 1], [], []>} : vector<16x57xf32>, vector<57x29xf32>, vector<16x29xf32> -> vector<16x29xf32>
    %c0_22 = arith.constant 0 : index
    %c0_23 = arith.constant 0 : index
    %c0_24 = arith.constant 0 : index
    %46 = vector.load %arg5[%c0_22, %c0_23, %c0_24] : memref<1x16x29xf32, #tpu.memory_space<vmem>>, vector<1x16x29xf32>
    %47 = vector.shape_cast %46 : vector<1x16x29xf32> to vector<16x29xf32>
    %48 = vector.shape_cast %45 : vector<16x29xf32> to vector<1x16x29xf32>
    tpu.vector_store %arg5[%c0_22, %c0_23, %c0_24], %48 {strides = array<i32>} : memref<1x16x29xf32, #tpu.memory_space<vmem>>, vector<1x16x29xf32>,
    return
  }
  func.func @transform_0(%arg0: i32) -> (i32, i32, i32) {
    %c0_i32 = arith.constant 0 : i32
    %c0_i32_0 = arith.constant 0 : i32
    %c0_i32_1 = arith.constant 0 : i32
    return %arg0, %c0_i32, %c0_i32_0 : i32, i32, i32
  }
  func.func @transform_1(%arg0: i32) -> (i32, i32, i32) {
    %c0_i32 = arith.constant 0 : i32
    %c0_i32_0 = arith.constant 0 : i32
    %c0_i32_1 = arith.constant 0 : i32
    %c0_i32_2 = arith.constant 0 : i32
    return %c0_i32, %c0_i32_0, %c0_i32_1 : i32, i32, i32
  }
  func.func @transform_2(%arg0: i32) -> (i32, i32) {
    %c0_i32 = arith.constant 0 : i32
    %c0_i32_0 = arith.constant 0 : i32
    %c0_i32_1 = arith.constant 0 : i32
    return %c0_i32, %c0_i32_0 : i32, i32
  }
  func.func @transform_3(%arg0: i32) -> (i32, i32) {
    %c0_i32 = arith.constant 0 : i32
    %c0_i32_0 = arith.constant 0 : i32
    %c0_i32_1 = arith.constant 0 : i32
    return %c0_i32, %c0_i32_0 : i32, i32
  }
  func.func @transform_4(%arg0: i32) -> (i32, i32, i32) {
    %c0_i32 = arith.constant 0 : i32
    %c0_i32_0 = arith.constant 0 : i32
    %c0_i32_1 = arith.constant 0 : i32
    return %arg0, %c0_i32, %c0_i32_0 : i32, i32, i32
  }
}

module attributes {stable_mosaic.version = 11 : i64} {
  func.func @_conv_act_pool_kernel(%arg0: i32, %arg1: memref<1x16x29xf32, #tpu.memory_space<vmem>>, %arg2: memref<4x32x16xf32, #tpu.memory_space<vmem>>, %arg3: memref<32x1xf32, #tpu.memory_space<vmem>>, %arg4: memref<32x1xf32, #tpu.memory_space<vmem>>, %arg5: memref<1x32x13xf32, #tpu.memory_space<vmem>>) attributes {dimension_semantics = [#tpu.dimension_semantics<parallel>], iteration_bounds = array<i64: 2>, scalar_prefetch = 0 : i64, scratch_operands = 0 : i64, tpu.core_type = #tpu.core_type<tc>, window_params = [{transform_indices = @transform_0, window_bounds = array<i64: 1, 16, 29>}, {pipeline_mode = #tpu.pipeline_mode<synchronous>, transform_indices = @transform_1, window_bounds = array<i64: 4, 32, 16>}, {pipeline_mode = #tpu.pipeline_mode<synchronous>, transform_indices = @transform_2, window_bounds = array<i64: 32, 1>}, {pipeline_mode = #tpu.pipeline_mode<synchronous>, transform_indices = @transform_3, window_bounds = array<i64: 32, 1>}, {transform_indices = @transform_4, window_bounds = array<i64: 1, 32, 13>}]} {
    %c0 = arith.constant 0 : index
    %c0_0 = arith.constant 0 : index
    %c0_1 = arith.constant 0 : index
    %0 = vector.load %arg1[%c0, %c0_0, %c0_1] : memref<1x16x29xf32, #tpu.memory_space<vmem>>, vector<1x16x29xf32>
    %1 = vector.shape_cast %0 : vector<1x16x29xf32> to vector<16x29xf32>
    %c0_2 = arith.constant 0 : index
    %c0_3 = arith.constant 0 : index
    %c0_4 = arith.constant 0 : index
    %2 = vector.load %arg2[%c0_2, %c0_3, %c0_4] : memref<4x32x16xf32, #tpu.memory_space<vmem>>, vector<1x32x16xf32>
    %3 = vector.shape_cast %2 : vector<1x32x16xf32> to vector<32x16xf32>
    %4 = vector.extract_strided_slice %1 {offsets = [0, 0], sizes = [16, 26], strides = [1, 1]} : vector<16x29xf32> to vector<16x26xf32>
    %cst = arith.constant dense<0.000000e+00> : vector<32x26xf32>
    %5 = tpu.matmul %3, %4, %cst {dimension_numbers = #tpu.dot_dimension_numbers<[1], [0], [0], [1], [0, 0, 1, 1], [], []>} : vector<32x16xf32>, vector<16x26xf32>, vector<32x26xf32> -> vector<32x26xf32>
    %c1 = arith.constant 1 : index
    %c0_5 = arith.constant 0 : index
    %c0_6 = arith.constant 0 : index
    %6 = vector.load %arg2[%c1, %c0_5, %c0_6] : memref<4x32x16xf32, #tpu.memory_space<vmem>>, vector<1x32x16xf32>
    %7 = vector.shape_cast %6 : vector<1x32x16xf32> to vector<32x16xf32>
    %8 = vector.extract_strided_slice %1 {offsets = [0, 1], sizes = [16, 26], strides = [1, 1]} : vector<16x29xf32> to vector<16x26xf32>
    %cst_7 = arith.constant dense<0.000000e+00> : vector<32x26xf32>
    %9 = tpu.matmul %7, %8, %cst_7 {dimension_numbers = #tpu.dot_dimension_numbers<[1], [0], [0], [1], [0, 0, 1, 1], [], []>} : vector<32x16xf32>, vector<16x26xf32>, vector<32x26xf32> -> vector<32x26xf32>
    %10 = arith.addf %5, %9 : vector<32x26xf32>
    %c2 = arith.constant 2 : index
    %c0_8 = arith.constant 0 : index
    %c0_9 = arith.constant 0 : index
    %11 = vector.load %arg2[%c2, %c0_8, %c0_9] : memref<4x32x16xf32, #tpu.memory_space<vmem>>, vector<1x32x16xf32>
    %12 = vector.shape_cast %11 : vector<1x32x16xf32> to vector<32x16xf32>
    %13 = vector.extract_strided_slice %1 {offsets = [0, 2], sizes = [16, 26], strides = [1, 1]} : vector<16x29xf32> to vector<16x26xf32>
    %cst_10 = arith.constant dense<0.000000e+00> : vector<32x26xf32>
    %14 = tpu.matmul %12, %13, %cst_10 {dimension_numbers = #tpu.dot_dimension_numbers<[1], [0], [0], [1], [0, 0, 1, 1], [], []>} : vector<32x16xf32>, vector<16x26xf32>, vector<32x26xf32> -> vector<32x26xf32>
    %15 = arith.addf %10, %14 : vector<32x26xf32>
    %c3 = arith.constant 3 : index
    %c0_11 = arith.constant 0 : index
    %c0_12 = arith.constant 0 : index
    %16 = vector.load %arg2[%c3, %c0_11, %c0_12] : memref<4x32x16xf32, #tpu.memory_space<vmem>>, vector<1x32x16xf32>
    %17 = vector.shape_cast %16 : vector<1x32x16xf32> to vector<32x16xf32>
    %18 = vector.extract_strided_slice %1 {offsets = [0, 3], sizes = [16, 26], strides = [1, 1]} : vector<16x29xf32> to vector<16x26xf32>
    %cst_13 = arith.constant dense<0.000000e+00> : vector<32x26xf32>
    %19 = tpu.matmul %17, %18, %cst_13 {dimension_numbers = #tpu.dot_dimension_numbers<[1], [0], [0], [1], [0, 0, 1, 1], [], []>} : vector<32x16xf32>, vector<16x26xf32>, vector<32x26xf32> -> vector<32x26xf32>
    %20 = arith.addf %15, %19 : vector<32x26xf32>
    %c0_14 = arith.constant 0 : index
    %c0_15 = arith.constant 0 : index
    %21 = vector.load %arg3[%c0_14, %c0_15] : memref<32x1xf32, #tpu.memory_space<vmem>>, vector<32x1xf32>
    %22 = vector.broadcast %21 : vector<32x1xf32> to vector<32x26xf32>
    %23 = arith.mulf %20, %22 : vector<32x26xf32>
    %c0_16 = arith.constant 0 : index
    %c0_17 = arith.constant 0 : index
    %24 = vector.load %arg4[%c0_16, %c0_17] : memref<32x1xf32, #tpu.memory_space<vmem>>, vector<32x1xf32>
    %25 = vector.broadcast %24 : vector<32x1xf32> to vector<32x26xf32>
    %26 = arith.addf %23, %25 : vector<32x26xf32>
    %cst_18 = arith.constant 0.000000e+00 : f32
    %27 = vector.broadcast %cst_18 : f32 to vector<32x26xf32>
    %28 = arith.cmpf ogt, %26, %27 : vector<32x26xf32>
    %cst_19 = arith.constant 0.000000e+00 : f32
    %29 = vector.broadcast %cst_19 : f32 to vector<32x26xf32>
    %30 = arith.minimumf %26, %29 : vector<32x26xf32>
    %31 = math.exp %30 : vector<32x26xf32>
    %cst_20 = arith.constant 1.000000e+00 : f32
    %32 = vector.broadcast %cst_20 : f32 to vector<32x26xf32>
    %33 = arith.subf %31, %32 : vector<32x26xf32>
    %34 = arith.select %28, %26, %33 : vector<32x26xi1>, vector<32x26xf32>
    %35 = vector.extract_strided_slice %34 {offsets = [0, 0], sizes = [32, 25], strides = [1, 1]} : vector<32x26xf32> to vector<32x25xf32>
    %36 = vector.extract_strided_slice %34 {offsets = [0, 1], sizes = [32, 25], strides = [1, 1]} : vector<32x26xf32> to vector<32x25xf32>
    %37 = arith.maximumf %35, %36 : vector<32x25xf32>
    %38 = tpu.iota {dimensions = array<i32: 0>} : vector<25x13xi32>
    %39 = tpu.iota {dimensions = array<i32: 1>} : vector<25x13xi32>
    %c2_i32 = arith.constant 2 : i32
    %40 = vector.broadcast %c2_i32 : i32 to vector<25x13xi32>
    %41 = arith.muli %39, %40 : vector<25x13xi32>
    %42 = arith.cmpi eq, %38, %41 : vector<25x13xi32>
    %43 = arith.extui %42 : vector<25x13xi1> to vector<25x13xi32>
    %44 = arith.sitofp %43 : vector<25x13xi32> to vector<25x13xf32>
    %cst_21 = arith.constant dense<0.000000e+00> : vector<32x13xf32>
    %45 = tpu.matmul %37, %44, %cst_21 {dimension_numbers = #tpu.dot_dimension_numbers<[1], [0], [0], [1], [0, 0, 1, 1], [], []>} : vector<32x25xf32>, vector<25x13xf32>, vector<32x13xf32> -> vector<32x13xf32>
    %c0_22 = arith.constant 0 : index
    %c0_23 = arith.constant 0 : index
    %c0_24 = arith.constant 0 : index
    %46 = vector.load %arg5[%c0_22, %c0_23, %c0_24] : memref<1x32x13xf32, #tpu.memory_space<vmem>>, vector<1x32x13xf32>
    %47 = vector.shape_cast %46 : vector<1x32x13xf32> to vector<32x13xf32>
    %48 = vector.shape_cast %45 : vector<32x13xf32> to vector<1x32x13xf32>
    tpu.vector_store %arg5[%c0_22, %c0_23, %c0_24], %48 {strides = array<i32>} : memref<1x32x13xf32, #tpu.memory_space<vmem>>, vector<1x32x13xf32>,
    return
  }
  func.func @transform_0(%arg0: i32) -> (i32, i32, i32) {
    %c0_i32 = arith.constant 0 : i32
    %c0_i32_0 = arith.constant 0 : i32
    %c0_i32_1 = arith.constant 0 : i32
    return %arg0, %c0_i32, %c0_i32_0 : i32, i32, i32
  }
  func.func @transform_1(%arg0: i32) -> (i32, i32, i32) {
    %c0_i32 = arith.constant 0 : i32
    %c0_i32_0 = arith.constant 0 : i32
    %c0_i32_1 = arith.constant 0 : i32
    %c0_i32_2 = arith.constant 0 : i32
    return %c0_i32, %c0_i32_0, %c0_i32_1 : i32, i32, i32
  }
  func.func @transform_2(%arg0: i32) -> (i32, i32) {
    %c0_i32 = arith.constant 0 : i32
    %c0_i32_0 = arith.constant 0 : i32
    %c0_i32_1 = arith.constant 0 : i32
    return %c0_i32, %c0_i32_0 : i32, i32
  }
  func.func @transform_3(%arg0: i32) -> (i32, i32) {
    %c0_i32 = arith.constant 0 : i32
    %c0_i32_0 = arith.constant 0 : i32
    %c0_i32_1 = arith.constant 0 : i32
    return %c0_i32, %c0_i32_0 : i32, i32
  }
  func.func @transform_4(%arg0: i32) -> (i32, i32, i32) {
    %c0_i32 = arith.constant 0 : i32
    %c0_i32_0 = arith.constant 0 : i32
    %c0_i32_1 = arith.constant 0 : i32
    return %arg0, %c0_i32, %c0_i32_0 : i32, i32, i32
  }
}

module attributes {stable_mosaic.version = 11 : i64} {
  func.func @_conv_act_pool_kernel(%arg0: i32, %arg1: memref<1x32x13xf32, #tpu.memory_space<vmem>>, %arg2: memref<4x64x32xf32, #tpu.memory_space<vmem>>, %arg3: memref<64x1xf32, #tpu.memory_space<vmem>>, %arg4: memref<64x1xf32, #tpu.memory_space<vmem>>, %arg5: memref<1x64x5xf32, #tpu.memory_space<vmem>>) attributes {dimension_semantics = [#tpu.dimension_semantics<parallel>], iteration_bounds = array<i64: 2>, scalar_prefetch = 0 : i64, scratch_operands = 0 : i64, tpu.core_type = #tpu.core_type<tc>, window_params = [{transform_indices = @transform_0, window_bounds = array<i64: 1, 32, 13>}, {pipeline_mode = #tpu.pipeline_mode<synchronous>, transform_indices = @transform_1, window_bounds = array<i64: 4, 64, 32>}, {pipeline_mode = #tpu.pipeline_mode<synchronous>, transform_indices = @transform_2, window_bounds = array<i64: 64, 1>}, {pipeline_mode = #tpu.pipeline_mode<synchronous>, transform_indices = @transform_3, window_bounds = array<i64: 64, 1>}, {transform_indices = @transform_4, window_bounds = array<i64: 1, 64, 5>}]} {
    %c0 = arith.constant 0 : index
    %c0_0 = arith.constant 0 : index
    %c0_1 = arith.constant 0 : index
    %0 = vector.load %arg1[%c0, %c0_0, %c0_1] : memref<1x32x13xf32, #tpu.memory_space<vmem>>, vector<1x32x13xf32>
    %1 = vector.shape_cast %0 : vector<1x32x13xf32> to vector<32x13xf32>
    %c0_2 = arith.constant 0 : index
    %c0_3 = arith.constant 0 : index
    %c0_4 = arith.constant 0 : index
    %2 = vector.load %arg2[%c0_2, %c0_3, %c0_4] : memref<4x64x32xf32, #tpu.memory_space<vmem>>, vector<1x64x32xf32>
    %3 = vector.shape_cast %2 : vector<1x64x32xf32> to vector<64x32xf32>
    %4 = vector.extract_strided_slice %1 {offsets = [0, 0], sizes = [32, 10], strides = [1, 1]} : vector<32x13xf32> to vector<32x10xf32>
    %cst = arith.constant dense<0.000000e+00> : vector<64x10xf32>
    %5 = tpu.matmul %3, %4, %cst {dimension_numbers = #tpu.dot_dimension_numbers<[1], [0], [0], [1], [0, 0, 1, 1], [], []>} : vector<64x32xf32>, vector<32x10xf32>, vector<64x10xf32> -> vector<64x10xf32>
    %c1 = arith.constant 1 : index
    %c0_5 = arith.constant 0 : index
    %c0_6 = arith.constant 0 : index
    %6 = vector.load %arg2[%c1, %c0_5, %c0_6] : memref<4x64x32xf32, #tpu.memory_space<vmem>>, vector<1x64x32xf32>
    %7 = vector.shape_cast %6 : vector<1x64x32xf32> to vector<64x32xf32>
    %8 = vector.extract_strided_slice %1 {offsets = [0, 1], sizes = [32, 10], strides = [1, 1]} : vector<32x13xf32> to vector<32x10xf32>
    %cst_7 = arith.constant dense<0.000000e+00> : vector<64x10xf32>
    %9 = tpu.matmul %7, %8, %cst_7 {dimension_numbers = #tpu.dot_dimension_numbers<[1], [0], [0], [1], [0, 0, 1, 1], [], []>} : vector<64x32xf32>, vector<32x10xf32>, vector<64x10xf32> -> vector<64x10xf32>
    %10 = arith.addf %5, %9 : vector<64x10xf32>
    %c2 = arith.constant 2 : index
    %c0_8 = arith.constant 0 : index
    %c0_9 = arith.constant 0 : index
    %11 = vector.load %arg2[%c2, %c0_8, %c0_9] : memref<4x64x32xf32, #tpu.memory_space<vmem>>, vector<1x64x32xf32>
    %12 = vector.shape_cast %11 : vector<1x64x32xf32> to vector<64x32xf32>
    %13 = vector.extract_strided_slice %1 {offsets = [0, 2], sizes = [32, 10], strides = [1, 1]} : vector<32x13xf32> to vector<32x10xf32>
    %cst_10 = arith.constant dense<0.000000e+00> : vector<64x10xf32>
    %14 = tpu.matmul %12, %13, %cst_10 {dimension_numbers = #tpu.dot_dimension_numbers<[1], [0], [0], [1], [0, 0, 1, 1], [], []>} : vector<64x32xf32>, vector<32x10xf32>, vector<64x10xf32> -> vector<64x10xf32>
    %15 = arith.addf %10, %14 : vector<64x10xf32>
    %c3 = arith.constant 3 : index
    %c0_11 = arith.constant 0 : index
    %c0_12 = arith.constant 0 : index
    %16 = vector.load %arg2[%c3, %c0_11, %c0_12] : memref<4x64x32xf32, #tpu.memory_space<vmem>>, vector<1x64x32xf32>
    %17 = vector.shape_cast %16 : vector<1x64x32xf32> to vector<64x32xf32>
    %18 = vector.extract_strided_slice %1 {offsets = [0, 3], sizes = [32, 10], strides = [1, 1]} : vector<32x13xf32> to vector<32x10xf32>
    %cst_13 = arith.constant dense<0.000000e+00> : vector<64x10xf32>
    %19 = tpu.matmul %17, %18, %cst_13 {dimension_numbers = #tpu.dot_dimension_numbers<[1], [0], [0], [1], [0, 0, 1, 1], [], []>} : vector<64x32xf32>, vector<32x10xf32>, vector<64x10xf32> -> vector<64x10xf32>
    %20 = arith.addf %15, %19 : vector<64x10xf32>
    %c0_14 = arith.constant 0 : index
    %c0_15 = arith.constant 0 : index
    %21 = vector.load %arg3[%c0_14, %c0_15] : memref<64x1xf32, #tpu.memory_space<vmem>>, vector<64x1xf32>
    %22 = vector.broadcast %21 : vector<64x1xf32> to vector<64x10xf32>
    %23 = arith.mulf %20, %22 : vector<64x10xf32>
    %c0_16 = arith.constant 0 : index
    %c0_17 = arith.constant 0 : index
    %24 = vector.load %arg4[%c0_16, %c0_17] : memref<64x1xf32, #tpu.memory_space<vmem>>, vector<64x1xf32>
    %25 = vector.broadcast %24 : vector<64x1xf32> to vector<64x10xf32>
    %26 = arith.addf %23, %25 : vector<64x10xf32>
    %cst_18 = arith.constant 0.000000e+00 : f32
    %27 = vector.broadcast %cst_18 : f32 to vector<64x10xf32>
    %28 = arith.cmpf ogt, %26, %27 : vector<64x10xf32>
    %cst_19 = arith.constant 0.000000e+00 : f32
    %29 = vector.broadcast %cst_19 : f32 to vector<64x10xf32>
    %30 = arith.minimumf %26, %29 : vector<64x10xf32>
    %31 = math.exp %30 : vector<64x10xf32>
    %cst_20 = arith.constant 1.000000e+00 : f32
    %32 = vector.broadcast %cst_20 : f32 to vector<64x10xf32>
    %33 = arith.subf %31, %32 : vector<64x10xf32>
    %34 = arith.select %28, %26, %33 : vector<64x10xi1>, vector<64x10xf32>
    %35 = vector.extract_strided_slice %34 {offsets = [0, 0], sizes = [64, 9], strides = [1, 1]} : vector<64x10xf32> to vector<64x9xf32>
    %36 = vector.extract_strided_slice %34 {offsets = [0, 1], sizes = [64, 9], strides = [1, 1]} : vector<64x10xf32> to vector<64x9xf32>
    %37 = arith.maximumf %35, %36 : vector<64x9xf32>
    %38 = tpu.iota {dimensions = array<i32: 0>} : vector<9x5xi32>
    %39 = tpu.iota {dimensions = array<i32: 1>} : vector<9x5xi32>
    %c2_i32 = arith.constant 2 : i32
    %40 = vector.broadcast %c2_i32 : i32 to vector<9x5xi32>
    %41 = arith.muli %39, %40 : vector<9x5xi32>
    %42 = arith.cmpi eq, %38, %41 : vector<9x5xi32>
    %43 = arith.extui %42 : vector<9x5xi1> to vector<9x5xi32>
    %44 = arith.sitofp %43 : vector<9x5xi32> to vector<9x5xf32>
    %cst_21 = arith.constant dense<0.000000e+00> : vector<64x5xf32>
    %45 = tpu.matmul %37, %44, %cst_21 {dimension_numbers = #tpu.dot_dimension_numbers<[1], [0], [0], [1], [0, 0, 1, 1], [], []>} : vector<64x9xf32>, vector<9x5xf32>, vector<64x5xf32> -> vector<64x5xf32>
    %c0_22 = arith.constant 0 : index
    %c0_23 = arith.constant 0 : index
    %c0_24 = arith.constant 0 : index
    %46 = vector.load %arg5[%c0_22, %c0_23, %c0_24] : memref<1x64x5xf32, #tpu.memory_space<vmem>>, vector<1x64x5xf32>
    %47 = vector.shape_cast %46 : vector<1x64x5xf32> to vector<64x5xf32>
    %48 = vector.shape_cast %45 : vector<64x5xf32> to vector<1x64x5xf32>
    tpu.vector_store %arg5[%c0_22, %c0_23, %c0_24], %48 {strides = array<i32>} : memref<1x64x5xf32, #tpu.memory_space<vmem>>, vector<1x64x5xf32>,
    return
  }
  func.func @transform_0(%arg0: i32) -> (i32, i32, i32) {
    %c0_i32 = arith.constant 0 : i32
    %c0_i32_0 = arith.constant 0 : i32
    %c0_i32_1 = arith.constant 0 : i32
    return %arg0, %c0_i32, %c0_i32_0 : i32, i32, i32
  }
  func.func @transform_1(%arg0: i32) -> (i32, i32, i32) {
    %c0_i32 = arith.constant 0 : i32
    %c0_i32_0 = arith.constant 0 : i32
    %c0_i32_1 = arith.constant 0 : i32
    %c0_i32_2 = arith.constant 0 : i32
    return %c0_i32, %c0_i32_0, %c0_i32_1 : i32, i32, i32
  }
  func.func @transform_2(%arg0: i32) -> (i32, i32) {
    %c0_i32 = arith.constant 0 : i32
    %c0_i32_0 = arith.constant 0 : i32
    %c0_i32_1 = arith.constant 0 : i32
    return %c0_i32, %c0_i32_0 : i32, i32
  }
  func.func @transform_3(%arg0: i32) -> (i32, i32) {
    %c0_i32 = arith.constant 0 : i32
    %c0_i32_0 = arith.constant 0 : i32
    %c0_i32_1 = arith.constant 0 : i32
    return %c0_i32, %c0_i32_0 : i32, i32
  }
  func.func @transform_4(%arg0: i32) -> (i32, i32, i32) {
    %c0_i32 = arith.constant 0 : i32
    %c0_i32_0 = arith.constant 0 : i32
    %c0_i32_1 = arith.constant 0 : i32
    return %arg0, %c0_i32, %c0_i32_0 : i32, i32, i32
  }
}

module attributes {stable_mosaic.version = 11 : i64} {
  func.func @_linear_kernel(%arg0: memref<2x320xf32, #tpu.memory_space<vmem>>, %arg1: memref<320x4xf32, #tpu.memory_space<vmem>>, %arg2: memref<1x4xf32, #tpu.memory_space<vmem>>, %arg3: memref<2x4xf32, #tpu.memory_space<vmem>>) attributes {dimension_semantics = [], scalar_prefetch = 0 : i64, scratch_operands = 0 : i64, tpu.core_type = #tpu.core_type<tc>} {
    %c0 = arith.constant 0 : index
    %c0_0 = arith.constant 0 : index
    %0 = vector.load %arg0[%c0, %c0_0] : memref<2x320xf32, #tpu.memory_space<vmem>>, vector<2x320xf32>
    %c0_1 = arith.constant 0 : index
    %c0_2 = arith.constant 0 : index
    %1 = vector.load %arg1[%c0_1, %c0_2] : memref<320x4xf32, #tpu.memory_space<vmem>>, vector<320x4xf32>
    %cst = arith.constant dense<0.000000e+00> : vector<2x4xf32>
    %2 = tpu.matmul %0, %1, %cst {dimension_numbers = #tpu.dot_dimension_numbers<[1], [0], [0], [1], [0, 0, 1, 1], [], []>} : vector<2x320xf32>, vector<320x4xf32>, vector<2x4xf32> -> vector<2x4xf32>
    %c0_3 = arith.constant 0 : index
    %c0_4 = arith.constant 0 : index
    %3 = vector.load %arg2[%c0_3, %c0_4] : memref<1x4xf32, #tpu.memory_space<vmem>>, vector<1x4xf32>
    %4 = vector.broadcast %3 : vector<1x4xf32> to vector<2x4xf32>
    %5 = arith.addf %2, %4 : vector<2x4xf32>
    %c0_5 = arith.constant 0 : index
    %c0_6 = arith.constant 0 : index
    %6 = vector.load %arg3[%c0_5, %c0_6] : memref<2x4xf32, #tpu.memory_space<vmem>>, vector<2x4xf32>
    tpu.vector_store %arg3[%c0_5, %c0_6], %5 {strides = array<i32>} : memref<2x4xf32, #tpu.memory_space<vmem>>, vector<2x4xf32>,
    return
  }
}

</mosaic_0001>

<llo_original>
// kernel: deepconvnet_forward.6
$region0: #{deepconvnet_forward.6}
  #allocation0 [shape = 'u32[]', space=smem, size = 0x4, offset = 0x4, fixed_abs, tag = 'smem constant byte address 0x4 - core index']
  #allocation1 [shape = 'u32[72,128]{1,0:T(1,128)}', space=vmem, size = 0x9000, scoped, tag = 'internal scratch']
  %s0 = inlined_call_operand.vmem [shape: f32[8,1,128], index: 0, kind: input, shape index: {}]
  %s1 = inlined_call_operand.vmem [shape: f32[4,8,1], index: 1, kind: input, shape index: {}]
  %s2 = inlined_call_operand.vmem [shape: f32[8,1], index: 2, kind: input, shape index: {}]
  %s3 = inlined_call_operand.vmem [shape: f32[8,1], index: 3, kind: input, shape index: {}]
  %s4 = inlined_call_operand.vmem [shape: f32[8,8,125], index: 4, kind: output, shape index: {}]
  %s5 = sld [smem:[#allocation0]]
  $region49: #{deepconvnet_forward.6} parent=0
    _
  %s7 = ssub.s32 1, %s5
  %s8 = scalar_select 0, %s7, %s5
  loop: start=0, step=1, limit=10
  $region2: #{deepconvnet_forward.6} parent=0 // loop_pre_header
    _
  $region3: #{deepconvnet_forward.6} parent=0 // loop_header
    %s10 = sphi 0, %s14
    %p11 = scmp.ge.s32.totalorder %s10, 10
    %s20 = sphi 0, %s22
    %s23 = sphi 0, %s20
    %s24 = sphi 0, %s23
    %s40 = sphi 0, %s24
    %s44 = sphi 0, %s44
    %s46 = sphi 0, %s44
    %s47 = sphi 0, %s46
    %s61 = sphi 0, %s47
    %s65 = sphi 0, %s65
    %s67 = sphi 0, %s65
    %s68 = sphi 0, %s67
    %s82 = sphi 0, %s68
    %s86 = sphi 0, %s86
    %s88 = sphi 0, %s86
    %s89 = sphi 0, %s88
    %s103 = sphi 0, %s89
    %s109 = sphi 0, %s111
    %s112 = sphi 0, %s109
    %s113 = sphi 0, %s112
    %s129 = sphi 0, %s113
  $region4: #{deepconvnet_forward.6} parent=0 // loop_header_branch
    %13 = sbr.rel (%p11) target = $region8
  $region5: #{deepconvnet_forward.6} parent=0 // loop_body
    %s15 = ssub.s32 %s10, 1
    %s16 = ssub.s32 %s10, 2
    %s17 = sadd.s32 %s10, 1
    %s18 = ssub.s32 %s10, %s17
    %p19 = scmp.eq.s32.totalorder %s18, 0
    %s21 = sadd.s32 %s20, 1
    %s22 = scalar_select %p19, %s20, %s21
    %p25 = pneg %p19
    %p26 = scmp.eq.s32.totalorder %s10, 7
    %p27 = por %p25, %p26
    %p28 = scmp.ne.s32.totalorder %s20, %s23
    %p29 = scmp.eq.s32.totalorder %s10, 0
    %p30 = por %p28, %p29
    %p31 = scmp.ne.s32.totalorder %s20, %s23
    %p32 = scmp.eq.s32.totalorder %s15, 7
    %p33 = por %p31, %p32
    %p34 = scmp.ne.s32.totalorder %s23, %s24
    %p35 = scmp.eq.s32.totalorder %s15, 0
    %p36 = por %p34, %p35
    %p37 = scmp.ne.s32.totalorder %s23, %s24
    %p38 = scmp.eq.s32.totalorder %s16, 7
    %p39 = por %p37, %p38
    %p41 = scmp.ne.s32.totalorder %s24, %s40
    %p42 = scmp.eq.s32.totalorder %s16, 0
    %p43 = por %p41, %p42
    %s45 = sadd.s32 %s44, 1
    %p48 = scmp.eq.s32.totalorder %s10, 7
    %p49 = scmp.ne.s32.totalorder %s44, %s46
    %p50 = scmp.eq.s32.totalorder %s10, 0
    %p51 = por %p49, %p50
    %p52 = scmp.ne.s32.totalorder %s44, %s46
    %p53 = scmp.eq.s32.totalorder %s15, 7
    %p54 = por %p52, %p53
    %p55 = scmp.ne.s32.totalorder %s46, %s47
    %p56 = scmp.eq.s32.totalorder %s15, 0
    %p57 = por %p55, %p56
    %p58 = scmp.ne.s32.totalorder %s46, %s47
    %p59 = scmp.eq.s32.totalorder %s16, 7
    %p60 = por %p58, %p59
    %p62 = scmp.ne.s32.totalorder %s47, %s61
    %p63 = scmp.eq.s32.totalorder %s16, 0
    %p64 = por %p62, %p63
    %s66 = sadd.s32 %s65, 1
    %p69 = scmp.eq.s32.totalorder %s10, 7
    %p70 = scmp.ne.s32.totalorder %s65, %s67
    %p71 = scmp.eq.s32.totalorder %s10, 0
    %p72 = por %p70, %p71
    %p73 = scmp.ne.s32.totalorder %s65, %s67
    %p74 = scmp.eq.s32.totalorder %s15, 7
    %p75 = por %p73, %p74
    %p76 = scmp.ne.s32.totalorder %s67, %s68
    %p77 = scmp.eq.s32.totalorder %s15, 0
    %p78 = por %p76, %p77
    %p79 = scmp.ne.s32.totalorder %s67, %s68
    %p80 = scmp.eq.s32.totalorder %s16, 7
    %p81 = por %p79, %p80
    %p83 = scmp.ne.s32.totalorder %s68, %s82
    %p84 = scmp.eq.s32.totalorder %s16, 0
    %p85 = por %p83, %p84
    %s87 = sadd.s32 %s86, 1
    %p90 = scmp.eq.s32.totalorder %s10, 7
    %p91 = scmp.ne.s32.totalorder %s86, %s88
    %p92 = scmp.eq.s32.totalorder %s10, 0
    %p93 = por %p91, %p92
    %p94 = scmp.ne.s32.totalorder %s86, %s88
    %p95 = scmp.eq.s32.totalorder %s15, 7
    %p96 = por %p94, %p95
    %p97 = scmp.ne.s32.totalorder %s88, %s89
    %p98 = scmp.eq.s32.totalorder %s15, 0
    %p99 = por %p97, %p98
    %p100 = scmp.ne.s32.totalorder %s88, %s89
    %p101 = scmp.eq.s32.totalorder %s16, 7
    %p102 = por %p100, %p101
    %p104 = scmp.ne.s32.totalorder %s89, %s103
    %p105 = scmp.eq.s32.totalorder %s16, 0
    %p106 = por %p104, %p105
    %s107 = ssub.s32 %s10, %s17
    %p108 = scmp.eq.s32.totalorder %s107, 0
    %s110 = sadd.s32 %s109, 1
    %s111 = scalar_select %p108, %s109, %s110
    %p114 = pneg %p108
    %p115 = scmp.eq.s32.totalorder %s10, 7
    %p116 = por %p114, %p115
    %p117 = scmp.ne.s32.totalorder %s109, %s112
    %p118 = scmp.eq.s32.totalorder %s10, 0
    %p119 = por %p117, %p118
    %p120 = scmp.ne.s32.totalorder %s109, %s112
    %p121 = scmp.eq.s32.totalorder %s15, 7
    %p122 = por %p120, %p121
    %p123 = scmp.ne.s32.totalorder %s112, %s113
    %p124 = scmp.eq.s32.totalorder %s15, 0
    %p125 = por %p123, %p124
    %p126 = scmp.ne.s32.totalorder %s112, %s113
    %p127 = scmp.eq.s32.totalorder %s16, 7
    %p128 = por %p126, %p127
    %p130 = scmp.ne.s32.totalorder %s113, %s129
    %p131 = scmp.eq.s32.totalorder %s16, 0
    %p132 = por %p130, %p131
    %p133 = scmp.le.s32.totalorder 1, %s10
    %p134 = scmp.lt.s32.totalorder %s10, 9
    %p135 = pnand %p133, %p134
    %p136 = pneg %p135
    // Predicated region
    $region9: #{deepconvnet_forward.6} parent=5 // pred_check
      _
    $region10: #{deepconvnet_forward.6} parent=5 // pred_check_branch
      %138 = sbr.rel (%p135) target = $region12
    $region11: #{deepconvnet_forward.6} parent=5 // pred_region
      %s139 = ssub.s32 %s10, 1
      // Predicated region
      $region13: #{deepconvnet_forward.6} parent=11 // pred_check
        %p140 = pneg %p57
      $region14: #{deepconvnet_forward.6} parent=11 // pred_check_branch
        %142 = sbr.rel (%p140) target = $region16
      $region15: #{deepconvnet_forward.6} parent=11 // pred_region
        _
      $region16: #{deepconvnet_forward.6} parent=11 // pred_fallthru
        _
      // Predicated region
      $region17: #{deepconvnet_forward.6} parent=11 // pred_check
        %p143 = pneg %p78
      $region18: #{deepconvnet_forward.6} parent=11 // pred_check_branch
        %145 = sbr.rel (%p143) target = $region20
      $region19: #{deepconvnet_forward.6} parent=11 // pred_region
        _
      $region20: #{deepconvnet_forward.6} parent=11 // pred_fallthru
        _
      // Predicated region
      $region21: #{deepconvnet_forward.6} parent=11 // pred_check
        %p146 = pneg %p99
      $region22: #{deepconvnet_forward.6} parent=11 // pred_check_branch
        %148 = sbr.rel (%p146) target = $region24
      $region23: #{deepconvnet_forward.6} parent=11 // pred_region
        _
      $region24: #{deepconvnet_forward.6} parent=11 // pred_fallthru
        _
    $region12: #{deepconvnet_forward.6} parent=5 // pred_fallthru
      _
    %p149 = scmp.lt.s32.totalorder %s10, 8
    // Predicated region
    $region25: #{deepconvnet_forward.6} parent=5 // pred_check
      %p150 = pneg %p149
    $region26: #{deepconvnet_forward.6} parent=5 // pred_check_branch
      %152 = sbr.rel (%p150) target = $region28
    $region27: #{deepconvnet_forward.6} parent=5 // pred_region
      // Predicated region
      $region29: #{deepconvnet_forward.6} parent=27 // pred_check
        %p153 = pneg %p30
      $region30: #{deepconvnet_forward.6} parent=27 // pred_check_branch
        %155 = sbr.rel (%p153) target = $region32
      $region31: #{deepconvnet_forward.6} parent=27 // pred_region
        %p156 = scmp.lt.s32.totalorder %s10, 7
        %s157 = scalar_select %p156, %s10, 7
        %s158 = scalar_lea.vmem %s0, %s157
      $region32: #{deepconvnet_forward.6} parent=27 // pred_fallthru
        _
    $region28: #{deepconvnet_forward.6} parent=5 // pred_fallthru
      _
    %p159 = scmp.le.s32.totalorder 1, %s10
    %p160 = scmp.lt.s32.totalorder %s10, 9
    %p161 = pnand %p159, %p160
    %p162 = pneg %p161
    // Predicated region
    $region33: #{deepconvnet_forward.6} parent=5 // pred_check
      _
    $region34: #{deepconvnet_forward.6} parent=5 // pred_check_branch
      %164 = sbr.rel (%p161) target = $region36
    $region35: #{deepconvnet_forward.6} parent=5 // pred_region
      %s165 = ssub.s32 %s10, 1
      %p166 = scmp.lt.s32.totalorder %s15, 7
      %s167 = scalar_select %p166, %s15, 7
      %s168 = scalar_lea.vmem %s0, %s167
      %p169 = pneg %p36
      %p170 = pneg %p33
      %p171 = pneg %p57
      %p172 = pneg %p54
      %p173 = pneg %p78
      %p174 = pneg %p75
      %p175 = pneg %p99
      %p176 = pneg %p96
      %p177 = pneg %p125
      %p178 = pneg %p122
      %p179 = scmp.lt.s32.totalorder %s15, 7
      %s180 = scalar_select %p179, %s15, 7
      %s181 = smul.addr %s180, 8
      %s182 = scalar_lea.vmem %s4, %s181
      %p183 = scmp.lt.s32.totalorder %s15, 7
      %s184 = scalar_select %p183, %s15, 7
      %s185 = scalar_lea.vmem %s0, %s184
      %p186 = scmp.lt.s32.totalorder %s15, 7
      %s187 = scalar_select %p186, %s15, 7
      %s188 = smul.addr %s187, 8
      %s189 = scalar_lea.vmem %s4, %s188
      %v190 = vld [vmem:[%s185] sm:$0x1]
      %v191 = vld [vmem:[%s1] sm:$0xff]
      %193 = vset.pattern.permute.xlu0 0
      %194 = vperm.xlu0 %193, %v191
      %v195 = vpop.permute.xlu0 %194
      %v198 = vperm.slane %v190, 0
      %v200 = vmul.f32 %v195, %v198
      %s201 = scalar_lea.vmem %s1, 8
      %v202 = vld [vmem:[%s201] sm:$0xff]
      %204 = vset.pattern.permute.xlu0 0
      %205 = vperm.xlu0 %204, %v202
      %v206 = vpop.permute.xlu0 %205
      %v208 = vmul.f32 %v206, %v198
      %210 = vrot.lane.b32.xlu0 %v208, 127
      %v211 = vpop.permute.xlu0 %210
      %v213 = vadd.f32 %v200, %v211
      %s214 = scalar_lea.vmem %s1, 16
      %v215 = vld [vmem:[%s214] sm:$0xff]
      %217 = vset.pattern.permute.xlu0 0
      %218 = vperm.xlu0 %217, %v215
      %v219 = vpop.permute.xlu0 %218
      %v221 = vmul.f32 %v219, %v198
      %223 = vrot.lane.b32.xlu0 %v221, 126
      %v224 = vpop.permute.xlu0 %223
      %v226 = vadd.f32 %v213, %v224
      %s227 = scalar_lea.vmem %s1, 24
      %v228 = vld [vmem:[%s227] sm:$0xff]
      %230 = vset.pattern.permute.xlu0 0
      %231 = vperm.xlu0 %230, %v228
      %v232 = vpop.permute.xlu0 %231
      %v234 = vmul.f32 %v232, %v198
      %236 = vrot.lane.b32.xlu0 %v234, 125
      %v237 = vpop.permute.xlu0 %236
      %v239 = vadd.f32 %v226, %v237
      %v240 = vld [vmem:[%s2] sm:$0xff]
      %242 = vset.pattern.permute.xlu0 0
      %243 = vperm.xlu0 %242, %v240
      %v244 = vpop.permute.xlu0 %243
      %v246 = vmul.f32 %v239, %v244
      %v247 = vld [vmem:[%s3] sm:$0xff]
      %249 = vset.pattern.permute.xlu0 0
      %250 = vperm.xlu0 %249, %v247
      %v251 = vpop.permute.xlu0 %250
      %v253 = vadd.f32 %v246, %v251
      %vm254 = vcmask 1022976
      %255 = vst.msk [vmem:[%s189] sm:$0xff] %vm254, %v253
      %p256 = scmp.lt.s32.totalorder %s15, 7
      %s257 = scalar_select %p256, %s15, 7
      %s258 = smul.addr %s257, 8
      %s259 = scalar_lea.vmem %s4, %s258
      // Predicated region
      $region37: #{deepconvnet_forward.6} parent=35 // pred_check
        %p260 = pneg %p122
      $region38: #{deepconvnet_forward.6} parent=35 // pred_check_branch
        %262 = sbr.rel (%p260) target = $region40
      $region39: #{deepconvnet_forward.6} parent=35 // pred_region
        _
      $region40: #{deepconvnet_forward.6} parent=35 // pred_fallthru
        _
    $region36: #{deepconvnet_forward.6} parent=5 // pred_fallthru
      _
    %p263 = scmp.le.s32.totalorder 2, %s10
    // Predicated region
    $region41: #{deepconvnet_forward.6} parent=5 // pred_check
      %p264 = pneg %p263
    $region42: #{deepconvnet_forward.6} parent=5 // pred_check_branch
      %266 = sbr.rel (%p264) target = $region44
    $region43: #{deepconvnet_forward.6} parent=5 // pred_region
      %s267 = ssub.s32 %s10, 2
      // Predicated region
      $region45: #{deepconvnet_forward.6} parent=43 // pred_check
        %p268 = pneg %p128
      $region46: #{deepconvnet_forward.6} parent=43 // pred_check_branch
        %270 = sbr.rel (%p268) target = $region48
      $region47: #{deepconvnet_forward.6} parent=43 // pred_region
        %p271 = scmp.lt.s32.totalorder %s16, 7
        %s272 = scalar_select %p271, %s16, 7
        %s273 = smul.addr %s272, 8
        %s274 = scalar_lea.vmem %s4, %s273
      $region48: #{deepconvnet_forward.6} parent=43 // pred_fallthru
        _
    $region44: #{deepconvnet_forward.6} parent=5 // pred_fallthru
      _
  $region6: #{deepconvnet_forward.6} parent=0 // loop_footer
    %s14 = sadd.s32 1, %s10
  $region7: #{deepconvnet_forward.6} parent=0 // loop_footer_branch
    %9 = sbr.rel target = $region3
  $region8: #{deepconvnet_forward.6} parent=0 // loop_exit
    _

// kernel: deepconvnet_forward.7
$region0: #{deepconvnet_forward.7}
  #allocation0 [shape = 'u32[]', space=smem, size = 0x4, offset = 0x4, fixed_abs, tag = 'smem constant byte address 0x4 - core index']
  #allocation1 [shape = 'u32[72,128]{1,0:T(1,128)}', space=vmem, size = 0x9000, scoped, tag = 'internal scratch']
  %s0 = inlined_call_operand.vmem [shape: f32[2,32,125], index: 0, kind: input, shape index: {}]
  %s1 = inlined_call_operand.vmem [shape: f32[1,8,32], index: 1, kind: input, shape index: {}]
  %s2 = inlined_call_operand.vmem [shape: f32[8,1], index: 2, kind: input, shape index: {}]
  %s3 = inlined_call_operand.vmem [shape: f32[8,1], index: 3, kind: input, shape index: {}]
  %s4 = inlined_call_operand.vmem [shape: f32[2,8,62], index: 4, kind: output, shape index: {}]
  %s5 = sld [smem:[#allocation0]]
  $region49: #{deepconvnet_forward.7} parent=0
    _
  %s7 = ssub.s32 1, %s5
  %s8 = scalar_select 0, %s7, %s5
  loop: start=0, step=1, limit=4
  $region2: #{deepconvnet_forward.7} parent=0 // loop_pre_header
    _
  $region3: #{deepconvnet_forward.7} parent=0 // loop_header
    %s10 = sphi 0, %s14
    %p11 = scmp.ge.s32.totalorder %s10, 4
    %s20 = sphi 0, %s22
    %s23 = sphi 0, %s20
    %s24 = sphi 0, %s23
    %s40 = sphi 0, %s24
    %s44 = sphi 0, %s44
    %s46 = sphi 0, %s44
    %s47 = sphi 0, %s46
    %s61 = sphi 0, %s47
    %s65 = sphi 0, %s65
    %s67 = sphi 0, %s65
    %s68 = sphi 0, %s67
    %s82 = sphi 0, %s68
    %s86 = sphi 0, %s86
    %s88 = sphi 0, %s86
    %s89 = sphi 0, %s88
    %s103 = sphi 0, %s89
    %s109 = sphi 0, %s111
    %s112 = sphi 0, %s109
    %s113 = sphi 0, %s112
    %s129 = sphi 0, %s113
  $region4: #{deepconvnet_forward.7} parent=0 // loop_header_branch
    %13 = sbr.rel (%p11) target = $region8
  $region5: #{deepconvnet_forward.7} parent=0 // loop_body
    %s15 = ssub.s32 %s10, 1
    %s16 = ssub.s32 %s10, 2
    %s17 = sadd.s32 %s10, 1
    %s18 = ssub.s32 %s10, %s17
    %p19 = scmp.eq.s32.totalorder %s18, 0
    %s21 = sadd.s32 %s20, 1
    %s22 = scalar_select %p19, %s20, %s21
    %p25 = pneg %p19
    %p26 = scmp.eq.s32.totalorder %s10, 1
    %p27 = por %p25, %p26
    %p28 = scmp.ne.s32.totalorder %s20, %s23
    %p29 = scmp.eq.s32.totalorder %s10, 0
    %p30 = por %p28, %p29
    %p31 = scmp.ne.s32.totalorder %s20, %s23
    %p32 = scmp.eq.s32.totalorder %s15, 1
    %p33 = por %p31, %p32
    %p34 = scmp.ne.s32.totalorder %s23, %s24
    %p35 = scmp.eq.s32.totalorder %s15, 0
    %p36 = por %p34, %p35
    %p37 = scmp.ne.s32.totalorder %s23, %s24
    %p38 = scmp.eq.s32.totalorder %s16, 1
    %p39 = por %p37, %p38
    %p41 = scmp.ne.s32.totalorder %s24, %s40
    %p42 = scmp.eq.s32.totalorder %s16, 0
    %p43 = por %p41, %p42
    %s45 = sadd.s32 %s44, 1
    %p48 = scmp.eq.s32.totalorder %s10, 1
    %p49 = scmp.ne.s32.totalorder %s44, %s46
    %p50 = scmp.eq.s32.totalorder %s10, 0
    %p51 = por %p49, %p50
    %p52 = scmp.ne.s32.totalorder %s44, %s46
    %p53 = scmp.eq.s32.totalorder %s15, 1
    %p54 = por %p52, %p53
    %p55 = scmp.ne.s32.totalorder %s46, %s47
    %p56 = scmp.eq.s32.totalorder %s15, 0
    %p57 = por %p55, %p56
    %p58 = scmp.ne.s32.totalorder %s46, %s47
    %p59 = scmp.eq.s32.totalorder %s16, 1
    %p60 = por %p58, %p59
    %p62 = scmp.ne.s32.totalorder %s47, %s61
    %p63 = scmp.eq.s32.totalorder %s16, 0
    %p64 = por %p62, %p63
    %s66 = sadd.s32 %s65, 1
    %p69 = scmp.eq.s32.totalorder %s10, 1
    %p70 = scmp.ne.s32.totalorder %s65, %s67
    %p71 = scmp.eq.s32.totalorder %s10, 0
    %p72 = por %p70, %p71
    %p73 = scmp.ne.s32.totalorder %s65, %s67
    %p74 = scmp.eq.s32.totalorder %s15, 1
    %p75 = por %p73, %p74
    %p76 = scmp.ne.s32.totalorder %s67, %s68
    %p77 = scmp.eq.s32.totalorder %s15, 0
    %p78 = por %p76, %p77
    %p79 = scmp.ne.s32.totalorder %s67, %s68
    %p80 = scmp.eq.s32.totalorder %s16, 1
    %p81 = por %p79, %p80
    %p83 = scmp.ne.s32.totalorder %s68, %s82
    %p84 = scmp.eq.s32.totalorder %s16, 0
    %p85 = por %p83, %p84
    %s87 = sadd.s32 %s86, 1
    %p90 = scmp.eq.s32.totalorder %s10, 1
    %p91 = scmp.ne.s32.totalorder %s86, %s88
    %p92 = scmp.eq.s32.totalorder %s10, 0
    %p93 = por %p91, %p92
    %p94 = scmp.ne.s32.totalorder %s86, %s88
    %p95 = scmp.eq.s32.totalorder %s15, 1
    %p96 = por %p94, %p95
    %p97 = scmp.ne.s32.totalorder %s88, %s89
    %p98 = scmp.eq.s32.totalorder %s15, 0
    %p99 = por %p97, %p98
    %p100 = scmp.ne.s32.totalorder %s88, %s89
    %p101 = scmp.eq.s32.totalorder %s16, 1
    %p102 = por %p100, %p101
    %p104 = scmp.ne.s32.totalorder %s89, %s103
    %p105 = scmp.eq.s32.totalorder %s16, 0
    %p106 = por %p104, %p105
    %s107 = ssub.s32 %s10, %s17
    %p108 = scmp.eq.s32.totalorder %s107, 0
    %s110 = sadd.s32 %s109, 1
    %s111 = scalar_select %p108, %s109, %s110
    %p114 = pneg %p108
    %p115 = scmp.eq.s32.totalorder %s10, 1
    %p116 = por %p114, %p115
    %p117 = scmp.ne.s32.totalorder %s109, %s112
    %p118 = scmp.eq.s32.totalorder %s10, 0
    %p119 = por %p117, %p118
    %p120 = scmp.ne.s32.totalorder %s109, %s112
    %p121 = scmp.eq.s32.totalorder %s15, 1
    %p122 = por %p120, %p121
    %p123 = scmp.ne.s32.totalorder %s112, %s113
    %p124 = scmp.eq.s32.totalorder %s15, 0
    %p125 = por %p123, %p124
    %p126 = scmp.ne.s32.totalorder %s112, %s113
    %p127 = scmp.eq.s32.totalorder %s16, 1
    %p128 = por %p126, %p127
    %p130 = scmp.ne.s32.totalorder %s113, %s129
    %p131 = scmp.eq.s32.totalorder %s16, 0
    %p132 = por %p130, %p131
    %p133 = scmp.le.s32.totalorder 1, %s10
    %p134 = scmp.lt.s32.totalorder %s10, 3
    %p135 = pnand %p133, %p134
    %p136 = pneg %p135
    // Predicated region
    $region9: #{deepconvnet_forward.7} parent=5 // pred_check
      _
    $region10: #{deepconvnet_forward.7} parent=5 // pred_check_branch
      %138 = sbr.rel (%p135) target = $region12
    $region11: #{deepconvnet_forward.7} parent=5 // pred_region
      %s139 = ssub.s32 %s10, 1
      // Predicated region
      $region13: #{deepconvnet_forward.7} parent=11 // pred_check
        %p140 = pneg %p57
      $region14: #{deepconvnet_forward.7} parent=11 // pred_check_branch
        %142 = sbr.rel (%p140) target = $region16
      $region15: #{deepconvnet_forward.7} parent=11 // pred_region
        _
      $region16: #{deepconvnet_forward.7} parent=11 // pred_fallthru
        _
      // Predicated region
      $region17: #{deepconvnet_forward.7} parent=11 // pred_check
        %p143 = pneg %p78
      $region18: #{deepconvnet_forward.7} parent=11 // pred_check_branch
        %145 = sbr.rel (%p143) target = $region20
      $region19: #{deepconvnet_forward.7} parent=11 // pred_region
        _
      $region20: #{deepconvnet_forward.7} parent=11 // pred_fallthru
        _
      // Predicated region
      $region21: #{deepconvnet_forward.7} parent=11 // pred_check
        %p146 = pneg %p99
      $region22: #{deepconvnet_forward.7} parent=11 // pred_check_branch
        %148 = sbr.rel (%p146) target = $region24
      $region23: #{deepconvnet_forward.7} parent=11 // pred_region
        _
      $region24: #{deepconvnet_forward.7} parent=11 // pred_fallthru
        _
    $region12: #{deepconvnet_forward.7} parent=5 // pred_fallthru
      _
    %p149 = scmp.lt.s32.totalorder %s10, 2
    // Predicated region
    $region25: #{deepconvnet_forward.7} parent=5 // pred_check
      %p150 = pneg %p149
    $region26: #{deepconvnet_forward.7} parent=5 // pred_check_branch
      %152 = sbr.rel (%p150) target = $region28
    $region27: #{deepconvnet_forward.7} parent=5 // pred_region
      // Predicated region
      $region29: #{deepconvnet_forward.7} parent=27 // pred_check
        %p153 = pneg %p30
      $region30: #{deepconvnet_forward.7} parent=27 // pred_check_branch
        %155 = sbr.rel (%p153) target = $region32
      $region31: #{deepconvnet_forward.7} parent=27 // pred_region
        %p156 = scmp.lt.s32.totalorder %s10, 1
        %s157 = scalar_select %p156, %s10, 1
        %s158 = smul.addr %s157, 4
        %s159 = smul.addr %s158, 8
        %s160 = scalar_lea.vmem %s0, %s159
      $region32: #{deepconvnet_forward.7} parent=27 // pred_fallthru
        _
    $region28: #{deepconvnet_forward.7} parent=5 // pred_fallthru
      _
    %p161 = scmp.le.s32.totalorder 1, %s10
    %p162 = scmp.lt.s32.totalorder %s10, 3
    %p163 = pnand %p161, %p162
    %p164 = pneg %p163
    // Predicated region
    $region33: #{deepconvnet_forward.7} parent=5 // pred_check
      _
    $region34: #{deepconvnet_forward.7} parent=5 // pred_check_branch
      %166 = sbr.rel (%p163) target = $region36
    $region35: #{deepconvnet_forward.7} parent=5 // pred_region
      %s167 = ssub.s32 %s10, 1
      %p168 = scmp.lt.s32.totalorder %s15, 1
      %s169 = scalar_select %p168, %s15, 1
      %s170 = smul.addr %s169, 4
      %s171 = smul.addr %s170, 8
      %s172 = scalar_lea.vmem %s0, %s171
      %p173 = pneg %p36
      %p174 = pneg %p33
      %p175 = pneg %p57
      %p176 = pneg %p54
      %p177 = pneg %p78
      %p178 = pneg %p75
      %p179 = pneg %p99
      %p180 = pneg %p96
      %p181 = pneg %p125
      %p182 = pneg %p122
      %p183 = scmp.lt.s32.totalorder %s15, 1
      %s184 = scalar_select %p183, %s15, 1
      %s185 = smul.addr %s184, 8
      %s186 = scalar_lea.vmem %s4, %s185
      %p187 = scmp.lt.s32.totalorder %s15, 1
      %s188 = scalar_select %p187, %s15, 1
      %s189 = smul.addr %s188, 4
      %s190 = smul.addr %s189, 8
      %s191 = scalar_lea.vmem %s0, %s190
      %p192 = scmp.lt.s32.totalorder %s15, 1
      %s193 = scalar_select %p192, %s15, 1
      %s194 = smul.addr %s193, 8
      %s195 = scalar_lea.vmem %s4, %s194
      %v196 = vld [vmem:[%s191] sm:$0xff]
      %v197 = vld [vmem:[%s191 + $0x8] sm:$0xff]
      %v198 = vld [vmem:[%s191 + $0x10] sm:$0xff]
      %v199 = vld [vmem:[%s191 + $0x18] sm:$0xff]
      %v200 = vld [vmem:[%s1] sm:$0xff]
      %vm201 = vcmask 261120
      %v203 = vsel %vm201, %v200, 0
      %205 = vmatpush.msra.mxu0 0.0
      %206 = vmatpush.msra.mxu0 0.0
      %207 = vmatpush.msra.mxu0 0.0
      %208 = vmatpush.msra.mxu0 0.0
      %209 = vmatpush.msra.mxu0 0.0
      %210 = vmatpush.msra.mxu0 0.0
      %211 = vmatpush.msra.mxu0 0.0
      %212 = vmatpush.msra.mxu0 0.0
      %213 = vmatpush.msra.mxu0 0.0
      %214 = vmatpush.msra.mxu0 0.0
      %215 = vmatpush.msra.mxu0 0.0
      %216 = vmatpush.msra.mxu0 0.0
      %217 = vmatpush.msra.mxu0 %v199
      %218 = vmatpush.msra.mxu0 %v198
      %219 = vmatpush.msra.mxu0 %v197
      %220 = vmatpush.msra.mxu0 %v196
      %221 = vmatmul.f32.gmra.mxu0 %v203
      %v222 = vpop.f32.mrf.mxu0
      %v223 = vadd.f32 0.0, %v222
      %224 = vdwg.mxu0
      %v225 = vld [vmem:[%s2] sm:$0xff]
      %227 = vset.pattern.permute.xlu0 0
      %228 = vperm.xlu0 %227, %v225
      %v229 = vpop.permute.xlu0 %228
      %v231 = vmul.f32 %v223, %v229
      %v232 = vld [vmem:[%s3] sm:$0xff]
      %234 = vset.pattern.permute.xlu0 0
      %235 = vperm.xlu0 %234, %v232
      %v236 = vpop.permute.xlu0 %235
      %v238 = vadd.f32 %v231, %v236
      %vm239 = vcmp.gt.f32.partialorder %v238, 0.0
      %v240 = vmin.f32 %v238, 0.0
      %v241 = vmul.f32 %v240, 1.442695
      %v242 = vpow.pop %v241
      %v243 = vsub.f32 %v242, 1.0
      %v244 = vsel %vm239, %v238, %v243
      %246 = vrot.lane.b32.xlu0 %v244, 127
      %v247 = vpop.permute.xlu0 %246
      %v249 = vmax.f32 %v244, %v247
      %v250 = vlaneseq
      %v251 = vshrl.u32 %v250, 7
      %v252 = vadd.s32 %v251, 8
      %v253 = vadd.s32 %v251, 16
      %v254 = vadd.s32 %v251, 24
      %v255 = vadd.s32 %v251, 32
      %v256 = vadd.s32 %v251, 40
      %v257 = vadd.s32 %v251, 48
      %v258 = vadd.s32 %v251, 56
      %v259 = vadd.s32 %v251, 64
      %v260 = vadd.s32 %v251, 72
      %v261 = vadd.s32 %v251, 80
      %v262 = vadd.s32 %v251, 88
      %v263 = vadd.s32 %v251, 96
      %v264 = vadd.s32 %v251, 104
      %v265 = vadd.s32 %v251, 112
      %v266 = vadd.s32 %v251, 120
      %v267 = vlaneseq
      %v268 = vand.u32 %v267, 127
      %v269 = vmul.u32 %v268, 2
      %vm270 = vcmp.eq.s32.totalorder %v251, %v269
      %vm271 = vcmp.eq.s32.totalorder %v252, %v269
      %vm272 = vcmp.eq.s32.totalorder %v253, %v269
      %vm273 = vcmp.eq.s32.totalorder %v254, %v269
      %vm274 = vcmp.eq.s32.totalorder %v255, %v269
      %vm275 = vcmp.eq.s32.totalorder %v256, %v269
      %vm276 = vcmp.eq.s32.totalorder %v257, %v269
      %vm277 = vcmp.eq.s32.totalorder %v258, %v269
      %vm278 = vcmp.eq.s32.totalorder %v259, %v269
      %vm279 = vcmp.eq.s32.totalorder %v260, %v269
      %vm280 = vcmp.eq.s32.totalorder %v261, %v269
      %vm281 = vcmp.eq.s32.totalorder %v262, %v269
      %vm282 = vcmp.eq.s32.totalorder %v263, %v269
      %vm283 = vcmp.eq.s32.totalorder %v264, %v269
      %vm284 = vcmp.eq.s32.totalorder %v265, %v269
      %vm285 = vcmp.eq.s32.totalorder %v266, %v269
      %v286 = vsel %vm270, 1, 0
      %v287 = vsel %vm271, 1, 0
      %v288 = vsel %vm272, 1, 0
      %v289 = vsel %vm273, 1, 0
      %v290 = vsel %vm274, 1, 0
      %v291 = vsel %vm275, 1, 0
      %v292 = vsel %vm276, 1, 0
      %v293 = vsel %vm277, 1, 0
      %v294 = vsel %vm278, 1, 0
      %v295 = vsel %vm279, 1, 0
      %v296 = vsel %vm280, 1, 0
      %v297 = vsel %vm281, 1, 0
      %v298 = vsel %vm282, 1, 0
      %v299 = vsel %vm283, 1, 0
      %v300 = vsel %vm284, 1, 0
      %v301 = vsel %vm285, 1, 0
      %v302 = vcvt.s32.f32 %v286
      %v303 = vcvt.s32.f32 %v287
      %v304 = vcvt.s32.f32 %v288
      %v305 = vcvt.s32.f32 %v289
      %v306 = vcvt.s32.f32 %v290
      %v307 = vcvt.s32.f32 %v291
      %v308 = vcvt.s32.f32 %v292
      %v309 = vcvt.s32.f32 %v293
      %v310 = vcvt.s32.f32 %v294
      %v311 = vcvt.s32.f32 %v295
      %v312 = vcvt.s32.f32 %v296
      %v313 = vcvt.s32.f32 %v297
      %v314 = vcvt.s32.f32 %v298
      %v315 = vcvt.s32.f32 %v299
      %v316 = vcvt.s32.f32 %v300
      %v317 = vcvt.s32.f32 %v301
      %vm318 = vcmask 1006592
      %v320 = vsel %vm318, %v249, 0
      %vm322 = vcmask 1042432
      %v324 = vsel %vm322, %v317, 0
      %326 = vmatpush.msra.mxu0 %v324
      %327 = vmatpush.msra.mxu0 %v316
      %328 = vmatpush.msra.mxu0 %v315
      %329 = vmatpush.msra.mxu0 %v314
      %330 = vmatpush.msra.mxu0 %v313
      %331 = vmatpush.msra.mxu0 %v312
      %332 = vmatpush.msra.mxu0 %v311
      %333 = vmatpush.msra.mxu0 %v310
      %334 = vmatpush.msra.mxu0 %v309
      %335 = vmatpush.msra.mxu0 %v308
      %336 = vmatpush.msra.mxu0 %v307
      %337 = vmatpush.msra.mxu0 %v306
      %338 = vmatpush.msra.mxu0 %v305
      %339 = vmatpush.msra.mxu0 %v304
      %340 = vmatpush.msra.mxu0 %v303
      %341 = vmatpush.msra.mxu0 %v302
      %342 = vmatmul.f32.gmra.mxu0 %v320
      %v343 = vpop.f32.mrf.mxu0
      %v344 = vadd.f32 0.0, %v343
      %345 = vdwg.mxu0
      %vm346 = vcmask 506880
      %347 = vst.msk [vmem:[%s195] sm:$0xff] %vm346, %v344
      %p348 = scmp.lt.s32.totalorder %s15, 1
      %s349 = scalar_select %p348, %s15, 1
      %s350 = smul.addr %s349, 8
      %s351 = scalar_lea.vmem %s4, %s350
      // Predicated region
      $region37: #{deepconvnet_forward.7} parent=35 // pred_check
        %p352 = pneg %p122
      $region38: #{deepconvnet_forward.7} parent=35 // pred_check_branch
        %354 = sbr.rel (%p352) target = $region40
      $region39: #{deepconvnet_forward.7} parent=35 // pred_region
        _
      $region40: #{deepconvnet_forward.7} parent=35 // pred_fallthru
        _
    $region36: #{deepconvnet_forward.7} parent=5 // pred_fallthru
      _
    %p355 = scmp.le.s32.totalorder 2, %s10
    // Predicated region
    $region41: #{deepconvnet_forward.7} parent=5 // pred_check
      %p356 = pneg %p355
    $region42: #{deepconvnet_forward.7} parent=5 // pred_check_branch
      %358 = sbr.rel (%p356) target = $region44
    $region43: #{deepconvnet_forward.7} parent=5 // pred_region
      %s359 = ssub.s32 %s10, 2
      // Predicated region
      $region45: #{deepconvnet_forward.7} parent=43 // pred_check
        %p360 = pneg %p128
      $region46: #{deepconvnet_forward.7} parent=43 // pred_check_branch
        %362 = sbr.rel (%p360) target = $region48
      $region47: #{deepconvnet_forward.7} parent=43 // pred_region
        %p363 = scmp.lt.s32.totalorder %s16, 1
        %s364 = scalar_select %p363, %s16, 1
        %s365 = smul.addr %s364, 8
        %s366 = scalar_lea.vmem %s4, %s365
      $region48: #{deepconvnet_forward.7} parent=43 // pred_fallthru
        _
    $region44: #{deepconvnet_forward.7} parent=5 // pred_fallthru
      _
  $region6: #{deepconvnet_forward.7} parent=0 // loop_footer
    %s14 = sadd.s32 1, %s10
  $region7: #{deepconvnet_forward.7} parent=0 // loop_footer_branch
    %9 = sbr.rel target = $region3
  $region8: #{deepconvnet_forward.7} parent=0 // loop_exit
    _

// kernel: deepconvnet_forward.8
$region0: #{deepconvnet_forward.8}
  #allocation0 [shape = 'u32[]', space=smem, size = 0x4, offset = 0x4, fixed_abs, tag = 'smem constant byte address 0x4 - core index']
  #allocation1 [shape = 'u32[72,128]{1,0:T(1,128)}', space=vmem, size = 0x9000, scoped, tag = 'internal scratch']
  %s0 = inlined_call_operand.vmem [shape: f32[2,8,62], index: 0, kind: input, shape index: {}]
  %s1 = inlined_call_operand.vmem [shape: f32[4,16,8], index: 1, kind: input, shape index: {}]
  %s2 = inlined_call_operand.vmem [shape: f32[16,1], index: 2, kind: input, shape index: {}]
  %s3 = inlined_call_operand.vmem [shape: f32[16,1], index: 3, kind: input, shape index: {}]
  %s4 = inlined_call_operand.vmem [shape: f32[2,16,29], index: 4, kind: output, shape index: {}]
  %s5 = sld [smem:[#allocation0]]
  $region49: #{deepconvnet_forward.8} parent=0
    _
  %s7 = ssub.s32 1, %s5
  %s8 = scalar_select 0, %s7, %s5
  loop: start=0, step=1, limit=4
  $region2: #{deepconvnet_forward.8} parent=0 // loop_pre_header
    _
  $region3: #{deepconvnet_forward.8} parent=0 // loop_header
    %s10 = sphi 0, %s14
    %p11 = scmp.ge.s32.totalorder %s10, 4
    %s20 = sphi 0, %s22
    %s23 = sphi 0, %s20
    %s24 = sphi 0, %s23
    %s40 = sphi 0, %s24
    %s44 = sphi 0, %s44
    %s46 = sphi 0, %s44
    %s47 = sphi 0, %s46
    %s61 = sphi 0, %s47
    %s65 = sphi 0, %s65
    %s67 = sphi 0, %s65
    %s68 = sphi 0, %s67
    %s82 = sphi 0, %s68
    %s86 = sphi 0, %s86
    %s88 = sphi 0, %s86
    %s89 = sphi 0, %s88
    %s103 = sphi 0, %s89
    %s109 = sphi 0, %s111
    %s112 = sphi 0, %s109
    %s113 = sphi 0, %s112
    %s129 = sphi 0, %s113
  $region4: #{deepconvnet_forward.8} parent=0 // loop_header_branch
    %13 = sbr.rel (%p11) target = $region8
  $region5: #{deepconvnet_forward.8} parent=0 // loop_body
    %s15 = ssub.s32 %s10, 1
    %s16 = ssub.s32 %s10, 2
    %s17 = sadd.s32 %s10, 1
    %s18 = ssub.s32 %s10, %s17
    %p19 = scmp.eq.s32.totalorder %s18, 0
    %s21 = sadd.s32 %s20, 1
    %s22 = scalar_select %p19, %s20, %s21
    %p25 = pneg %p19
    %p26 = scmp.eq.s32.totalorder %s10, 1
    %p27 = por %p25, %p26
    %p28 = scmp.ne.s32.totalorder %s20, %s23
    %p29 = scmp.eq.s32.totalorder %s10, 0
    %p30 = por %p28, %p29
    %p31 = scmp.ne.s32.totalorder %s20, %s23
    %p32 = scmp.eq.s32.totalorder %s15, 1
    %p33 = por %p31, %p32
    %p34 = scmp.ne.s32.totalorder %s23, %s24
    %p35 = scmp.eq.s32.totalorder %s15, 0
    %p36 = por %p34, %p35
    %p37 = scmp.ne.s32.totalorder %s23, %s24
    %p38 = scmp.eq.s32.totalorder %s16, 1
    %p39 = por %p37, %p38
    %p41 = scmp.ne.s32.totalorder %s24, %s40
    %p42 = scmp.eq.s32.totalorder %s16, 0
    %p43 = por %p41, %p42
    %s45 = sadd.s32 %s44, 1
    %p48 = scmp.eq.s32.totalorder %s10, 1
    %p49 = scmp.ne.s32.totalorder %s44, %s46
    %p50 = scmp.eq.s32.totalorder %s10, 0
    %p51 = por %p49, %p50
    %p52 = scmp.ne.s32.totalorder %s44, %s46
    %p53 = scmp.eq.s32.totalorder %s15, 1
    %p54 = por %p52, %p53
    %p55 = scmp.ne.s32.totalorder %s46, %s47
    %p56 = scmp.eq.s32.totalorder %s15, 0
    %p57 = por %p55, %p56
    %p58 = scmp.ne.s32.totalorder %s46, %s47
    %p59 = scmp.eq.s32.totalorder %s16, 1
    %p60 = por %p58, %p59
    %p62 = scmp.ne.s32.totalorder %s47, %s61
    %p63 = scmp.eq.s32.totalorder %s16, 0
    %p64 = por %p62, %p63
    %s66 = sadd.s32 %s65, 1
    %p69 = scmp.eq.s32.totalorder %s10, 1
    %p70 = scmp.ne.s32.totalorder %s65, %s67
    %p71 = scmp.eq.s32.totalorder %s10, 0
    %p72 = por %p70, %p71
    %p73 = scmp.ne.s32.totalorder %s65, %s67
    %p74 = scmp.eq.s32.totalorder %s15, 1
    %p75 = por %p73, %p74
    %p76 = scmp.ne.s32.totalorder %s67, %s68
    %p77 = scmp.eq.s32.totalorder %s15, 0
    %p78 = por %p76, %p77
    %p79 = scmp.ne.s32.totalorder %s67, %s68
    %p80 = scmp.eq.s32.totalorder %s16, 1
    %p81 = por %p79, %p80
    %p83 = scmp.ne.s32.totalorder %s68, %s82
    %p84 = scmp.eq.s32.totalorder %s16, 0
    %p85 = por %p83, %p84
    %s87 = sadd.s32 %s86, 1
    %p90 = scmp.eq.s32.totalorder %s10, 1
    %p91 = scmp.ne.s32.totalorder %s86, %s88
    %p92 = scmp.eq.s32.totalorder %s10, 0
    %p93 = por %p91, %p92
    %p94 = scmp.ne.s32.totalorder %s86, %s88
    %p95 = scmp.eq.s32.totalorder %s15, 1
    %p96 = por %p94, %p95
    %p97 = scmp.ne.s32.totalorder %s88, %s89
    %p98 = scmp.eq.s32.totalorder %s15, 0
    %p99 = por %p97, %p98
    %p100 = scmp.ne.s32.totalorder %s88, %s89
    %p101 = scmp.eq.s32.totalorder %s16, 1
    %p102 = por %p100, %p101
    %p104 = scmp.ne.s32.totalorder %s89, %s103
    %p105 = scmp.eq.s32.totalorder %s16, 0
    %p106 = por %p104, %p105
    %s107 = ssub.s32 %s10, %s17
    %p108 = scmp.eq.s32.totalorder %s107, 0
    %s110 = sadd.s32 %s109, 1
    %s111 = scalar_select %p108, %s109, %s110
    %p114 = pneg %p108
    %p115 = scmp.eq.s32.totalorder %s10, 1
    %p116 = por %p114, %p115
    %p117 = scmp.ne.s32.totalorder %s109, %s112
    %p118 = scmp.eq.s32.totalorder %s10, 0
    %p119 = por %p117, %p118
    %p120 = scmp.ne.s32.totalorder %s109, %s112
    %p121 = scmp.eq.s32.totalorder %s15, 1
    %p122 = por %p120, %p121
    %p123 = scmp.ne.s32.totalorder %s112, %s113
    %p124 = scmp.eq.s32.totalorder %s15, 0
    %p125 = por %p123, %p124
    %p126 = scmp.ne.s32.totalorder %s112, %s113
    %p127 = scmp.eq.s32.totalorder %s16, 1
    %p128 = por %p126, %p127
    %p130 = scmp.ne.s32.totalorder %s113, %s129
    %p131 = scmp.eq.s32.totalorder %s16, 0
    %p132 = por %p130, %p131
    %p133 = scmp.le.s32.totalorder 1, %s10
    %p134 = scmp.lt.s32.totalorder %s10, 3
    %p135 = pnand %p133, %p134
    %p136 = pneg %p135
    // Predicated region
    $region9: #{deepconvnet_forward.8} parent=5 // pred_check
      _
    $region10: #{deepconvnet_forward.8} parent=5 // pred_check_branch
      %138 = sbr.rel (%p135) target = $region12
    $region11: #{deepconvnet_forward.8} parent=5 // pred_region
      %s139 = ssub.s32 %s10, 1
      // Predicated region
      $region13: #{deepconvnet_forward.8} parent=11 // pred_check
        %p140 = pneg %p57
      $region14: #{deepconvnet_forward.8} parent=11 // pred_check_branch
        %142 = sbr.rel (%p140) target = $region16
      $region15: #{deepconvnet_forward.8} parent=11 // pred_region
        _
      $region16: #{deepconvnet_forward.8} parent=11 // pred_fallthru
        _
      // Predicated region
      $region17: #{deepconvnet_forward.8} parent=11 // pred_check
        %p143 = pneg %p78
      $region18: #{deepconvnet_forward.8} parent=11 // pred_check_branch
        %145 = sbr.rel (%p143) target = $region20
      $region19: #{deepconvnet_forward.8} parent=11 // pred_region
        _
      $region20: #{deepconvnet_forward.8} parent=11 // pred_fallthru
        _
      // Predicated region
      $region21: #{deepconvnet_forward.8} parent=11 // pred_check
        %p146 = pneg %p99
      $region22: #{deepconvnet_forward.8} parent=11 // pred_check_branch
        %148 = sbr.rel (%p146) target = $region24
      $region23: #{deepconvnet_forward.8} parent=11 // pred_region
        _
      $region24: #{deepconvnet_forward.8} parent=11 // pred_fallthru
        _
    $region12: #{deepconvnet_forward.8} parent=5 // pred_fallthru
      _
    %p149 = scmp.lt.s32.totalorder %s10, 2
    // Predicated region
    $region25: #{deepconvnet_forward.8} parent=5 // pred_check
      %p150 = pneg %p149
    $region26: #{deepconvnet_forward.8} parent=5 // pred_check_branch
      %152 = sbr.rel (%p150) target = $region28
    $region27: #{deepconvnet_forward.8} parent=5 // pred_region
      // Predicated region
      $region29: #{deepconvnet_forward.8} parent=27 // pred_check
        %p153 = pneg %p30
      $region30: #{deepconvnet_forward.8} parent=27 // pred_check_branch
        %155 = sbr.rel (%p153) target = $region32
      $region31: #{deepconvnet_forward.8} parent=27 // pred_region
        %p156 = scmp.lt.s32.totalorder %s10, 1
        %s157 = scalar_select %p156, %s10, 1
        %s158 = smul.addr %s157, 8
        %s159 = scalar_lea.vmem %s0, %s158
      $region32: #{deepconvnet_forward.8} parent=27 // pred_fallthru
        _
    $region28: #{deepconvnet_forward.8} parent=5 // pred_fallthru
      _
    %p160 = scmp.le.s32.totalorder 1, %s10
    %p161 = scmp.lt.s32.totalorder %s10, 3
    %p162 = pnand %p160, %p161
    %p163 = pneg %p162
    // Predicated region
    $region33: #{deepconvnet_forward.8} parent=5 // pred_check
      _
    $region34: #{deepconvnet_forward.8} parent=5 // pred_check_branch
      %165 = sbr.rel (%p162) target = $region36
    $region35: #{deepconvnet_forward.8} parent=5 // pred_region
      %s166 = ssub.s32 %s10, 1
      %p167 = scmp.lt.s32.totalorder %s15, 1
      %s168 = scalar_select %p167, %s15, 1
      %s169 = smul.addr %s168, 8
      %s170 = scalar_lea.vmem %s0, %s169
      %p171 = pneg %p36
      %p172 = pneg %p33
      %p173 = pneg %p57
      %p174 = pneg %p54
      %p175 = pneg %p78
      %p176 = pneg %p75
      %p177 = pneg %p99
      %p178 = pneg %p96
      %p179 = pneg %p125
      %p180 = pneg %p122
      %p181 = scmp.lt.s32.totalorder %s15, 1
      %s182 = scalar_select %p181, %s15, 1
      %s183 = smul.addr %s182, 2
      %s184 = smul.addr %s183, 8
      %s185 = scalar_lea.vmem %s4, %s184
      %p186 = scmp.lt.s32.totalorder %s15, 1
      %s187 = scalar_select %p186, %s15, 1
      %s188 = smul.addr %s187, 8
      %s189 = scalar_lea.vmem %s0, %s188
      %p190 = scmp.lt.s32.totalorder %s15, 1
      %s191 = scalar_select %p190, %s15, 1
      %s192 = smul.addr %s191, 2
      %s193 = smul.addr %s192, 8
      %s194 = scalar_lea.vmem %s4, %s193
      %v195 = vld [vmem:[%s189] sm:$0xff]
      %v196 = vld [vmem:[%s1] sm:$0xff]
      %v197 = vld [vmem:[%s1 + $0x8] sm:$0xff]
      %s198 = scalar_lea.vmem %s1, 16
      %v199 = vld [vmem:[%s198] sm:$0xff]
      %v200 = vld [vmem:[%s198 + $0x8] sm:$0xff]
      %202 = vrot.lane.b32.xlu0 %v195, 127
      %v203 = vpop.permute.xlu0 %202
      %vm205 = vcmask 64512
      %v207 = vsel %vm205, %v199, 0
      %v210 = vsel %vm205, %v200, 0
      %212 = vmatpush.msra.mxu0 0.0
      %213 = vmatpush.msra.mxu0 0.0
      %214 = vmatpush.msra.mxu0 0.0
      %215 = vmatpush.msra.mxu0 0.0
      %216 = vmatpush.msra.mxu0 0.0
      %217 = vmatpush.msra.mxu0 0.0
      %218 = vmatpush.msra.mxu0 0.0
      %219 = vmatpush.msra.mxu0 0.0
      %220 = vmatpush.msra.mxu0 0.0
      %221 = vmatpush.msra.mxu0 0.0
      %222 = vmatpush.msra.mxu0 0.0
      %223 = vmatpush.msra.mxu0 0.0
      %224 = vmatpush.msra.mxu0 0.0
      %225 = vmatpush.msra.mxu0 0.0
      %226 = vmatpush.msra.mxu0 0.0
      %227 = vmatpush.msra.mxu0 %v203
      %228 = vmatmul.f32.gmra.mxu0 %v207
      %v229 = vpop.f32.mrf.mxu0
      %v230 = vadd.f32 0.0, %v229
      %231 = vmatmul.f32.gmra.mxu0 %v210
      %v232 = vpop.f32.mrf.mxu0
      %v233 = vadd.f32 0.0, %v232
      %234 = vdwg.mxu0
      %v236 = vsel %vm205, %v196, 0
      %v239 = vsel %vm205, %v197, 0
      %241 = vmatpush.msra.mxu0 0.0
      %242 = vmatpush.msra.mxu0 0.0
      %243 = vmatpush.msra.mxu0 0.0
      %244 = vmatpush.msra.mxu0 0.0
      %245 = vmatpush.msra.mxu0 0.0
      %246 = vmatpush.msra.mxu0 0.0
      %247 = vmatpush.msra.mxu0 0.0
      %248 = vmatpush.msra.mxu0 0.0
      %249 = vmatpush.msra.mxu0 0.0
      %250 = vmatpush.msra.mxu0 0.0
      %251 = vmatpush.msra.mxu0 0.0
      %252 = vmatpush.msra.mxu0 0.0
      %253 = vmatpush.msra.mxu0 0.0
      %254 = vmatpush.msra.mxu0 0.0
      %255 = vmatpush.msra.mxu0 0.0
      %256 = vmatpush.msra.mxu0 %v195
      %257 = vmatmul.f32.gmra.mxu0 %v236
      %v258 = vpop.f32.mrf.mxu0
      %v259 = vadd.f32 %v230, %v258
      %260 = vmatmul.f32.gmra.mxu0 %v239
      %v261 = vpop.f32.mrf.mxu0
      %v262 = vadd.f32 %v233, %v261
      %263 = vdwg.mxu0
      %s264 = scalar_lea.vmem %s1, 32
      %v265 = vld [vmem:[%s264] sm:$0xff]
      %v266 = vld [vmem:[%s264 + $0x8] sm:$0xff]
      %267 = vrot.lane.b32.xlu0 %v195, 126
      %v268 = vpop.permute.xlu0 %267
      %v271 = vsel %vm205, %v265, 0
      %v274 = vsel %vm205, %v266, 0
      %276 = vmatpush.msra.mxu0 0.0
      %277 = vmatpush.msra.mxu0 0.0
      %278 = vmatpush.msra.mxu0 0.0
      %279 = vmatpush.msra.mxu0 0.0
      %280 = vmatpush.msra.mxu0 0.0
      %281 = vmatpush.msra.mxu0 0.0
      %282 = vmatpush.msra.mxu0 0.0
      %283 = vmatpush.msra.mxu0 0.0
      %284 = vmatpush.msra.mxu0 0.0
      %285 = vmatpush.msra.mxu0 0.0
      %286 = vmatpush.msra.mxu0 0.0
      %287 = vmatpush.msra.mxu0 0.0
      %288 = vmatpush.msra.mxu0 0.0
      %289 = vmatpush.msra.mxu0 0.0
      %290 = vmatpush.msra.mxu0 0.0
      %291 = vmatpush.msra.mxu0 %v268
      %292 = vmatmul.f32.gmra.mxu0 %v271
      %v293 = vpop.f32.mrf.mxu0
      %v294 = vadd.f32 0.0, %v293
      %295 = vmatmul.f32.gmra.mxu0 %v274
      %v296 = vpop.f32.mrf.mxu0
      %v297 = vadd.f32 0.0, %v296
      %298 = vdwg.mxu0
      %v299 = vadd.f32 %v259, %v294
      %v300 = vadd.f32 %v262, %v297
      %s301 = scalar_lea.vmem %s1, 48
      %v302 = vld [vmem:[%s301] sm:$0xff]
      %v303 = vld [vmem:[%s301 + $0x8] sm:$0xff]
      %304 = vrot.lane.b32.xlu0 %v195, 125
      %v305 = vpop.permute.xlu0 %304
      %v308 = vsel %vm205, %v302, 0
      %v311 = vsel %vm205, %v303, 0
      %313 = vmatpush.msra.mxu0 0.0
      %314 = vmatpush.msra.mxu0 0.0
      %315 = vmatpush.msra.mxu0 0.0
      %316 = vmatpush.msra.mxu0 0.0
      %317 = vmatpush.msra.mxu0 0.0
      %318 = vmatpush.msra.mxu0 0.0
      %319 = vmatpush.msra.mxu0 0.0
      %320 = vmatpush.msra.mxu0 0.0
      %321 = vmatpush.msra.mxu0 0.0
      %322 = vmatpush.msra.mxu0 0.0
      %323 = vmatpush.msra.mxu0 0.0
      %324 = vmatpush.msra.mxu0 0.0
      %325 = vmatpush.msra.mxu0 0.0
      %326 = vmatpush.msra.mxu0 0.0
      %327 = vmatpush.msra.mxu0 0.0
      %328 = vmatpush.msra.mxu0 %v305
      %329 = vmatmul.f32.gmra.mxu0 %v308
      %v330 = vpop.f32.mrf.mxu0
      %v331 = vadd.f32 0.0, %v330
      %332 = vmatmul.f32.gmra.mxu0 %v311
      %v333 = vpop.f32.mrf.mxu0
      %v334 = vadd.f32 0.0, %v333
      %335 = vdwg.mxu0
      %v336 = vadd.f32 %v299, %v331
      %v337 = vadd.f32 %v300, %v334
      %v338 = vld [vmem:[%s2] sm:$0xff]
      %v339 = vld [vmem:[%s2 + $0x8] sm:$0xff]
      %341 = vset.pattern.permute.xlu0 0
      %342 = vperm.xlu0 %341, %v338
      %v343 = vpop.permute.xlu0 %342
      %346 = vset.pattern.permute.xlu0 0
      %347 = vperm.xlu0 %346, %v339
      %v348 = vpop.permute.xlu0 %347
      %v350 = vmul.f32 %v336, %v343
      %v351 = vmul.f32 %v337, %v348
      %v352 = vld [vmem:[%s3] sm:$0xff]
      %v353 = vld [vmem:[%s3 + $0x8] sm:$0xff]
      %355 = vset.pattern.permute.xlu0 0
      %356 = vperm.xlu0 %355, %v352
      %v357 = vpop.permute.xlu0 %356
      %360 = vset.pattern.permute.xlu0 0
      %361 = vperm.xlu0 %360, %v353
      %v362 = vpop.permute.xlu0 %361
      %v364 = vadd.f32 %v350, %v357
      %v365 = vadd.f32 %v351, %v362
      %vm366 = vcmp.gt.f32.partialorder %v364, 0.0
      %vm367 = vcmp.gt.f32.partialorder %v365, 0.0
      %v368 = vmin.f32 %v364, 0.0
      %v369 = vmin.f32 %v365, 0.0
      %v370 = vmul.f32 %v368, 1.442695
      %v371 = vpow.pop %v370
      %v372 = vmul.f32 %v369, 1.442695
      %v373 = vpow.pop %v372
      %v374 = vsub.f32 %v371, 1.0
      %v375 = vsub.f32 %v373, 1.0
      %v376 = vsel %vm366, %v364, %v374
      %v377 = vsel %vm367, %v365, %v375
      %380 = vrot.lane.b32.xlu0 %v376, 127
      %v381 = vpop.permute.xlu0 %380
      %382 = vrot.lane.b32.xlu0 %v377, 127
      %v383 = vpop.permute.xlu0 %382
      %v386 = vmax.f32 %v376, %v381
      %v387 = vmax.f32 %v377, %v383
      %v388 = vlaneseq
      %v389 = vshrl.u32 %v388, 7
      %v390 = vadd.s32 %v389, 8
      %v391 = vadd.s32 %v389, 16
      %v392 = vadd.s32 %v389, 24
      %v393 = vadd.s32 %v389, 32
      %v394 = vadd.s32 %v389, 40
      %v395 = vadd.s32 %v389, 48
      %v396 = vadd.s32 %v389, 56
      %v397 = vlaneseq
      %v398 = vand.u32 %v397, 127
      %v399 = vmul.u32 %v398, 2
      %vm400 = vcmp.eq.s32.totalorder %v389, %v399
      %vm401 = vcmp.eq.s32.totalorder %v390, %v399
      %vm402 = vcmp.eq.s32.totalorder %v391, %v399
      %vm403 = vcmp.eq.s32.totalorder %v392, %v399
      %vm404 = vcmp.eq.s32.totalorder %v393, %v399
      %vm405 = vcmp.eq.s32.totalorder %v394, %v399
      %vm406 = vcmp.eq.s32.totalorder %v395, %v399
      %vm407 = vcmp.eq.s32.totalorder %v396, %v399
      %v408 = vsel %vm400, 1, 0
      %v409 = vsel %vm401, 1, 0
      %v410 = vsel %vm402, 1, 0
      %v411 = vsel %vm403, 1, 0
      %v412 = vsel %vm404, 1, 0
      %v413 = vsel %vm405, 1, 0
      %v414 = vsel %vm406, 1, 0
      %v415 = vsel %vm407, 1, 0
      %v416 = vcvt.s32.f32 %v408
      %v417 = vcvt.s32.f32 %v409
      %v418 = vcvt.s32.f32 %v410
      %v419 = vcvt.s32.f32 %v411
      %v420 = vcvt.s32.f32 %v412
      %v421 = vcvt.s32.f32 %v413
      %v422 = vcvt.s32.f32 %v414
      %v423 = vcvt.s32.f32 %v415
      %vm424 = vcmask 465920
      %v426 = vsel %vm424, %v386, 0
      %v429 = vsel %vm424, %v387, 0
      %vm431 = vcmask 1040384
      %v433 = vsel %vm431, %v423, 0
      %435 = vmatpush.msra.mxu0 0.0
      %436 = vmatpush.msra.mxu0 0.0
      %437 = vmatpush.msra.mxu0 0.0
      %438 = vmatpush.msra.mxu0 0.0
      %439 = vmatpush.msra.mxu0 0.0
      %440 = vmatpush.msra.mxu0 0.0
      %441 = vmatpush.msra.mxu0 0.0
      %442 = vmatpush.msra.mxu0 0.0
      %443 = vmatpush.msra.mxu0 %v433
      %444 = vmatpush.msra.mxu0 %v422
      %445 = vmatpush.msra.mxu0 %v421
      %446 = vmatpush.msra.mxu0 %v420
      %447 = vmatpush.msra.mxu0 %v419
      %448 = vmatpush.msra.mxu0 %v418
      %449 = vmatpush.msra.mxu0 %v417
      %450 = vmatpush.msra.mxu0 %v416
      %451 = vmatmul.f32.gmra.mxu0 %v426
      %v452 = vpop.f32.mrf.mxu0
      %v453 = vadd.f32 0.0, %v452
      %454 = vmatmul.f32.gmra.mxu0 %v429
      %v455 = vpop.f32.mrf.mxu0
      %v456 = vadd.f32 0.0, %v455
      %457 = vdwg.mxu0
      %vm458 = vcmask 236544
      %459 = vst.msk [vmem:[%s194] sm:$0xff] %vm458, %v453
      %460 = vst.msk [vmem:[%s194 + $0x8] sm:$0xff] %vm458, %v456
      %p461 = scmp.lt.s32.totalorder %s15, 1
      %s462 = scalar_select %p461, %s15, 1
      %s463 = smul.addr %s462, 2
      %s464 = smul.addr %s463, 8
      %s465 = scalar_lea.vmem %s4, %s464
      // Predicated region
      $region37: #{deepconvnet_forward.8} parent=35 // pred_check
        %p466 = pneg %p122
      $region38: #{deepconvnet_forward.8} parent=35 // pred_check_branch
        %468 = sbr.rel (%p466) target = $region40
      $region39: #{deepconvnet_forward.8} parent=35 // pred_region
        _
      $region40: #{deepconvnet_forward.8} parent=35 // pred_fallthru
        _
    $region36: #{deepconvnet_forward.8} parent=5 // pred_fallthru
      _
    %p469 = scmp.le.s32.totalorder 2, %s10
    // Predicated region
    $region41: #{deepconvnet_forward.8} parent=5 // pred_check
      %p470 = pneg %p469
    $region42: #{deepconvnet_forward.8} parent=5 // pred_check_branch
      %472 = sbr.rel (%p470) target = $region44
    $region43: #{deepconvnet_forward.8} parent=5 // pred_region
      %s473 = ssub.s32 %s10, 2
      // Predicated region
      $region45: #{deepconvnet_forward.8} parent=43 // pred_check
        %p474 = pneg %p128
      $region46: #{deepconvnet_forward.8} parent=43 // pred_check_branch
        %476 = sbr.rel (%p474) target = $region48
      $region47: #{deepconvnet_forward.8} parent=43 // pred_region
        %p477 = scmp.lt.s32.totalorder %s16, 1
        %s478 = scalar_select %p477, %s16, 1
        %s479 = smul.addr %s478, 2
        %s480 = smul.addr %s479, 8
        %s481 = scalar_lea.vmem %s4, %s480
      $region48: #{deepconvnet_forward.8} parent=43 // pred_fallthru
        _
    $region44: #{deepconvnet_forward.8} parent=5 // pred_fallthru
      _
  $region6: #{deepconvnet_forward.8} parent=0 // loop_footer
    %s14 = sadd.s32 1, %s10
  $region7: #{deepconvnet_forward.8} parent=0 // loop_footer_branch
    %9 = sbr.rel target = $region3
  $region8: #{deepconvnet_forward.8} parent=0 // loop_exit
    _

// kernel: deepconvnet_forward.9
$region0: #{deepconvnet_forward.9}
  #allocation0 [shape = 'u32[]', space=smem, size = 0x4, offset = 0x4, fixed_abs, tag = 'smem constant byte address 0x4 - core index']
  #allocation1 [shape = 'u32[72,128]{1,0:T(1,128)}', space=vmem, size = 0x9000, scoped, tag = 'internal scratch']
  %s0 = inlined_call_operand.vmem [shape: f32[2,16,29], index: 0, kind: input, shape index: {}]
  %s1 = inlined_call_operand.vmem [shape: f32[4,32,16], index: 1, kind: input, shape index: {}]
  %s2 = inlined_call_operand.vmem [shape: f32[32,1], index: 2, kind: input, shape index: {}]
  %s3 = inlined_call_operand.vmem [shape: f32[32,1], index: 3, kind: input, shape index: {}]
  %s4 = inlined_call_operand.vmem [shape: f32[2,32,13], index: 4, kind: output, shape index: {}]
  %s5 = sld [smem:[#allocation0]]
  $region49: #{deepconvnet_forward.9} parent=0
    _
  %s7 = ssub.s32 1, %s5
  %s8 = scalar_select 0, %s7, %s5
  loop: start=0, step=1, limit=4
  $region2: #{deepconvnet_forward.9} parent=0 // loop_pre_header
    _
  $region3: #{deepconvnet_forward.9} parent=0 // loop_header
    %s10 = sphi 0, %s14
    %p11 = scmp.ge.s32.totalorder %s10, 4
    %s20 = sphi 0, %s22
    %s23 = sphi 0, %s20
    %s24 = sphi 0, %s23
    %s40 = sphi 0, %s24
    %s44 = sphi 0, %s44
    %s46 = sphi 0, %s44
    %s47 = sphi 0, %s46
    %s61 = sphi 0, %s47
    %s65 = sphi 0, %s65
    %s67 = sphi 0, %s65
    %s68 = sphi 0, %s67
    %s82 = sphi 0, %s68
    %s86 = sphi 0, %s86
    %s88 = sphi 0, %s86
    %s89 = sphi 0, %s88
    %s103 = sphi 0, %s89
    %s109 = sphi 0, %s111
    %s112 = sphi 0, %s109
    %s113 = sphi 0, %s112
    %s129 = sphi 0, %s113
  $region4: #{deepconvnet_forward.9} parent=0 // loop_header_branch
    %13 = sbr.rel (%p11) target = $region8
  $region5: #{deepconvnet_forward.9} parent=0 // loop_body
    %s15 = ssub.s32 %s10, 1
    %s16 = ssub.s32 %s10, 2
    %s17 = sadd.s32 %s10, 1
    %s18 = ssub.s32 %s10, %s17
    %p19 = scmp.eq.s32.totalorder %s18, 0
    %s21 = sadd.s32 %s20, 1
    %s22 = scalar_select %p19, %s20, %s21
    %p25 = pneg %p19
    %p26 = scmp.eq.s32.totalorder %s10, 1
    %p27 = por %p25, %p26
    %p28 = scmp.ne.s32.totalorder %s20, %s23
    %p29 = scmp.eq.s32.totalorder %s10, 0
    %p30 = por %p28, %p29
    %p31 = scmp.ne.s32.totalorder %s20, %s23
    %p32 = scmp.eq.s32.totalorder %s15, 1
    %p33 = por %p31, %p32
    %p34 = scmp.ne.s32.totalorder %s23, %s24
    %p35 = scmp.eq.s32.totalorder %s15, 0
    %p36 = por %p34, %p35
    %p37 = scmp.ne.s32.totalorder %s23, %s24
    %p38 = scmp.eq.s32.totalorder %s16, 1
    %p39 = por %p37, %p38
    %p41 = scmp.ne.s32.totalorder %s24, %s40
    %p42 = scmp.eq.s32.totalorder %s16, 0
    %p43 = por %p41, %p42
    %s45 = sadd.s32 %s44, 1
    %p48 = scmp.eq.s32.totalorder %s10, 1
    %p49 = scmp.ne.s32.totalorder %s44, %s46
    %p50 = scmp.eq.s32.totalorder %s10, 0
    %p51 = por %p49, %p50
    %p52 = scmp.ne.s32.totalorder %s44, %s46
    %p53 = scmp.eq.s32.totalorder %s15, 1
    %p54 = por %p52, %p53
    %p55 = scmp.ne.s32.totalorder %s46, %s47
    %p56 = scmp.eq.s32.totalorder %s15, 0
    %p57 = por %p55, %p56
    %p58 = scmp.ne.s32.totalorder %s46, %s47
    %p59 = scmp.eq.s32.totalorder %s16, 1
    %p60 = por %p58, %p59
    %p62 = scmp.ne.s32.totalorder %s47, %s61
    %p63 = scmp.eq.s32.totalorder %s16, 0
    %p64 = por %p62, %p63
    %s66 = sadd.s32 %s65, 1
    %p69 = scmp.eq.s32.totalorder %s10, 1
    %p70 = scmp.ne.s32.totalorder %s65, %s67
    %p71 = scmp.eq.s32.totalorder %s10, 0
    %p72 = por %p70, %p71
    %p73 = scmp.ne.s32.totalorder %s65, %s67
    %p74 = scmp.eq.s32.totalorder %s15, 1
    %p75 = por %p73, %p74
    %p76 = scmp.ne.s32.totalorder %s67, %s68
    %p77 = scmp.eq.s32.totalorder %s15, 0
    %p78 = por %p76, %p77
    %p79 = scmp.ne.s32.totalorder %s67, %s68
    %p80 = scmp.eq.s32.totalorder %s16, 1
    %p81 = por %p79, %p80
    %p83 = scmp.ne.s32.totalorder %s68, %s82
    %p84 = scmp.eq.s32.totalorder %s16, 0
    %p85 = por %p83, %p84
    %s87 = sadd.s32 %s86, 1
    %p90 = scmp.eq.s32.totalorder %s10, 1
    %p91 = scmp.ne.s32.totalorder %s86, %s88
    %p92 = scmp.eq.s32.totalorder %s10, 0
    %p93 = por %p91, %p92
    %p94 = scmp.ne.s32.totalorder %s86, %s88
    %p95 = scmp.eq.s32.totalorder %s15, 1
    %p96 = por %p94, %p95
    %p97 = scmp.ne.s32.totalorder %s88, %s89
    %p98 = scmp.eq.s32.totalorder %s15, 0
    %p99 = por %p97, %p98
    %p100 = scmp.ne.s32.totalorder %s88, %s89
    %p101 = scmp.eq.s32.totalorder %s16, 1
    %p102 = por %p100, %p101
    %p104 = scmp.ne.s32.totalorder %s89, %s103
    %p105 = scmp.eq.s32.totalorder %s16, 0
    %p106 = por %p104, %p105
    %s107 = ssub.s32 %s10, %s17
    %p108 = scmp.eq.s32.totalorder %s107, 0
    %s110 = sadd.s32 %s109, 1
    %s111 = scalar_select %p108, %s109, %s110
    %p114 = pneg %p108
    %p115 = scmp.eq.s32.totalorder %s10, 1
    %p116 = por %p114, %p115
    %p117 = scmp.ne.s32.totalorder %s109, %s112
    %p118 = scmp.eq.s32.totalorder %s10, 0
    %p119 = por %p117, %p118
    %p120 = scmp.ne.s32.totalorder %s109, %s112
    %p121 = scmp.eq.s32.totalorder %s15, 1
    %p122 = por %p120, %p121
    %p123 = scmp.ne.s32.totalorder %s112, %s113
    %p124 = scmp.eq.s32.totalorder %s15, 0
    %p125 = por %p123, %p124
    %p126 = scmp.ne.s32.totalorder %s112, %s113
    %p127 = scmp.eq.s32.totalorder %s16, 1
    %p128 = por %p126, %p127
    %p130 = scmp.ne.s32.totalorder %s113, %s129
    %p131 = scmp.eq.s32.totalorder %s16, 0
    %p132 = por %p130, %p131
    %p133 = scmp.le.s32.totalorder 1, %s10
    %p134 = scmp.lt.s32.totalorder %s10, 3
    %p135 = pnand %p133, %p134
    %p136 = pneg %p135
    // Predicated region
    $region9: #{deepconvnet_forward.9} parent=5 // pred_check
      _
    $region10: #{deepconvnet_forward.9} parent=5 // pred_check_branch
      %138 = sbr.rel (%p135) target = $region12
    $region11: #{deepconvnet_forward.9} parent=5 // pred_region
      %s139 = ssub.s32 %s10, 1
      // Predicated region
      $region13: #{deepconvnet_forward.9} parent=11 // pred_check
        %p140 = pneg %p57
      $region14: #{deepconvnet_forward.9} parent=11 // pred_check_branch
        %142 = sbr.rel (%p140) target = $region16
      $region15: #{deepconvnet_forward.9} parent=11 // pred_region
        _
      $region16: #{deepconvnet_forward.9} parent=11 // pred_fallthru
        _
      // Predicated region
      $region17: #{deepconvnet_forward.9} parent=11 // pred_check
        %p143 = pneg %p78
      $region18: #{deepconvnet_forward.9} parent=11 // pred_check_branch
        %145 = sbr.rel (%p143) target = $region20
      $region19: #{deepconvnet_forward.9} parent=11 // pred_region
        _
      $region20: #{deepconvnet_forward.9} parent=11 // pred_fallthru
        _
      // Predicated region
      $region21: #{deepconvnet_forward.9} parent=11 // pred_check
        %p146 = pneg %p99
      $region22: #{deepconvnet_forward.9} parent=11 // pred_check_branch
        %148 = sbr.rel (%p146) target = $region24
      $region23: #{deepconvnet_forward.9} parent=11 // pred_region
        _
      $region24: #{deepconvnet_forward.9} parent=11 // pred_fallthru
        _
    $region12: #{deepconvnet_forward.9} parent=5 // pred_fallthru
      _
    %p149 = scmp.lt.s32.totalorder %s10, 2
    // Predicated region
    $region25: #{deepconvnet_forward.9} parent=5 // pred_check
      %p150 = pneg %p149
    $region26: #{deepconvnet_forward.9} parent=5 // pred_check_branch
      %152 = sbr.rel (%p150) target = $region28
    $region27: #{deepconvnet_forward.9} parent=5 // pred_region
      // Predicated region
      $region29: #{deepconvnet_forward.9} parent=27 // pred_check
        %p153 = pneg %p30
      $region30: #{deepconvnet_forward.9} parent=27 // pred_check_branch
        %155 = sbr.rel (%p153) target = $region32
      $region31: #{deepconvnet_forward.9} parent=27 // pred_region
        %p156 = scmp.lt.s32.totalorder %s10, 1
        %s157 = scalar_select %p156, %s10, 1
        %s158 = smul.addr %s157, 2
        %s159 = smul.addr %s158, 8
        %s160 = scalar_lea.vmem %s0, %s159
      $region32: #{deepconvnet_forward.9} parent=27 // pred_fallthru
        _
    $region28: #{deepconvnet_forward.9} parent=5 // pred_fallthru
      _
    %p161 = scmp.le.s32.totalorder 1, %s10
    %p162 = scmp.lt.s32.totalorder %s10, 3
    %p163 = pnand %p161, %p162
    %p164 = pneg %p163
    // Predicated region
    $region33: #{deepconvnet_forward.9} parent=5 // pred_check
      _
    $region34: #{deepconvnet_forward.9} parent=5 // pred_check_branch
      %166 = sbr.rel (%p163) target = $region36
    $region35: #{deepconvnet_forward.9} parent=5 // pred_region
      %s167 = ssub.s32 %s10, 1
      %p168 = scmp.lt.s32.totalorder %s15, 1
      %s169 = scalar_select %p168, %s15, 1
      %s170 = smul.addr %s169, 2
      %s171 = smul.addr %s170, 8
      %s172 = scalar_lea.vmem %s0, %s171
      %p173 = pneg %p36
      %p174 = pneg %p33
      %p175 = pneg %p57
      %p176 = pneg %p54
      %p177 = pneg %p78
      %p178 = pneg %p75
      %p179 = pneg %p99
      %p180 = pneg %p96
      %p181 = pneg %p125
      %p182 = pneg %p122
      %p183 = scmp.lt.s32.totalorder %s15, 1
      %s184 = scalar_select %p183, %s15, 1
      %s185 = smul.addr %s184, 4
      %s186 = smul.addr %s185, 8
      %s187 = scalar_lea.vmem %s4, %s186
      %p188 = scmp.lt.s32.totalorder %s15, 1
      %s189 = scalar_select %p188, %s15, 1
      %s190 = smul.addr %s189, 2
      %s191 = smul.addr %s190, 8
      %s192 = scalar_lea.vmem %s0, %s191
      %p193 = scmp.lt.s32.totalorder %s15, 1
      %s194 = scalar_select %p193, %s15, 1
      %s195 = smul.addr %s194, 4
      %s196 = smul.addr %s195, 8
      %s197 = scalar_lea.vmem %s4, %s196
      %v198 = vld [vmem:[%s192] sm:$0xff]
      %v199 = vld [vmem:[%s192 + $0x8] sm:$0xff]
      %v200 = vld [vmem:[%s1] sm:$0xff]
      %v201 = vld [vmem:[%s1 + $0x8] sm:$0xff]
      %v202 = vld [vmem:[%s1 + $0x10] sm:$0xff]
      %v203 = vld [vmem:[%s1 + $0x18] sm:$0xff]
      %s204 = scalar_lea.vmem %s1, 32
      %v205 = vld [vmem:[%s204] sm:$0xff]
      %v206 = vld [vmem:[%s204 + $0x8] sm:$0xff]
      %v207 = vld [vmem:[%s204 + $0x10] sm:$0xff]
      %v208 = vld [vmem:[%s204 + $0x18] sm:$0xff]
      %211 = vrot.lane.b32.xlu0 %v198, 127
      %v212 = vpop.permute.xlu0 %211
      %213 = vrot.lane.b32.xlu0 %v199, 127
      %v214 = vpop.permute.xlu0 %213
      %vm217 = vcmask 130048
      %v219 = vsel %vm217, %v205, 0
      %v222 = vsel %vm217, %v206, 0
      %v225 = vsel %vm217, %v207, 0
      %v228 = vsel %vm217, %v208, 0
      %230 = vmatpush.msra.mxu0 0.0
      %231 = vmatpush.msra.mxu0 0.0
      %232 = vmatpush.msra.mxu0 0.0
      %233 = vmatpush.msra.mxu0 0.0
      %234 = vmatpush.msra.mxu0 0.0
      %235 = vmatpush.msra.mxu0 0.0
      %236 = vmatpush.msra.mxu0 0.0
      %237 = vmatpush.msra.mxu0 0.0
      %238 = vmatpush.msra.mxu0 0.0
      %239 = vmatpush.msra.mxu0 0.0
      %240 = vmatpush.msra.mxu0 0.0
      %241 = vmatpush.msra.mxu0 0.0
      %242 = vmatpush.msra.mxu0 0.0
      %243 = vmatpush.msra.mxu0 0.0
      %244 = vmatpush.msra.mxu0 %v214
      %245 = vmatpush.msra.mxu0 %v212
      %246 = vmatmul.f32.gmra.mxu0 %v219
      %v247 = vpop.f32.mrf.mxu0
      %v248 = vadd.f32 0.0, %v247
      %249 = vmatmul.f32.gmra.mxu0 %v222
      %v250 = vpop.f32.mrf.mxu0
      %v251 = vadd.f32 0.0, %v250
      %252 = vmatmul.f32.gmra.mxu0 %v225
      %v253 = vpop.f32.mrf.mxu0
      %v254 = vadd.f32 0.0, %v253
      %255 = vmatmul.f32.gmra.mxu0 %v228
      %v256 = vpop.f32.mrf.mxu0
      %v257 = vadd.f32 0.0, %v256
      %258 = vdwg.mxu0
      %v260 = vsel %vm217, %v200, 0
      %v263 = vsel %vm217, %v201, 0
      %v266 = vsel %vm217, %v202, 0
      %v269 = vsel %vm217, %v203, 0
      %271 = vmatpush.msra.mxu0 0.0
      %272 = vmatpush.msra.mxu0 0.0
      %273 = vmatpush.msra.mxu0 0.0
      %274 = vmatpush.msra.mxu0 0.0
      %275 = vmatpush.msra.mxu0 0.0
      %276 = vmatpush.msra.mxu0 0.0
      %277 = vmatpush.msra.mxu0 0.0
      %278 = vmatpush.msra.mxu0 0.0
      %279 = vmatpush.msra.mxu0 0.0
      %280 = vmatpush.msra.mxu0 0.0
      %281 = vmatpush.msra.mxu0 0.0
      %282 = vmatpush.msra.mxu0 0.0
      %283 = vmatpush.msra.mxu0 0.0
      %284 = vmatpush.msra.mxu0 0.0
      %285 = vmatpush.msra.mxu0 %v199
      %286 = vmatpush.msra.mxu0 %v198
      %287 = vmatmul.f32.gmra.mxu0 %v260
      %v288 = vpop.f32.mrf.mxu0
      %v289 = vadd.f32 %v248, %v288
      %290 = vmatmul.f32.gmra.mxu0 %v263
      %v291 = vpop.f32.mrf.mxu0
      %v292 = vadd.f32 %v251, %v291
      %293 = vmatmul.f32.gmra.mxu0 %v266
      %v294 = vpop.f32.mrf.mxu0
      %v295 = vadd.f32 %v254, %v294
      %296 = vmatmul.f32.gmra.mxu0 %v269
      %v297 = vpop.f32.mrf.mxu0
      %v298 = vadd.f32 %v257, %v297
      %299 = vdwg.mxu0
      %s300 = scalar_lea.vmem %s1, 64
      %v301 = vld [vmem:[%s300] sm:$0xff]
      %v302 = vld [vmem:[%s300 + $0x8] sm:$0xff]
      %v303 = vld [vmem:[%s300 + $0x10] sm:$0xff]
      %v304 = vld [vmem:[%s300 + $0x18] sm:$0xff]
      %305 = vrot.lane.b32.xlu0 %v198, 126
      %v306 = vpop.permute.xlu0 %305
      %307 = vrot.lane.b32.xlu0 %v199, 126
      %v308 = vpop.permute.xlu0 %307
      %v312 = vsel %vm217, %v301, 0
      %v315 = vsel %vm217, %v302, 0
      %v318 = vsel %vm217, %v303, 0
      %v321 = vsel %vm217, %v304, 0
      %323 = vmatpush.msra.mxu0 0.0
      %324 = vmatpush.msra.mxu0 0.0
      %325 = vmatpush.msra.mxu0 0.0
      %326 = vmatpush.msra.mxu0 0.0
      %327 = vmatpush.msra.mxu0 0.0
      %328 = vmatpush.msra.mxu0 0.0
      %329 = vmatpush.msra.mxu0 0.0
      %330 = vmatpush.msra.mxu0 0.0
      %331 = vmatpush.msra.mxu0 0.0
      %332 = vmatpush.msra.mxu0 0.0
      %333 = vmatpush.msra.mxu0 0.0
      %334 = vmatpush.msra.mxu0 0.0
      %335 = vmatpush.msra.mxu0 0.0
      %336 = vmatpush.msra.mxu0 0.0
      %337 = vmatpush.msra.mxu0 %v308
      %338 = vmatpush.msra.mxu0 %v306
      %339 = vmatmul.f32.gmra.mxu0 %v312
      %v340 = vpop.f32.mrf.mxu0
      %v341 = vadd.f32 0.0, %v340
      %342 = vmatmul.f32.gmra.mxu0 %v315
      %v343 = vpop.f32.mrf.mxu0
      %v344 = vadd.f32 0.0, %v343
      %345 = vmatmul.f32.gmra.mxu0 %v318
      %v346 = vpop.f32.mrf.mxu0
      %v347 = vadd.f32 0.0, %v346
      %348 = vmatmul.f32.gmra.mxu0 %v321
      %v349 = vpop.f32.mrf.mxu0
      %v350 = vadd.f32 0.0, %v349
      %351 = vdwg.mxu0
      %v352 = vadd.f32 %v289, %v341
      %v353 = vadd.f32 %v292, %v344
      %v354 = vadd.f32 %v295, %v347
      %v355 = vadd.f32 %v298, %v350
      %s356 = scalar_lea.vmem %s1, 96
      %v357 = vld [vmem:[%s356] sm:$0xff]
      %v358 = vld [vmem:[%s356 + $0x8] sm:$0xff]
      %v359 = vld [vmem:[%s356 + $0x10] sm:$0xff]
      %v360 = vld [vmem:[%s356 + $0x18] sm:$0xff]
      %361 = vrot.lane.b32.xlu0 %v198, 125
      %v362 = vpop.permute.xlu0 %361
      %363 = vrot.lane.b32.xlu0 %v199, 125
      %v364 = vpop.permute.xlu0 %363
      %v368 = vsel %vm217, %v357, 0
      %v371 = vsel %vm217, %v358, 0
      %v374 = vsel %vm217, %v359, 0
      %v377 = vsel %vm217, %v360, 0
      %379 = vmatpush.msra.mxu0 0.0
      %380 = vmatpush.msra.mxu0 0.0
      %381 = vmatpush.msra.mxu0 0.0
      %382 = vmatpush.msra.mxu0 0.0
      %383 = vmatpush.msra.mxu0 0.0
      %384 = vmatpush.msra.mxu0 0.0
      %385 = vmatpush.msra.mxu0 0.0
      %386 = vmatpush.msra.mxu0 0.0
      %387 = vmatpush.msra.mxu0 0.0
      %388 = vmatpush.msra.mxu0 0.0
      %389 = vmatpush.msra.mxu0 0.0
      %390 = vmatpush.msra.mxu0 0.0
      %391 = vmatpush.msra.mxu0 0.0
      %392 = vmatpush.msra.mxu0 0.0
      %393 = vmatpush.msra.mxu0 %v364
      %394 = vmatpush.msra.mxu0 %v362
      %395 = vmatmul.f32.gmra.mxu0 %v368
      %v396 = vpop.f32.mrf.mxu0
      %v397 = vadd.f32 0.0, %v396
      %398 = vmatmul.f32.gmra.mxu0 %v371
      %v399 = vpop.f32.mrf.mxu0
      %v400 = vadd.f32 0.0, %v399
      %401 = vmatmul.f32.gmra.mxu0 %v374
      %v402 = vpop.f32.mrf.mxu0
      %v403 = vadd.f32 0.0, %v402
      %404 = vmatmul.f32.gmra.mxu0 %v377
      %v405 = vpop.f32.mrf.mxu0
      %v406 = vadd.f32 0.0, %v405
      %407 = vdwg.mxu0
      %v408 = vadd.f32 %v352, %v397
      %v409 = vadd.f32 %v353, %v400
      %v410 = vadd.f32 %v354, %v403
      %v411 = vadd.f32 %v355, %v406
      %v412 = vld [vmem:[%s2] sm:$0xff]
      %v413 = vld [vmem:[%s2 + $0x8] sm:$0xff]
      %v414 = vld [vmem:[%s2 + $0x10] sm:$0xff]
      %v415 = vld [vmem:[%s2 + $0x18] sm:$0xff]
      %417 = vset.pattern.permute.xlu0 0
      %418 = vperm.xlu0 %417, %v412
      %v419 = vpop.permute.xlu0 %418
      %422 = vset.pattern.permute.xlu0 0
      %423 = vperm.xlu0 %422, %v413
      %v424 = vpop.permute.xlu0 %423
      %427 = vset.pattern.permute.xlu0 0
      %428 = vperm.xlu0 %427, %v414
      %v429 = vpop.permute.xlu0 %428
      %432 = vset.pattern.permute.xlu0 0
      %433 = vperm.xlu0 %432, %v415
      %v434 = vpop.permute.xlu0 %433
      %v436 = vmul.f32 %v408, %v419
      %v437 = vmul.f32 %v409, %v424
      %v438 = vmul.f32 %v410, %v429
      %v439 = vmul.f32 %v411, %v434
      %v440 = vld [vmem:[%s3] sm:$0xff]
      %v441 = vld [vmem:[%s3 + $0x8] sm:$0xff]
      %v442 = vld [vmem:[%s3 + $0x10] sm:$0xff]
      %v443 = vld [vmem:[%s3 + $0x18] sm:$0xff]
      %445 = vset.pattern.permute.xlu0 0
      %446 = vperm.xlu0 %445, %v440
      %v447 = vpop.permute.xlu0 %446
      %450 = vset.pattern.permute.xlu0 0
      %451 = vperm.xlu0 %450, %v441
      %v452 = vpop.permute.xlu0 %451
      %455 = vset.pattern.permute.xlu0 0
      %456 = vperm.xlu0 %455, %v442
      %v457 = vpop.permute.xlu0 %456
      %460 = vset.pattern.permute.xlu0 0
      %461 = vperm.xlu0 %460, %v443
      %v462 = vpop.permute.xlu0 %461
      %v464 = vadd.f32 %v436, %v447
      %v465 = vadd.f32 %v437, %v452
      %v466 = vadd.f32 %v438, %v457
      %v467 = vadd.f32 %v439, %v462
      %vm468 = vcmp.gt.f32.partialorder %v464, 0.0
      %vm469 = vcmp.gt.f32.partialorder %v465, 0.0
      %vm470 = vcmp.gt.f32.partialorder %v466, 0.0
      %vm471 = vcmp.gt.f32.partialorder %v467, 0.0
      %v472 = vmin.f32 %v464, 0.0
      %v473 = vmin.f32 %v465, 0.0
      %v474 = vmin.f32 %v466, 0.0
      %v475 = vmin.f32 %v467, 0.0
      %v476 = vmul.f32 %v472, 1.442695
      %v477 = vpow.pop %v476
      %v478 = vmul.f32 %v473, 1.442695
      %v479 = vpow.pop %v478
      %v480 = vmul.f32 %v474, 1.442695
      %v481 = vpow.pop %v480
      %v482 = vmul.f32 %v475, 1.442695
      %v483 = vpow.pop %v482
      %v484 = vsub.f32 %v477, 1.0
      %v485 = vsub.f32 %v479, 1.0
      %v486 = vsub.f32 %v481, 1.0
      %v487 = vsub.f32 %v483, 1.0
      %v488 = vsel %vm468, %v464, %v484
      %v489 = vsel %vm469, %v465, %v485
      %v490 = vsel %vm470, %v466, %v486
      %v491 = vsel %vm471, %v467, %v487
      %496 = vrot.lane.b32.xlu0 %v488, 127
      %v497 = vpop.permute.xlu0 %496
      %498 = vrot.lane.b32.xlu0 %v489, 127
      %v499 = vpop.permute.xlu0 %498
      %500 = vrot.lane.b32.xlu0 %v490, 127
      %v501 = vpop.permute.xlu0 %500
      %502 = vrot.lane.b32.xlu0 %v491, 127
      %v503 = vpop.permute.xlu0 %502
      %v508 = vmax.f32 %v488, %v497
      %v509 = vmax.f32 %v489, %v499
      %v510 = vmax.f32 %v490, %v501
      %v511 = vmax.f32 %v491, %v503
      %v512 = vlaneseq
      %v513 = vshrl.u32 %v512, 7
      %v514 = vadd.s32 %v513, 8
      %v515 = vadd.s32 %v513, 16
      %v516 = vadd.s32 %v513, 24
      %v517 = vlaneseq
      %v518 = vand.u32 %v517, 127
      %v519 = vmul.u32 %v518, 2
      %vm520 = vcmp.eq.s32.totalorder %v513, %v519
      %vm521 = vcmp.eq.s32.totalorder %v514, %v519
      %vm522 = vcmp.eq.s32.totalorder %v515, %v519
      %vm523 = vcmp.eq.s32.totalorder %v516, %v519
      %v524 = vsel %vm520, 1, 0
      %v525 = vsel %vm521, 1, 0
      %v526 = vsel %vm522, 1, 0
      %v527 = vsel %vm523, 1, 0
      %v528 = vcvt.s32.f32 %v524
      %v529 = vcvt.s32.f32 %v525
      %v530 = vcvt.s32.f32 %v526
      %v531 = vcvt.s32.f32 %v527
      %vm532 = vcmask 203776
      %v534 = vsel %vm532, %v508, 0
      %v537 = vsel %vm532, %v509, 0
      %v540 = vsel %vm532, %v510, 0
      %v543 = vsel %vm532, %v511, 0
      %vm545 = vcmask 1040384
      %v547 = vsel %vm545, %v531, 0
      %549 = vmatpush.msra.mxu0 0.0
      %550 = vmatpush.msra.mxu0 0.0
      %551 = vmatpush.msra.mxu0 0.0
      %552 = vmatpush.msra.mxu0 0.0
      %553 = vmatpush.msra.mxu0 0.0
      %554 = vmatpush.msra.mxu0 0.0
      %555 = vmatpush.msra.mxu0 0.0
      %556 = vmatpush.msra.mxu0 0.0
      %557 = vmatpush.msra.mxu0 0.0
      %558 = vmatpush.msra.mxu0 0.0
      %559 = vmatpush.msra.mxu0 0.0
      %560 = vmatpush.msra.mxu0 0.0
      %561 = vmatpush.msra.mxu0 %v547
      %562 = vmatpush.msra.mxu0 %v530
      %563 = vmatpush.msra.mxu0 %v529
      %564 = vmatpush.msra.mxu0 %v528
      %565 = vmatmul.f32.gmra.mxu0 %v534
      %v566 = vpop.f32.mrf.mxu0
      %v567 = vadd.f32 0.0, %v566
      %568 = vmatmul.f32.gmra.mxu0 %v537
      %v569 = vpop.f32.mrf.mxu0
      %v570 = vadd.f32 0.0, %v569
      %571 = vmatmul.f32.gmra.mxu0 %v540
      %v572 = vpop.f32.mrf.mxu0
      %v573 = vadd.f32 0.0, %v572
      %574 = vmatmul.f32.gmra.mxu0 %v543
      %v575 = vpop.f32.mrf.mxu0
      %v576 = vadd.f32 0.0, %v575
      %577 = vdwg.mxu0
      %vm578 = vcmask 105472
      %579 = vst.msk [vmem:[%s197] sm:$0xff] %vm578, %v567
      %580 = vst.msk [vmem:[%s197 + $0x8] sm:$0xff] %vm578, %v570
      %581 = vst.msk [vmem:[%s197 + $0x10] sm:$0xff] %vm578, %v573
      %582 = vst.msk [vmem:[%s197 + $0x18] sm:$0xff] %vm578, %v576
      %p583 = scmp.lt.s32.totalorder %s15, 1
      %s584 = scalar_select %p583, %s15, 1
      %s585 = smul.addr %s584, 4
      %s586 = smul.addr %s585, 8
      %s587 = scalar_lea.vmem %s4, %s586
      // Predicated region
      $region37: #{deepconvnet_forward.9} parent=35 // pred_check
        %p588 = pneg %p122
      $region38: #{deepconvnet_forward.9} parent=35 // pred_check_branch
        %590 = sbr.rel (%p588) target = $region40
      $region39: #{deepconvnet_forward.9} parent=35 // pred_region
        _
      $region40: #{deepconvnet_forward.9} parent=35 // pred_fallthru
        _
    $region36: #{deepconvnet_forward.9} parent=5 // pred_fallthru
      _
    %p591 = scmp.le.s32.totalorder 2, %s10
    // Predicated region
    $region41: #{deepconvnet_forward.9} parent=5 // pred_check
      %p592 = pneg %p591
    $region42: #{deepconvnet_forward.9} parent=5 // pred_check_branch
      %594 = sbr.rel (%p592) target = $region44
    $region43: #{deepconvnet_forward.9} parent=5 // pred_region
      %s595 = ssub.s32 %s10, 2
      // Predicated region
      $region45: #{deepconvnet_forward.9} parent=43 // pred_check
        %p596 = pneg %p128
      $region46: #{deepconvnet_forward.9} parent=43 // pred_check_branch
        %598 = sbr.rel (%p596) target = $region48
      $region47: #{deepconvnet_forward.9} parent=43 // pred_region
        %p599 = scmp.lt.s32.totalorder %s16, 1
        %s600 = scalar_select %p599, %s16, 1
        %s601 = smul.addr %s600, 4
        %s602 = smul.addr %s601, 8
        %s603 = scalar_lea.vmem %s4, %s602
      $region48: #{deepconvnet_forward.9} parent=43 // pred_fallthru
        _
    $region44: #{deepconvnet_forward.9} parent=5 // pred_fallthru
      _
  $region6: #{deepconvnet_forward.9} parent=0 // loop_footer
    %s14 = sadd.s32 1, %s10
  $region7: #{deepconvnet_forward.9} parent=0 // loop_footer_branch
    %9 = sbr.rel target = $region3
  $region8: #{deepconvnet_forward.9} parent=0 // loop_exit
    _

// kernel: deepconvnet_forward.10
$region0: #{deepconvnet_forward.10}
  #allocation0 [shape = 'u32[]', space=smem, size = 0x4, offset = 0x4, fixed_abs, tag = 'smem constant byte address 0x4 - core index']
  #allocation1 [shape = 'u32[72,128]{1,0:T(1,128)}', space=vmem, size = 0x9000, scoped, tag = 'internal scratch']
  %s0 = inlined_call_operand.vmem [shape: f32[2,32,13], index: 0, kind: input, shape index: {}]
  %s1 = inlined_call_operand.vmem [shape: f32[4,64,32], index: 1, kind: input, shape index: {}]
  %s2 = inlined_call_operand.vmem [shape: f32[64,1], index: 2, kind: input, shape index: {}]
  %s3 = inlined_call_operand.vmem [shape: f32[64,1], index: 3, kind: input, shape index: {}]
  %s4 = inlined_call_operand.vmem [shape: f32[2,64,5], index: 4, kind: output, shape index: {}]
  %s5 = sld [smem:[#allocation0]]
  $region49: #{deepconvnet_forward.10} parent=0
    _
  %s7 = ssub.s32 1, %s5
  %s8 = scalar_select 0, %s7, %s5
  loop: start=0, step=1, limit=4
  $region2: #{deepconvnet_forward.10} parent=0 // loop_pre_header
    _
  $region3: #{deepconvnet_forward.10} parent=0 // loop_header
    %s10 = sphi 0, %s14
    %p11 = scmp.ge.s32.totalorder %s10, 4
    %s20 = sphi 0, %s22
    %s23 = sphi 0, %s20
    %s24 = sphi 0, %s23
    %s40 = sphi 0, %s24
    %s44 = sphi 0, %s44
    %s46 = sphi 0, %s44
    %s47 = sphi 0, %s46
    %s61 = sphi 0, %s47
    %s65 = sphi 0, %s65
    %s67 = sphi 0, %s65
    %s68 = sphi 0, %s67
    %s82 = sphi 0, %s68
    %s86 = sphi 0, %s86
    %s88 = sphi 0, %s86
    %s89 = sphi 0, %s88
    %s103 = sphi 0, %s89
    %s109 = sphi 0, %s111
    %s112 = sphi 0, %s109
    %s113 = sphi 0, %s112
    %s129 = sphi 0, %s113
  $region4: #{deepconvnet_forward.10} parent=0 // loop_header_branch
    %13 = sbr.rel (%p11) target = $region8
  $region5: #{deepconvnet_forward.10} parent=0 // loop_body
    %s15 = ssub.s32 %s10, 1
    %s16 = ssub.s32 %s10, 2
    %s17 = sadd.s32 %s10, 1
    %s18 = ssub.s32 %s10, %s17
    %p19 = scmp.eq.s32.totalorder %s18, 0
    %s21 = sadd.s32 %s20, 1
    %s22 = scalar_select %p19, %s20, %s21
    %p25 = pneg %p19
    %p26 = scmp.eq.s32.totalorder %s10, 1
    %p27 = por %p25, %p26
    %p28 = scmp.ne.s32.totalorder %s20, %s23
    %p29 = scmp.eq.s32.totalorder %s10, 0
    %p30 = por %p28, %p29
    %p31 = scmp.ne.s32.totalorder %s20, %s23
    %p32 = scmp.eq.s32.totalorder %s15, 1
    %p33 = por %p31, %p32
    %p34 = scmp.ne.s32.totalorder %s23, %s24
    %p35 = scmp.eq.s32.totalorder %s15, 0
    %p36 = por %p34, %p35
    %p37 = scmp.ne.s32.totalorder %s23, %s24
    %p38 = scmp.eq.s32.totalorder %s16, 1
    %p39 = por %p37, %p38
    %p41 = scmp.ne.s32.totalorder %s24, %s40
    %p42 = scmp.eq.s32.totalorder %s16, 0
    %p43 = por %p41, %p42
    %s45 = sadd.s32 %s44, 1
    %p48 = scmp.eq.s32.totalorder %s10, 1
    %p49 = scmp.ne.s32.totalorder %s44, %s46
    %p50 = scmp.eq.s32.totalorder %s10, 0
    %p51 = por %p49, %p50
    %p52 = scmp.ne.s32.totalorder %s44, %s46
    %p53 = scmp.eq.s32.totalorder %s15, 1
    %p54 = por %p52, %p53
    %p55 = scmp.ne.s32.totalorder %s46, %s47
    %p56 = scmp.eq.s32.totalorder %s15, 0
    %p57 = por %p55, %p56
    %p58 = scmp.ne.s32.totalorder %s46, %s47
    %p59 = scmp.eq.s32.totalorder %s16, 1
    %p60 = por %p58, %p59
    %p62 = scmp.ne.s32.totalorder %s47, %s61
    %p63 = scmp.eq.s32.totalorder %s16, 0
    %p64 = por %p62, %p63
    %s66 = sadd.s32 %s65, 1
    %p69 = scmp.eq.s32.totalorder %s10, 1
    %p70 = scmp.ne.s32.totalorder %s65, %s67
    %p71 = scmp.eq.s32.totalorder %s10, 0
    %p72 = por %p70, %p71
    %p73 = scmp.ne.s32.totalorder %s65, %s67
    %p74 = scmp.eq.s32.totalorder %s15, 1
    %p75 = por %p73, %p74
    %p76 = scmp.ne.s32.totalorder %s67, %s68
    %p77 = scmp.eq.s32.totalorder %s15, 0
    %p78 = por %p76, %p77
    %p79 = scmp.ne.s32.totalorder %s67, %s68
    %p80 = scmp.eq.s32.totalorder %s16, 1
    %p81 = por %p79, %p80
    %p83 = scmp.ne.s32.totalorder %s68, %s82
    %p84 = scmp.eq.s32.totalorder %s16, 0
    %p85 = por %p83, %p84
    %s87 = sadd.s32 %s86, 1
    %p90 = scmp.eq.s32.totalorder %s10, 1
    %p91 = scmp.ne.s32.totalorder %s86, %s88
    %p92 = scmp.eq.s32.totalorder %s10, 0
    %p93 = por %p91, %p92
    %p94 = scmp.ne.s32.totalorder %s86, %s88
    %p95 = scmp.eq.s32.totalorder %s15, 1
    %p96 = por %p94, %p95
    %p97 = scmp.ne.s32.totalorder %s88, %s89
    %p98 = scmp.eq.s32.totalorder %s15, 0
    %p99 = por %p97, %p98
    %p100 = scmp.ne.s32.totalorder %s88, %s89
    %p101 = scmp.eq.s32.totalorder %s16, 1
    %p102 = por %p100, %p101
    %p104 = scmp.ne.s32.totalorder %s89, %s103
    %p105 = scmp.eq.s32.totalorder %s16, 0
    %p106 = por %p104, %p105
    %s107 = ssub.s32 %s10, %s17
    %p108 = scmp.eq.s32.totalorder %s107, 0
    %s110 = sadd.s32 %s109, 1
    %s111 = scalar_select %p108, %s109, %s110
    %p114 = pneg %p108
    %p115 = scmp.eq.s32.totalorder %s10, 1
    %p116 = por %p114, %p115
    %p117 = scmp.ne.s32.totalorder %s109, %s112
    %p118 = scmp.eq.s32.totalorder %s10, 0
    %p119 = por %p117, %p118
    %p120 = scmp.ne.s32.totalorder %s109, %s112
    %p121 = scmp.eq.s32.totalorder %s15, 1
    %p122 = por %p120, %p121
    %p123 = scmp.ne.s32.totalorder %s112, %s113
    %p124 = scmp.eq.s32.totalorder %s15, 0
    %p125 = por %p123, %p124
    %p126 = scmp.ne.s32.totalorder %s112, %s113
    %p127 = scmp.eq.s32.totalorder %s16, 1
    %p128 = por %p126, %p127
    %p130 = scmp.ne.s32.totalorder %s113, %s129
    %p131 = scmp.eq.s32.totalorder %s16, 0
    %p132 = por %p130, %p131
    %p133 = scmp.le.s32.totalorder 1, %s10
    %p134 = scmp.lt.s32.totalorder %s10, 3
    %p135 = pnand %p133, %p134
    %p136 = pneg %p135
    // Predicated region
    $region9: #{deepconvnet_forward.10} parent=5 // pred_check
      _
    $region10: #{deepconvnet_forward.10} parent=5 // pred_check_branch
      %138 = sbr.rel (%p135) target = $region12
    $region11: #{deepconvnet_forward.10} parent=5 // pred_region
      %s139 = ssub.s32 %s10, 1
      // Predicated region
      $region13: #{deepconvnet_forward.10} parent=11 // pred_check
        %p140 = pneg %p57
      $region14: #{deepconvnet_forward.10} parent=11 // pred_check_branch
        %142 = sbr.rel (%p140) target = $region16
      $region15: #{deepconvnet_forward.10} parent=11 // pred_region
        _
      $region16: #{deepconvnet_forward.10} parent=11 // pred_fallthru
        _
      // Predicated region
      $region17: #{deepconvnet_forward.10} parent=11 // pred_check
        %p143 = pneg %p78
      $region18: #{deepconvnet_forward.10} parent=11 // pred_check_branch
        %145 = sbr.rel (%p143) target = $region20
      $region19: #{deepconvnet_forward.10} parent=11 // pred_region
        _
      $region20: #{deepconvnet_forward.10} parent=11 // pred_fallthru
        _
      // Predicated region
      $region21: #{deepconvnet_forward.10} parent=11 // pred_check
        %p146 = pneg %p99
      $region22: #{deepconvnet_forward.10} parent=11 // pred_check_branch
        %148 = sbr.rel (%p146) target = $region24
      $region23: #{deepconvnet_forward.10} parent=11 // pred_region
        _
      $region24: #{deepconvnet_forward.10} parent=11 // pred_fallthru
        _
    $region12: #{deepconvnet_forward.10} parent=5 // pred_fallthru
      _
    %p149 = scmp.lt.s32.totalorder %s10, 2
    // Predicated region
    $region25: #{deepconvnet_forward.10} parent=5 // pred_check
      %p150 = pneg %p149
    $region26: #{deepconvnet_forward.10} parent=5 // pred_check_branch
      %152 = sbr.rel (%p150) target = $region28
    $region27: #{deepconvnet_forward.10} parent=5 // pred_region
      // Predicated region
      $region29: #{deepconvnet_forward.10} parent=27 // pred_check
        %p153 = pneg %p30
      $region30: #{deepconvnet_forward.10} parent=27 // pred_check_branch
        %155 = sbr.rel (%p153) target = $region32
      $region31: #{deepconvnet_forward.10} parent=27 // pred_region
        %p156 = scmp.lt.s32.totalorder %s10, 1
        %s157 = scalar_select %p156, %s10, 1
        %s158 = smul.addr %s157, 4
        %s159 = smul.addr %s158, 8
        %s160 = scalar_lea.vmem %s0, %s159
      $region32: #{deepconvnet_forward.10} parent=27 // pred_fallthru
        _
    $region28: #{deepconvnet_forward.10} parent=5 // pred_fallthru
      _
    %p161 = scmp.le.s32.totalorder 1, %s10
    %p162 = scmp.lt.s32.totalorder %s10, 3
    %p163 = pnand %p161, %p162
    %p164 = pneg %p163
    // Predicated region
    $region33: #{deepconvnet_forward.10} parent=5 // pred_check
      _
    $region34: #{deepconvnet_forward.10} parent=5 // pred_check_branch
      %166 = sbr.rel (%p163) target = $region36
    $region35: #{deepconvnet_forward.10} parent=5 // pred_region
      %s167 = ssub.s32 %s10, 1
      %p168 = scmp.lt.s32.totalorder %s15, 1
      %s169 = scalar_select %p168, %s15, 1
      %s170 = smul.addr %s169, 4
      %s171 = smul.addr %s170, 8
      %s172 = scalar_lea.vmem %s0, %s171
      %p173 = pneg %p36
      %p174 = pneg %p33
      %p175 = pneg %p57
      %p176 = pneg %p54
      %p177 = pneg %p78
      %p178 = pneg %p75
      %p179 = pneg %p99
      %p180 = pneg %p96
      %p181 = pneg %p125
      %p182 = pneg %p122
      %p183 = scmp.lt.s32.totalorder %s15, 1
      %s184 = scalar_select %p183, %s15, 1
      %s185 = smul.addr %s184, 8
      %s186 = smul.addr %s185, 8
      %s187 = scalar_lea.vmem %s4, %s186
      %p188 = scmp.lt.s32.totalorder %s15, 1
      %s189 = scalar_select %p188, %s15, 1
      %s190 = smul.addr %s189, 4
      %s191 = smul.addr %s190, 8
      %s192 = scalar_lea.vmem %s0, %s191
      %p193 = scmp.lt.s32.totalorder %s15, 1
      %s194 = scalar_select %p193, %s15, 1
      %s195 = smul.addr %s194, 8
      %s196 = smul.addr %s195, 8
      %s197 = scalar_lea.vmem %s4, %s196
      %v198 = vld [vmem:[%s192] sm:$0xff]
      %v199 = vld [vmem:[%s192 + $0x8] sm:$0xff]
      %v200 = vld [vmem:[%s192 + $0x10] sm:$0xff]
      %v201 = vld [vmem:[%s192 + $0x18] sm:$0xff]
      %v202 = vld [vmem:[%s1] sm:$0xff]
      %v203 = vld [vmem:[%s1 + $0x8] sm:$0xff]
      %v204 = vld [vmem:[%s1 + $0x10] sm:$0xff]
      %v205 = vld [vmem:[%s1 + $0x18] sm:$0xff]
      %v206 = vld [vmem:[%s1 + $0x20] sm:$0xff]
      %v207 = vld [vmem:[%s1 + $0x28] sm:$0xff]
      %v208 = vld [vmem:[%s1 + $0x30] sm:$0xff]
      %v209 = vld [vmem:[%s1 + $0x38] sm:$0xff]
      %s210 = scalar_lea.vmem %s1, 64
      %v211 = vld [vmem:[%s210] sm:$0xff]
      %v212 = vld [vmem:[%s210 + $0x8] sm:$0xff]
      %v213 = vld [vmem:[%s210 + $0x10] sm:$0xff]
      %v214 = vld [vmem:[%s210 + $0x18] sm:$0xff]
      %v215 = vld [vmem:[%s210 + $0x20] sm:$0xff]
      %v216 = vld [vmem:[%s210 + $0x28] sm:$0xff]
      %v217 = vld [vmem:[%s210 + $0x30] sm:$0xff]
      %v218 = vld [vmem:[%s210 + $0x38] sm:$0xff]
      %223 = vrot.lane.b32.xlu0 %v198, 127
      %v224 = vpop.permute.xlu0 %223
      %225 = vrot.lane.b32.xlu0 %v199, 127
      %v226 = vpop.permute.xlu0 %225
      %227 = vrot.lane.b32.xlu0 %v200, 127
      %v228 = vpop.permute.xlu0 %227
      %229 = vrot.lane.b32.xlu0 %v201, 127
      %v230 = vpop.permute.xlu0 %229
      %vm235 = vcmask 261120
      %v237 = vsel %vm235, %v211, 0
      %v240 = vsel %vm235, %v212, 0
      %v243 = vsel %vm235, %v213, 0
      %v246 = vsel %vm235, %v214, 0
      %v249 = vsel %vm235, %v215, 0
      %v252 = vsel %vm235, %v216, 0
      %v255 = vsel %vm235, %v217, 0
      %v258 = vsel %vm235, %v218, 0
      %260 = vmatpush.msra.mxu0 0.0
      %261 = vmatpush.msra.mxu0 0.0
      %262 = vmatpush.msra.mxu0 0.0
      %263 = vmatpush.msra.mxu0 0.0
      %264 = vmatpush.msra.mxu0 0.0
      %265 = vmatpush.msra.mxu0 0.0
      %266 = vmatpush.msra.mxu0 0.0
      %267 = vmatpush.msra.mxu0 0.0
      %268 = vmatpush.msra.mxu0 0.0
      %269 = vmatpush.msra.mxu0 0.0
      %270 = vmatpush.msra.mxu0 0.0
      %271 = vmatpush.msra.mxu0 0.0
      %272 = vmatpush.msra.mxu0 %v230
      %273 = vmatpush.msra.mxu0 %v228
      %274 = vmatpush.msra.mxu0 %v226
      %275 = vmatpush.msra.mxu0 %v224
      %276 = vmatmul.f32.gmra.mxu0 %v237
      %v277 = vpop.f32.mrf.mxu0
      %v278 = vadd.f32 0.0, %v277
      %279 = vmatmul.f32.gmra.mxu0 %v240
      %v280 = vpop.f32.mrf.mxu0
      %v281 = vadd.f32 0.0, %v280
      %282 = vmatmul.f32.gmra.mxu0 %v243
      %v283 = vpop.f32.mrf.mxu0
      %v284 = vadd.f32 0.0, %v283
      %285 = vmatmul.f32.gmra.mxu0 %v246
      %v286 = vpop.f32.mrf.mxu0
      %v287 = vadd.f32 0.0, %v286
      %288 = vmatmul.f32.gmra.mxu0 %v249
      %v289 = vpop.f32.mrf.mxu0
      %v290 = vadd.f32 0.0, %v289
      %291 = vmatmul.f32.gmra.mxu0 %v252
      %v292 = vpop.f32.mrf.mxu0
      %v293 = vadd.f32 0.0, %v292
      %294 = vmatmul.f32.gmra.mxu0 %v255
      %v295 = vpop.f32.mrf.mxu0
      %v296 = vadd.f32 0.0, %v295
      %297 = vmatmul.f32.gmra.mxu0 %v258
      %v298 = vpop.f32.mrf.mxu0
      %v299 = vadd.f32 0.0, %v298
      %300 = vdwg.mxu0
      %v302 = vsel %vm235, %v202, 0
      %v305 = vsel %vm235, %v203, 0
      %v308 = vsel %vm235, %v204, 0
      %v311 = vsel %vm235, %v205, 0
      %v314 = vsel %vm235, %v206, 0
      %v317 = vsel %vm235, %v207, 0
      %v320 = vsel %vm235, %v208, 0
      %v323 = vsel %vm235, %v209, 0
      %325 = vmatpush.msra.mxu0 0.0
      %326 = vmatpush.msra.mxu0 0.0
      %327 = vmatpush.msra.mxu0 0.0
      %328 = vmatpush.msra.mxu0 0.0
      %329 = vmatpush.msra.mxu0 0.0
      %330 = vmatpush.msra.mxu0 0.0
      %331 = vmatpush.msra.mxu0 0.0
      %332 = vmatpush.msra.mxu0 0.0
      %333 = vmatpush.msra.mxu0 0.0
      %334 = vmatpush.msra.mxu0 0.0
      %335 = vmatpush.msra.mxu0 0.0
      %336 = vmatpush.msra.mxu0 0.0
      %337 = vmatpush.msra.mxu0 %v201
      %338 = vmatpush.msra.mxu0 %v200
      %339 = vmatpush.msra.mxu0 %v199
      %340 = vmatpush.msra.mxu0 %v198
      %341 = vmatmul.f32.gmra.mxu0 %v302
      %v342 = vpop.f32.mrf.mxu0
      %v343 = vadd.f32 %v278, %v342
      %344 = vmatmul.f32.gmra.mxu0 %v305
      %v345 = vpop.f32.mrf.mxu0
      %v346 = vadd.f32 %v281, %v345
      %347 = vmatmul.f32.gmra.mxu0 %v308
      %v348 = vpop.f32.mrf.mxu0
      %v349 = vadd.f32 %v284, %v348
      %350 = vmatmul.f32.gmra.mxu0 %v311
      %v351 = vpop.f32.mrf.mxu0
      %v352 = vadd.f32 %v287, %v351
      %353 = vmatmul.f32.gmra.mxu0 %v314
      %v354 = vpop.f32.mrf.mxu0
      %v355 = vadd.f32 %v290, %v354
      %356 = vmatmul.f32.gmra.mxu0 %v317
      %v357 = vpop.f32.mrf.mxu0
      %v358 = vadd.f32 %v293, %v357
      %359 = vmatmul.f32.gmra.mxu0 %v320
      %v360 = vpop.f32.mrf.mxu0
      %v361 = vadd.f32 %v296, %v360
      %362 = vmatmul.f32.gmra.mxu0 %v323
      %v363 = vpop.f32.mrf.mxu0
      %v364 = vadd.f32 %v299, %v363
      %365 = vdwg.mxu0
      %s366 = scalar_lea.vmem %s1, 128
      %v367 = vld [vmem:[%s366] sm:$0xff]
      %v368 = vld [vmem:[%s366 + $0x8] sm:$0xff]
      %v369 = vld [vmem:[%s366 + $0x10] sm:$0xff]
      %v370 = vld [vmem:[%s366 + $0x18] sm:$0xff]
      %v371 = vld [vmem:[%s366 + $0x20] sm:$0xff]
      %v372 = vld [vmem:[%s366 + $0x28] sm:$0xff]
      %v373 = vld [vmem:[%s366 + $0x30] sm:$0xff]
      %v374 = vld [vmem:[%s366 + $0x38] sm:$0xff]
      %375 = vrot.lane.b32.xlu0 %v198, 126
      %v376 = vpop.permute.xlu0 %375
      %377 = vrot.lane.b32.xlu0 %v199, 126
      %v378 = vpop.permute.xlu0 %377
      %379 = vrot.lane.b32.xlu0 %v200, 126
      %v380 = vpop.permute.xlu0 %379
      %381 = vrot.lane.b32.xlu0 %v201, 126
      %v382 = vpop.permute.xlu0 %381
      %v388 = vsel %vm235, %v367, 0
      %v391 = vsel %vm235, %v368, 0
      %v394 = vsel %vm235, %v369, 0
      %v397 = vsel %vm235, %v370, 0
      %v400 = vsel %vm235, %v371, 0
      %v403 = vsel %vm235, %v372, 0
      %v406 = vsel %vm235, %v373, 0
      %v409 = vsel %vm235, %v374, 0
      %411 = vmatpush.msra.mxu0 0.0
      %412 = vmatpush.msra.mxu0 0.0
      %413 = vmatpush.msra.mxu0 0.0
      %414 = vmatpush.msra.mxu0 0.0
      %415 = vmatpush.msra.mxu0 0.0
      %416 = vmatpush.msra.mxu0 0.0
      %417 = vmatpush.msra.mxu0 0.0
      %418 = vmatpush.msra.mxu0 0.0
      %419 = vmatpush.msra.mxu0 0.0
      %420 = vmatpush.msra.mxu0 0.0
      %421 = vmatpush.msra.mxu0 0.0
      %422 = vmatpush.msra.mxu0 0.0
      %423 = vmatpush.msra.mxu0 %v382
      %424 = vmatpush.msra.mxu0 %v380
      %425 = vmatpush.msra.mxu0 %v378
      %426 = vmatpush.msra.mxu0 %v376
      %427 = vmatmul.f32.gmra.mxu0 %v388
      %v428 = vpop.f32.mrf.mxu0
      %v429 = vadd.f32 0.0, %v428
      %430 = vmatmul.f32.gmra.mxu0 %v391
      %v431 = vpop.f32.mrf.mxu0
      %v432 = vadd.f32 0.0, %v431
      %433 = vmatmul.f32.gmra.mxu0 %v394
      %v434 = vpop.f32.mrf.mxu0
      %v435 = vadd.f32 0.0, %v434
      %436 = vmatmul.f32.gmra.mxu0 %v397
      %v437 = vpop.f32.mrf.mxu0
      %v438 = vadd.f32 0.0, %v437
      %439 = vmatmul.f32.gmra.mxu0 %v400
      %v440 = vpop.f32.mrf.mxu0
      %v441 = vadd.f32 0.0, %v440
      %442 = vmatmul.f32.gmra.mxu0 %v403
      %v443 = vpop.f32.mrf.mxu0
      %v444 = vadd.f32 0.0, %v443
      %445 = vmatmul.f32.gmra.mxu0 %v406
      %v446 = vpop.f32.mrf.mxu0
      %v447 = vadd.f32 0.0, %v446
      %448 = vmatmul.f32.gmra.mxu0 %v409
      %v449 = vpop.f32.mrf.mxu0
      %v450 = vadd.f32 0.0, %v449
      %451 = vdwg.mxu0
      %v452 = vadd.f32 %v343, %v429
      %v453 = vadd.f32 %v346, %v432
      %v454 = vadd.f32 %v349, %v435
      %v455 = vadd.f32 %v352, %v438
      %v456 = vadd.f32 %v355, %v441
      %v457 = vadd.f32 %v358, %v444
      %v458 = vadd.f32 %v361, %v447
      %v459 = vadd.f32 %v364, %v450
      %s460 = scalar_lea.vmem %s1, 192
      %v461 = vld [vmem:[%s460] sm:$0xff]
      %v462 = vld [vmem:[%s460 + $0x8] sm:$0xff]
      %v463 = vld [vmem:[%s460 + $0x10] sm:$0xff]
      %v464 = vld [vmem:[%s460 + $0x18] sm:$0xff]
      %v465 = vld [vmem:[%s460 + $0x20] sm:$0xff]
      %v466 = vld [vmem:[%s460 + $0x28] sm:$0xff]
      %v467 = vld [vmem:[%s460 + $0x30] sm:$0xff]
      %v468 = vld [vmem:[%s460 + $0x38] sm:$0xff]
      %469 = vrot.lane.b32.xlu0 %v198, 125
      %v470 = vpop.permute.xlu0 %469
      %471 = vrot.lane.b32.xlu0 %v199, 125
      %v472 = vpop.permute.xlu0 %471
      %473 = vrot.lane.b32.xlu0 %v200, 125
      %v474 = vpop.permute.xlu0 %473
      %475 = vrot.lane.b32.xlu0 %v201, 125
      %v476 = vpop.permute.xlu0 %475
      %v482 = vsel %vm235, %v461, 0
      %v485 = vsel %vm235, %v462, 0
      %v488 = vsel %vm235, %v463, 0
      %v491 = vsel %vm235, %v464, 0
      %v494 = vsel %vm235, %v465, 0
      %v497 = vsel %vm235, %v466, 0
      %v500 = vsel %vm235, %v467, 0
      %v503 = vsel %vm235, %v468, 0
      %505 = vmatpush.msra.mxu0 0.0
      %506 = vmatpush.msra.mxu0 0.0
      %507 = vmatpush.msra.mxu0 0.0
      %508 = vmatpush.msra.mxu0 0.0
      %509 = vmatpush.msra.mxu0 0.0
      %510 = vmatpush.msra.mxu0 0.0
      %511 = vmatpush.msra.mxu0 0.0
      %512 = vmatpush.msra.mxu0 0.0
      %513 = vmatpush.msra.mxu0 0.0
      %514 = vmatpush.msra.mxu0 0.0
      %515 = vmatpush.msra.mxu0 0.0
      %516 = vmatpush.msra.mxu0 0.0
      %517 = vmatpush.msra.mxu0 %v476
      %518 = vmatpush.msra.mxu0 %v474
      %519 = vmatpush.msra.mxu0 %v472
      %520 = vmatpush.msra.mxu0 %v470
      %521 = vmatmul.f32.gmra.mxu0 %v482
      %v522 = vpop.f32.mrf.mxu0
      %v523 = vadd.f32 0.0, %v522
      %524 = vmatmul.f32.gmra.mxu0 %v485
      %v525 = vpop.f32.mrf.mxu0
      %v526 = vadd.f32 0.0, %v525
      %527 = vmatmul.f32.gmra.mxu0 %v488
      %v528 = vpop.f32.mrf.mxu0
      %v529 = vadd.f32 0.0, %v528
      %530 = vmatmul.f32.gmra.mxu0 %v491
      %v531 = vpop.f32.mrf.mxu0
      %v532 = vadd.f32 0.0, %v531
      %533 = vmatmul.f32.gmra.mxu0 %v494
      %v534 = vpop.f32.mrf.mxu0
      %v535 = vadd.f32 0.0, %v534
      %536 = vmatmul.f32.gmra.mxu0 %v497
      %v537 = vpop.f32.mrf.mxu0
      %v538 = vadd.f32 0.0, %v537
      %539 = vmatmul.f32.gmra.mxu0 %v500
      %v540 = vpop.f32.mrf.mxu0
      %v541 = vadd.f32 0.0, %v540
      %542 = vmatmul.f32.gmra.mxu0 %v503
      %v543 = vpop.f32.mrf.mxu0
      %v544 = vadd.f32 0.0, %v543
      %545 = vdwg.mxu0
      %v546 = vadd.f32 %v452, %v523
      %v547 = vadd.f32 %v453, %v526
      %v548 = vadd.f32 %v454, %v529
      %v549 = vadd.f32 %v455, %v532
      %v550 = vadd.f32 %v456, %v535
      %v551 = vadd.f32 %v457, %v538
      %v552 = vadd.f32 %v458, %v541
      %v553 = vadd.f32 %v459, %v544
      %v554 = vld [vmem:[%s2] sm:$0xff]
      %v555 = vld [vmem:[%s2 + $0x8] sm:$0xff]
      %v556 = vld [vmem:[%s2 + $0x10] sm:$0xff]
      %v557 = vld [vmem:[%s2 + $0x18] sm:$0xff]
      %v558 = vld [vmem:[%s2 + $0x20] sm:$0xff]
      %v559 = vld [vmem:[%s2 + $0x28] sm:$0xff]
      %v560 = vld [vmem:[%s2 + $0x30] sm:$0xff]
      %v561 = vld [vmem:[%s2 + $0x38] sm:$0xff]
      %563 = vset.pattern.permute.xlu0 0
      %564 = vperm.xlu0 %563, %v554
      %v565 = vpop.permute.xlu0 %564
      %568 = vset.pattern.permute.xlu0 0
      %569 = vperm.xlu0 %568, %v555
      %v570 = vpop.permute.xlu0 %569
      %573 = vset.pattern.permute.xlu0 0
      %574 = vperm.xlu0 %573, %v556
      %v575 = vpop.permute.xlu0 %574
      %578 = vset.pattern.permute.xlu0 0
      %579 = vperm.xlu0 %578, %v557
      %v580 = vpop.permute.xlu0 %579
      %583 = vset.pattern.permute.xlu0 0
      %584 = vperm.xlu0 %583, %v558
      %v585 = vpop.permute.xlu0 %584
      %588 = vset.pattern.permute.xlu0 0
      %589 = vperm.xlu0 %588, %v559
      %v590 = vpop.permute.xlu0 %589
      %593 = vset.pattern.permute.xlu0 0
      %594 = vperm.xlu0 %593, %v560
      %v595 = vpop.permute.xlu0 %594
      %598 = vset.pattern.permute.xlu0 0
      %599 = vperm.xlu0 %598, %v561
      %v600 = vpop.permute.xlu0 %599
      %v602 = vmul.f32 %v546, %v565
      %v603 = vmul.f32 %v547, %v570
      %v604 = vmul.f32 %v548, %v575
      %v605 = vmul.f32 %v549, %v580
      %v606 = vmul.f32 %v550, %v585
      %v607 = vmul.f32 %v551, %v590
      %v608 = vmul.f32 %v552, %v595
      %v609 = vmul.f32 %v553, %v600
      %v610 = vld [vmem:[%s3] sm:$0xff]
      %v611 = vld [vmem:[%s3 + $0x8] sm:$0xff]
      %v612 = vld [vmem:[%s3 + $0x10] sm:$0xff]
      %v613 = vld [vmem:[%s3 + $0x18] sm:$0xff]
      %v614 = vld [vmem:[%s3 + $0x20] sm:$0xff]
      %v615 = vld [vmem:[%s3 + $0x28] sm:$0xff]
      %v616 = vld [vmem:[%s3 + $0x30] sm:$0xff]
      %v617 = vld [vmem:[%s3 + $0x38] sm:$0xff]
      %619 = vset.pattern.permute.xlu0 0
      %620 = vperm.xlu0 %619, %v610
      %v621 = vpop.permute.xlu0 %620
      %624 = vset.pattern.permute.xlu0 0
      %625 = vperm.xlu0 %624, %v611
      %v626 = vpop.permute.xlu0 %625
      %629 = vset.pattern.permute.xlu0 0
      %630 = vperm.xlu0 %629, %v612
      %v631 = vpop.permute.xlu0 %630
      %634 = vset.pattern.permute.xlu0 0
      %635 = vperm.xlu0 %634, %v613
      %v636 = vpop.permute.xlu0 %635
      %639 = vset.pattern.permute.xlu0 0
      %640 = vperm.xlu0 %639, %v614
      %v641 = vpop.permute.xlu0 %640
      %644 = vset.pattern.permute.xlu0 0
      %645 = vperm.xlu0 %644, %v615
      %v646 = vpop.permute.xlu0 %645
      %649 = vset.pattern.permute.xlu0 0
      %650 = vperm.xlu0 %649, %v616
      %v651 = vpop.permute.xlu0 %650
      %654 = vset.pattern.permute.xlu0 0
      %655 = vperm.xlu0 %654, %v617
      %v656 = vpop.permute.xlu0 %655
      %v658 = vadd.f32 %v602, %v621
      %v659 = vadd.f32 %v603, %v626
      %v660 = vadd.f32 %v604, %v631
      %v661 = vadd.f32 %v605, %v636
      %v662 = vadd.f32 %v606, %v641
      %v663 = vadd.f32 %v607, %v646
      %v664 = vadd.f32 %v608, %v651
      %v665 = vadd.f32 %v609, %v656
      %vm666 = vcmp.gt.f32.partialorder %v658, 0.0
      %vm667 = vcmp.gt.f32.partialorder %v659, 0.0
      %vm668 = vcmp.gt.f32.partialorder %v660, 0.0
      %vm669 = vcmp.gt.f32.partialorder %v661, 0.0
      %vm670 = vcmp.gt.f32.partialorder %v662, 0.0
      %vm671 = vcmp.gt.f32.partialorder %v663, 0.0
      %vm672 = vcmp.gt.f32.partialorder %v664, 0.0
      %vm673 = vcmp.gt.f32.partialorder %v665, 0.0
      %v674 = vmin.f32 %v658, 0.0
      %v675 = vmin.f32 %v659, 0.0
      %v676 = vmin.f32 %v660, 0.0
      %v677 = vmin.f32 %v661, 0.0
      %v678 = vmin.f32 %v662, 0.0
      %v679 = vmin.f32 %v663, 0.0
      %v680 = vmin.f32 %v664, 0.0
      %v681 = vmin.f32 %v665, 0.0
      %v682 = vmul.f32 %v674, 1.442695
      %v683 = vpow.pop %v682
      %v684 = vmul.f32 %v675, 1.442695
      %v685 = vpow.pop %v684
      %v686 = vmul.f32 %v676, 1.442695
      %v687 = vpow.pop %v686
      %v688 = vmul.f32 %v677, 1.442695
      %v689 = vpow.pop %v688
      %v690 = vmul.f32 %v678, 1.442695
      %v691 = vpow.pop %v690
      %v692 = vmul.f32 %v679, 1.442695
      %v693 = vpow.pop %v692
      %v694 = vmul.f32 %v680, 1.442695
      %v695 = vpow.pop %v694
      %v696 = vmul.f32 %v681, 1.442695
      %v697 = vpow.pop %v696
      %v698 = vsub.f32 %v683, 1.0
      %v699 = vsub.f32 %v685, 1.0
      %v700 = vsub.f32 %v687, 1.0
      %v701 = vsub.f32 %v689, 1.0
      %v702 = vsub.f32 %v691, 1.0
      %v703 = vsub.f32 %v693, 1.0
      %v704 = vsub.f32 %v695, 1.0
      %v705 = vsub.f32 %v697, 1.0
      %v706 = vsel %vm666, %v658, %v698
      %v707 = vsel %vm667, %v659, %v699
      %v708 = vsel %vm668, %v660, %v700
      %v709 = vsel %vm669, %v661, %v701
      %v710 = vsel %vm670, %v662, %v702
      %v711 = vsel %vm671, %v663, %v703
      %v712 = vsel %vm672, %v664, %v704
      %v713 = vsel %vm673, %v665, %v705
      %722 = vrot.lane.b32.xlu0 %v706, 127
      %v723 = vpop.permute.xlu0 %722
      %724 = vrot.lane.b32.xlu0 %v707, 127
      %v725 = vpop.permute.xlu0 %724
      %726 = vrot.lane.b32.xlu0 %v708, 127
      %v727 = vpop.permute.xlu0 %726
      %728 = vrot.lane.b32.xlu0 %v709, 127
      %v729 = vpop.permute.xlu0 %728
      %730 = vrot.lane.b32.xlu0 %v710, 127
      %v731 = vpop.permute.xlu0 %730
      %732 = vrot.lane.b32.xlu0 %v711, 127
      %v733 = vpop.permute.xlu0 %732
      %734 = vrot.lane.b32.xlu0 %v712, 127
      %v735 = vpop.permute.xlu0 %734
      %736 = vrot.lane.b32.xlu0 %v713, 127
      %v737 = vpop.permute.xlu0 %736
      %v746 = vmax.f32 %v706, %v723
      %v747 = vmax.f32 %v707, %v725
      %v748 = vmax.f32 %v708, %v727
      %v749 = vmax.f32 %v709, %v729
      %v750 = vmax.f32 %v710, %v731
      %v751 = vmax.f32 %v711, %v733
      %v752 = vmax.f32 %v712, %v735
      %v753 = vmax.f32 %v713, %v737
      %v754 = vlaneseq
      %v755 = vshrl.u32 %v754, 7
      %v756 = vadd.s32 %v755, 8
      %v757 = vlaneseq
      %v758 = vand.u32 %v757, 127
      %v759 = vmul.u32 %v758, 2
      %vm760 = vcmp.eq.s32.totalorder %v755, %v759
      %vm761 = vcmp.eq.s32.totalorder %v756, %v759
      %v762 = vsel %vm760, 1, 0
      %v763 = vsel %vm761, 1, 0
      %v764 = vcvt.s32.f32 %v762
      %v765 = vcvt.s32.f32 %v763
      %vm766 = vcmask 72704
      %v768 = vsel %vm766, %v746, 0
      %v771 = vsel %vm766, %v747, 0
      %v774 = vsel %vm766, %v748, 0
      %v777 = vsel %vm766, %v749, 0
      %v780 = vsel %vm766, %v750, 0
      %v783 = vsel %vm766, %v751, 0
      %v786 = vsel %vm766, %v752, 0
      %v789 = vsel %vm766, %v753, 0
      %vm791 = vcmask 1040384
      %v793 = vsel %vm791, %v765, 0
      %795 = vmatpush.msra.mxu0 0.0
      %796 = vmatpush.msra.mxu0 0.0
      %797 = vmatpush.msra.mxu0 0.0
      %798 = vmatpush.msra.mxu0 0.0
      %799 = vmatpush.msra.mxu0 0.0
      %800 = vmatpush.msra.mxu0 0.0
      %801 = vmatpush.msra.mxu0 0.0
      %802 = vmatpush.msra.mxu0 0.0
      %803 = vmatpush.msra.mxu0 0.0
      %804 = vmatpush.msra.mxu0 0.0
      %805 = vmatpush.msra.mxu0 0.0
      %806 = vmatpush.msra.mxu0 0.0
      %807 = vmatpush.msra.mxu0 0.0
      %808 = vmatpush.msra.mxu0 0.0
      %809 = vmatpush.msra.mxu0 %v793
      %810 = vmatpush.msra.mxu0 %v764
      %811 = vmatmul.f32.gmra.mxu0 %v768
      %v812 = vpop.f32.mrf.mxu0
      %v813 = vadd.f32 0.0, %v812
      %814 = vmatmul.f32.gmra.mxu0 %v771
      %v815 = vpop.f32.mrf.mxu0
      %v816 = vadd.f32 0.0, %v815
      %817 = vmatmul.f32.gmra.mxu0 %v774
      %v818 = vpop.f32.mrf.mxu0
      %v819 = vadd.f32 0.0, %v818
      %820 = vmatmul.f32.gmra.mxu0 %v777
      %v821 = vpop.f32.mrf.mxu0
      %v822 = vadd.f32 0.0, %v821
      %823 = vmatmul.f32.gmra.mxu0 %v780
      %v824 = vpop.f32.mrf.mxu0
      %v825 = vadd.f32 0.0, %v824
      %826 = vmatmul.f32.gmra.mxu0 %v783
      %v827 = vpop.f32.mrf.mxu0
      %v828 = vadd.f32 0.0, %v827
      %829 = vmatmul.f32.gmra.mxu0 %v786
      %v830 = vpop.f32.mrf.mxu0
      %v831 = vadd.f32 0.0, %v830
      %832 = vmatmul.f32.gmra.mxu0 %v789
      %v833 = vpop.f32.mrf.mxu0
      %v834 = vadd.f32 0.0, %v833
      %835 = vdwg.mxu0
      %vm836 = vcmask 39936
      %837 = vst.msk [vmem:[%s197] sm:$0xff] %vm836, %v813
      %838 = vst.msk [vmem:[%s197 + $0x8] sm:$0xff] %vm836, %v816
      %839 = vst.msk [vmem:[%s197 + $0x10] sm:$0xff] %vm836, %v819
      %840 = vst.msk [vmem:[%s197 + $0x18] sm:$0xff] %vm836, %v822
      %841 = vst.msk [vmem:[%s197 + $0x20] sm:$0xff] %vm836, %v825
      %842 = vst.msk [vmem:[%s197 + $0x28] sm:$0xff] %vm836, %v828
      %843 = vst.msk [vmem:[%s197 + $0x30] sm:$0xff] %vm836, %v831
      %844 = vst.msk [vmem:[%s197 + $0x38] sm:$0xff] %vm836, %v834
      %p845 = scmp.lt.s32.totalorder %s15, 1
      %s846 = scalar_select %p845, %s15, 1
      %s847 = smul.addr %s846, 8
      %s848 = smul.addr %s847, 8
      %s849 = scalar_lea.vmem %s4, %s848
      // Predicated region
      $region37: #{deepconvnet_forward.10} parent=35 // pred_check
        %p850 = pneg %p122
      $region38: #{deepconvnet_forward.10} parent=35 // pred_check_branch
        %852 = sbr.rel (%p850) target = $region40
      $region39: #{deepconvnet_forward.10} parent=35 // pred_region
        _
      $region40: #{deepconvnet_forward.10} parent=35 // pred_fallthru
        _
    $region36: #{deepconvnet_forward.10} parent=5 // pred_fallthru
      _
    %p853 = scmp.le.s32.totalorder 2, %s10
    // Predicated region
    $region41: #{deepconvnet_forward.10} parent=5 // pred_check
      %p854 = pneg %p853
    $region42: #{deepconvnet_forward.10} parent=5 // pred_check_branch
      %856 = sbr.rel (%p854) target = $region44
    $region43: #{deepconvnet_forward.10} parent=5 // pred_region
      %s857 = ssub.s32 %s10, 2
      // Predicated region
      $region45: #{deepconvnet_forward.10} parent=43 // pred_check
        %p858 = pneg %p128
      $region46: #{deepconvnet_forward.10} parent=43 // pred_check_branch
        %860 = sbr.rel (%p858) target = $region48
      $region47: #{deepconvnet_forward.10} parent=43 // pred_region
        %p861 = scmp.lt.s32.totalorder %s16, 1
        %s862 = scalar_select %p861, %s16, 1
        %s863 = smul.addr %s862, 8
        %s864 = smul.addr %s863, 8
        %s865 = scalar_lea.vmem %s4, %s864
      $region48: #{deepconvnet_forward.10} parent=43 // pred_fallthru
        _
    $region44: #{deepconvnet_forward.10} parent=5 // pred_fallthru
      _
  $region6: #{deepconvnet_forward.10} parent=0 // loop_footer
    %s14 = sadd.s32 1, %s10
  $region7: #{deepconvnet_forward.10} parent=0 // loop_footer_branch
    %9 = sbr.rel target = $region3
  $region8: #{deepconvnet_forward.10} parent=0 // loop_exit
    _

// kernel: deepconvnet_forward.11
$region0: #{deepconvnet_forward.11}
  #allocation0 [shape = 'u32[]', space=smem, size = 0x4, offset = 0x4, fixed_abs, tag = 'smem constant byte address 0x4 - core index']
  #allocation1 [shape = 'u32[72,128]{1,0:T(1,128)}', space=vmem, size = 0x9000, scoped, tag = 'internal scratch']
  %s0 = inlined_call_operand.vmem [shape: f32[2,320], index: 0, kind: input, shape index: {}]
  %s1 = inlined_call_operand.vmem [shape: f32[320,4], index: 1, kind: input, shape index: {}]
  %s2 = inlined_call_operand.vmem [shape: f32[1,4], index: 2, kind: input, shape index: {}]
  %s3 = inlined_call_operand.hbm [shape: f32[2,4], index: 3, kind: output, shape index: {}]
  %s4 = sld [smem:[#allocation0]]
  $region22: #{deepconvnet_forward.11} parent=0
    _
  %s6 = ssub.s32 1, %s4
  %s7 = scalar_select 0, %s6, %s4
  $region1: #{deepconvnet_forward.11} parent=0
    #allocation2 [shape = 'u8[1024]{0}', space=vmem, size = 0x400, scoped, tag = 'output window, operand 0, single buffered']
    #allocation3 [shape = 's32[1]{0}', space=sflag, size = 0x4, scoped, tag = 'scoped memory for deepconvnet_forward.11']
    %8 = vsyncpa [#allocation3], 0
    // Predicated region
    $region2: #{deepconvnet_forward.11} parent=1 // pred_check
      _
    $region3: #{deepconvnet_forward.11} parent=1 // pred_check_branch
      %10 = sbr.rel (0) target = $region5
    $region4: #{deepconvnet_forward.11} parent=1 // pred_region
      _
    $region5: #{deepconvnet_forward.11} parent=1 // pred_fallthru
      _
    // Predicated region
    $region6: #{deepconvnet_forward.11} parent=1 // pred_check
      _
    $region7: #{deepconvnet_forward.11} parent=1 // pred_check_branch
      %12 = sbr.rel (0) target = $region9
    $region8: #{deepconvnet_forward.11} parent=1 // pred_region
      _
    $region9: #{deepconvnet_forward.11} parent=1 // pred_fallthru
      _
    // Predicated region
    $region10: #{deepconvnet_forward.11} parent=1 // pred_check
      _
    $region11: #{deepconvnet_forward.11} parent=1 // pred_check_branch
      %14 = sbr.rel (0) target = $region13
    $region12: #{deepconvnet_forward.11} parent=1 // pred_region
      _
    $region13: #{deepconvnet_forward.11} parent=1 // pred_fallthru
      _
    %v15 = vld [vmem:[%s0] sm:$0x3f]
    %v16 = vld [vmem:[%s1] sm:$0xff]
    %v17 = vld [vmem:[%s1 + $0x8] sm:$0xff]
    %v18 = vld [vmem:[%s1 + $0x10] sm:$0xff]
    %v19 = vld [vmem:[%s1 + $0x18] sm:$0xff]
    %v20 = vld [vmem:[%s1 + $0x20] sm:$0xff]
    %v21 = vld [vmem:[%s1 + $0x28] sm:$0xff]
    %v22 = vld [vmem:[%s1 + $0x30] sm:$0xff]
    %v23 = vld [vmem:[%s1 + $0x38] sm:$0xff]
    %v24 = vld [vmem:[%s1 + $0x40] sm:$0xff]
    %v25 = vld [vmem:[%s1 + $0x48] sm:$0xff]
    %v26 = vld [vmem:[%s1 + $0x50] sm:$0xff]
    %v27 = vld [vmem:[%s1 + $0x58] sm:$0xff]
    %v28 = vld [vmem:[%s1 + $0x60] sm:$0xff]
    %v29 = vld [vmem:[%s1 + $0x68] sm:$0xff]
    %v30 = vld [vmem:[%s1 + $0x70] sm:$0xff]
    %v31 = vld [vmem:[%s1 + $0x78] sm:$0xff]
    %v32 = vld [vmem:[%s1 + $0x80] sm:$0xff]
    %v33 = vld [vmem:[%s1 + $0x88] sm:$0xff]
    %v34 = vld [vmem:[%s1 + $0x90] sm:$0xff]
    %v35 = vld [vmem:[%s1 + $0x98] sm:$0xff]
    %v36 = vld [vmem:[%s1 + $0xa0] sm:$0xff]
    %v37 = vld [vmem:[%s1 + $0xa8] sm:$0xff]
    %v38 = vld [vmem:[%s1 + $0xb0] sm:$0xff]
    %v39 = vld [vmem:[%s1 + $0xb8] sm:$0xff]
    %v40 = vld [vmem:[%s1 + $0xc0] sm:$0xff]
    %v41 = vld [vmem:[%s1 + $0xc8] sm:$0xff]
    %v42 = vld [vmem:[%s1 + $0xd0] sm:$0xff]
    %v43 = vld [vmem:[%s1 + $0xd8] sm:$0xff]
    %v44 = vld [vmem:[%s1 + $0xe0] sm:$0xff]
    %v45 = vld [vmem:[%s1 + $0xe8] sm:$0xff]
    %v46 = vld [vmem:[%s1 + $0xf0] sm:$0xff]
    %v47 = vld [vmem:[%s1 + $0xf8] sm:$0xff]
    %v48 = vld [vmem:[%s1 + $0x100] sm:$0xff]
    %v49 = vld [vmem:[%s1 + $0x108] sm:$0xff]
    %v50 = vld [vmem:[%s1 + $0x110] sm:$0xff]
    %v51 = vld [vmem:[%s1 + $0x118] sm:$0xff]
    %v52 = vld [vmem:[%s1 + $0x120] sm:$0xff]
    %v53 = vld [vmem:[%s1 + $0x128] sm:$0xff]
    %v54 = vld [vmem:[%s1 + $0x130] sm:$0xff]
    %v55 = vld [vmem:[%s1 + $0x138] sm:$0xff]
    %v56 = vld [vmem:[%s2] sm:$0x1]
    %v58 = vperm.slane %v56, 0
    %61 = vst [vmem:[#allocation1] ss:$4 sm:$0xff] %v15
    %v62 = vld.sshfl [vmem:[#allocation1] sm:$0xff pattern:$0x73625140]
    %v63 = vld.sshfl [vmem:[#allocation1 + $0x8] sm:$0xff pattern:$0x73625140]
    %v64 = vld.sshfl [vmem:[#allocation1 + $0x10] sm:$0xff pattern:$0x73625140]
    %vm67 = vcmask 523264
    %v68 = vsel %vm67, %v64, 0
    %70 = vmatpush.msra.mxu0 %v31
    %71 = vmatpush.msra.mxu0 %v30
    %72 = vmatpush.msra.mxu0 %v29
    %73 = vmatpush.msra.mxu0 %v28
    %74 = vmatpush.msra.mxu0 %v27
    %75 = vmatpush.msra.mxu0 %v26
    %76 = vmatpush.msra.mxu0 %v25
    %77 = vmatpush.msra.mxu0 %v24
    %78 = vmatpush.msra.mxu0 %v23
    %79 = vmatpush.msra.mxu0 %v22
    %80 = vmatpush.msra.mxu0 %v21
    %81 = vmatpush.msra.mxu0 %v20
    %82 = vmatpush.msra.mxu0 %v19
    %83 = vmatpush.msra.mxu0 %v18
    %84 = vmatpush.msra.mxu0 %v17
    %85 = vmatpush.msra.mxu0 %v16
    %86 = vmatmul.f32.gmra.mxu0 %v62
    %v87 = vpop.f32.mrf.mxu0
    %v88 = vadd.f32 %v58, %v87
    %89 = vdwg.mxu0
    %90 = vmatpush.msra.mxu0 %v47
    %91 = vmatpush.msra.mxu0 %v46
    %92 = vmatpush.msra.mxu0 %v45
    %93 = vmatpush.msra.mxu0 %v44
    %94 = vmatpush.msra.mxu0 %v43
    %95 = vmatpush.msra.mxu0 %v42
    %96 = vmatpush.msra.mxu0 %v41
    %97 = vmatpush.msra.mxu0 %v40
    %98 = vmatpush.msra.mxu0 %v39
    %99 = vmatpush.msra.mxu0 %v38
    %100 = vmatpush.msra.mxu0 %v37
    %101 = vmatpush.msra.mxu0 %v36
    %102 = vmatpush.msra.mxu0 %v35
    %103 = vmatpush.msra.mxu0 %v34
    %104 = vmatpush.msra.mxu0 %v33
    %105 = vmatpush.msra.mxu0 %v32
    %106 = vmatmul.f32.gmra.mxu0 %v63
    %v107 = vpop.f32.mrf.mxu0
    %v108 = vadd.f32 %v88, %v107
    %109 = vdwg.mxu0
    %110 = vmatpush.msra.mxu0 0.0
    %111 = vmatpush.msra.mxu0 0.0
    %112 = vmatpush.msra.mxu0 0.0
    %113 = vmatpush.msra.mxu0 0.0
    %114 = vmatpush.msra.mxu0 0.0
    %115 = vmatpush.msra.mxu0 0.0
    %116 = vmatpush.msra.mxu0 0.0
    %117 = vmatpush.msra.mxu0 0.0
    %118 = vmatpush.msra.mxu0 %v55
    %119 = vmatpush.msra.mxu0 %v54
    %120 = vmatpush.msra.mxu0 %v53
    %121 = vmatpush.msra.mxu0 %v52
    %122 = vmatpush.msra.mxu0 %v51
    %123 = vmatpush.msra.mxu0 %v50
    %124 = vmatpush.msra.mxu0 %v49
    %125 = vmatpush.msra.mxu0 %v48
    %126 = vmatmul.f32.gmra.mxu0 %v68
    %v127 = vpop.f32.mrf.mxu0
    %v128 = vadd.f32 %v108, %v127
    %129 = vdwg.mxu0
    %vm130 = vcmask 25600
    %131 = vst.msk [vmem:[#allocation2] sm:$0x3] %vm130, %v128
    // Predicated region
    $region14: #{deepconvnet_forward.11} parent=1 // pred_check
      _
    $region15: #{deepconvnet_forward.11} parent=1 // pred_check_branch
      %133 = sbr.rel (0) target = $region17
    $region16: #{deepconvnet_forward.11} parent=1 // pred_region
      %135 = vsyncadd [#allocation3], 0
      %s137 = sshll.u32 [#allocation2], 4
      %s138 = int_to_ptr.vmem [resolvable:$true] %s137
      %s139 = sshll.u32 %s3, 4
      %s140 = int_to_ptr.hbm [resolvable:$true] %s139
      %142 = dma.vmem_to_hbm [thread:$0]  %s138, 32, %s140, [#allocation3]
    $region17: #{deepconvnet_forward.11} parent=1 // pred_fallthru
      _
    // Predicated region
    $region18: #{deepconvnet_forward.11} parent=1 // pred_check
      _
    $region19: #{deepconvnet_forward.11} parent=1 // pred_check_branch
      %144 = sbr.rel (0) target = $region21
    $region20: #{deepconvnet_forward.11} parent=1 // pred_region
      %146 = dma.done [#allocation3], 32
    $region21: #{deepconvnet_forward.11} parent=1 // pred_fallthru
      _
    %147 = vsyncpa [#allocation3], 1

</llo_original>
